<compile_context>
chip_gen: v6e
topology: v6e:2x2x1
jax: 0.10.0
libtpu: 0.0.40
codegen_flags: <defaults>
</compile_context>

<pallas_src>
import jax
import jax.numpy as jnp
from jax.experimental import pallas as pl
from jax.experimental.pallas import tpu as pltpu


D_MODEL = 32
DP = 128                       # lane-padded model dim (lane-dense loads/stores)
N_HEADS = 4
HEAD_DIM = D_MODEL // N_HEADS
HIDDEN = 2048                  # hard-coded hidden_dim of FeedForwardNN
LN_EPS = 1e-5
NEG_INF = -1e9


def encoder_block_kernel(x_ref, bias_ref,
                         wqkv_ref, bqkv_ref, wo_ref, bo_ref,
                         w1_ref, b1_ref, w2_ref, b2_ref,
                         o_ref):
    Bt, S, _ = x_ref.shape
    D, H, hd = D_MODEL, N_HEADS, HEAD_DIM
    M = Bt * S

    # lane-validity mask: only the first D of DP lanes carry real features
    lane = jax.lax.broadcasted_iota(jnp.int32, (1, DP), 1)
    valid = (lane < D).astype(jnp.float32)

    def layer_norm(v):
        # v: (M, DP) f32; padded lanes are zero -> sum/sumsq over DP == over D.
        v = v * valid
        mean = jnp.sum(v, axis=-1, keepdims=True) * (1.0 / D)
        var = jnp.sum(v * v, axis=-1, keepdims=True) * (1.0 / D) - mean * mean
        var = jnp.maximum(var, 0.0)
        return (v - mean) * jax.lax.rsqrt(var + LN_EPS) * valid

    # Flatten the batch tile so projections / FFN see a tall M dimension.
    x = x_ref[...].astype(jnp.float32).reshape(M, DP)

    # ---- fused QKV projection: one (M, DP) x (DP, 3D) bf16 matmul ----------
    qkv = jnp.dot(x.astype(jnp.bfloat16), wqkv_ref[...],
                  preferred_element_type=jnp.float32)
    qkv3 = (qkv + bqkv_ref[...]).reshape(Bt, S, 3 * D)

    scale = 1.0 / jnp.sqrt(jnp.float32(hd))
    bias = bias_ref[...].astype(jnp.float32)          # (Bt, S, S) additive mask

    # ---- attention: static loop over H heads, each fully batched over Bt ---
    ctx_heads = []
    for h in range(H):
        q_h = qkv3[:, :, h * hd:(h + 1) * hd].astype(jnp.bfloat16)
        k_h = qkv3[:, :, D + h * hd:D + (h + 1) * hd].astype(jnp.bfloat16)
        v_h = qkv3[:, :, 2 * D + h * hd:2 * D + (h + 1) * hd].astype(jnp.bfloat16)
        s = jnp.einsum('bqd,bkd->bqk', q_h, k_h,
                       preferred_element_type=jnp.float32)
        s = s * scale + bias
        s = s - jnp.max(s, axis=-1, keepdims=True)
        p = jnp.exp(s)
        denom = jnp.sum(p, axis=-1, keepdims=True)
        r = pl.reciprocal(denom, approx=True)
        r = r * (2.0 - denom * r)                     # one Newton step
        p = (p * r).astype(jnp.bfloat16)
        pv = jnp.einsum('bqk,bkd->bqd', p, v_h,
                        preferred_element_type=jnp.float32)
        ctx_heads.append(pv)
    ctx = jnp.concatenate(ctx_heads, axis=-1).reshape(M, D)

    # single output projection; wo output columns lane-padded (zeros) to DP
    attn = jnp.dot(ctx.astype(jnp.bfloat16), wo_ref[...],
                   preferred_element_type=jnp.float32) + bo_ref[...]

    # ---- residual + layer norm (dropout == identity at inference) ----------
    h1 = layer_norm(x + attn)

    # ---- feed-forward network (bf16 operands, f32 accumulation) ------------
    ff = jnp.dot(h1.astype(jnp.bfloat16), w1_ref[...],
                 preferred_element_type=jnp.float32)
    ff = jnp.maximum(ff + b1_ref[...], 0.0)
    ff = jnp.dot(ff.astype(jnp.bfloat16), w2_ref[...],
                 preferred_element_type=jnp.float32)
    ff = ff + b2_ref[...]                             # padded lanes stay zero

    out = layer_norm(h1 + ff)
    o_ref[...] = out.reshape(Bt, S, DP).astype(o_ref.dtype)


def pack_params(params):
    """One-time weight prep: fuse QKV, zero-pad d_model lanes to DP, cast to bf16."""
    D = D_MODEL
    f32, bf = jnp.float32, jnp.bfloat16
    wqkv = jnp.concatenate([params["wq"], params["wk"], params["wv"]], axis=1)
    wqkv = jnp.zeros((DP, 3 * D), f32).at[:D].set(wqkv)
    bqkv = jnp.concatenate([params["bq"], params["bk"], params["bv"]], axis=1)
    wo = jnp.zeros((D, DP), f32).at[:, :D].set(params["wo"])
    bo = jnp.zeros((1, DP), f32).at[:, :D].set(params["bo"])
    w1 = jnp.zeros((DP, HIDDEN), f32).at[:D].set(params["w1"])
    w2 = jnp.zeros((HIDDEN, DP), f32).at[:, :D].set(params["w2"])
    b2 = jnp.zeros((1, DP), f32).at[:, :D].set(params["b2"])
    return {
        "wqkv": wqkv.astype(bf), "bqkv": bqkv,
        "wo": wo.astype(bf), "bo": bo,
        "w1": w1.astype(bf), "b1": params["b1"],
        "w2": w2.astype(bf), "b2": b2,
    }


def encoder_block(x, mask, packed, block_b=None):
    """x: (B, S, D) float32, mask: (B, S, S) float32 (nonzero = attend)."""
    B, S, D = x.shape
    assert D == D_MODEL

    if block_b is None:
        # Target M = block_b*S >= 256 (v6e/v7x MXU M; v5e saturates at 128),
        # but keep >= 2 grid steps when B allows so both v7x TensorCores work.
        block_b = max(1, min(B, pl.cdiv(256, S)))
        if B >= 2:
            block_b = min(block_b, pl.cdiv(B, 2))
    Bp = pl.cdiv(B, block_b) * block_b

    # Lane-pad activations to DP=128 (padded lanes / padded batch rows = 0).
    x_pad = jnp.zeros((Bp, S, DP), x.dtype).at[:B, :, :D].set(x)
    # Additive mask bias precomputed wrapper-side in bf16 (less DMA than f32).
    bias = jnp.where(mask != 0, 0.0, NEG_INF).astype(jnp.bfloat16)
    if Bp != B:
        bias = jnp.pad(bias, ((0, Bp - B), (0, 0), (0, 0)))   # padded rows: 0 bias

    full2d = lambda shape: pl.BlockSpec(shape, lambda b: (0, 0))
    in_specs = [
        pl.BlockSpec((block_b, S, DP), lambda b: (b, 0, 0)),   # x (lane-padded)
        pl.BlockSpec((block_b, S, S), lambda b: (b, 0, 0)),    # additive mask bias
        full2d((DP, 3 * D)), full2d((1, 3 * D)),               # Wqkv (bf16), bqkv
        full2d((D, DP)), full2d((1, DP)),                      # Wo (bf16), bo
        full2d((DP, HIDDEN)), full2d((1, HIDDEN)),             # W1 (bf16), b1
        full2d((HIDDEN, DP)), full2d((1, DP)),                 # W2 (bf16), b2
    ]
    out_spec = pl.BlockSpec((block_b, S, DP), lambda b: (b, 0, 0))

    out = pl.pallas_call(
        encoder_block_kernel,
        out_shape=jax.ShapeDtypeStruct((Bp, S, DP), x.dtype),
        grid_spec=pltpu.PrefetchScalarGridSpec(
            num_scalar_prefetch=0,
            grid=(Bp // block_b,),
            in_specs=in_specs,
            out_specs=out_spec,
        ),
        compiler_params=pltpu.CompilerParams(
            dimension_semantics=("parallel",),
            vmem_limit_bytes=32 * 1024 * 1024,   # safe on v5e/v6e/v7x for this tiling
        ),
    )(x_pad, bias,
      packed["wqkv"], packed["bqkv"], packed["wo"], packed["bo"],
      packed["w1"], packed["b1"], packed["w2"], packed["b2"])
    return out[:B, :, :D]


def _layer_norm_ref(x):
    mean = jnp.mean(x, axis=-1, keepdims=True)
    var = jnp.mean((x - mean) ** 2, axis=-1, keepdims=True)
    return (x - mean) * jax.lax.rsqrt(var + LN_EPS)


def reference_encoder_block(x, mask, params):
    """Pure-JAX f32 reference (exact softmax) for correctness checking."""
    def attn_one(xb, mb):
        q = xb @ params["wq"] + params["bq"][0]
        k = xb @ params["wk"] + params["bk"][0]
        v = xb @ params["wv"] + params["bv"][0]
        outs = []
        for h in range(N_HEADS):
            sl = slice(h * HEAD_DIM, (h + 1) * HEAD_DIM)
            s = (q[:, sl] @ k[:, sl].T) / jnp.sqrt(jnp.float32(HEAD_DIM))
            s = jnp.where(mb == 0, NEG_INF, s)
            p = jax.nn.softmax(s, axis=-1)
            outs.append(p @ v[:, sl])
        ctx = jnp.concatenate(outs, axis=-1)
        return ctx @ params["wo"] + params["bo"][0]

    attn = jax.vmap(attn_one)(x, mask)
    h1 = _layer_norm_ref(x + attn)
    ff = jnp.maximum(h1 @ params["w1"] + params["b1"][0], 0.0)
    ff = ff @ params["w2"] + params["b2"][0]
    return _layer_norm_ref(h1 + ff)


def init_params(key):
    keys = jax.random.split(key, 6)
    s = 0.05
    return {
        "wq": s * jax.random.normal(keys[0], (D_MODEL, D_MODEL), jnp.float32),
        "bq": jnp.zeros((1, D_MODEL), jnp.float32),
        "wk": s * jax.random.normal(keys[1], (D_MODEL, D_MODEL), jnp.float32),
        "bk": jnp.zeros((1, D_MODEL), jnp.float32),
        "wv": s * jax.random.normal(keys[2], (D_MODEL, D_MODEL), jnp.float32),
        "bv": jnp.zeros((1, D_MODEL), jnp.float32),
        "wo": s * jax.random.normal(keys[3], (D_MODEL, D_MODEL), jnp.float32),
        "bo": jnp.zeros((1, D_MODEL), jnp.float32),
        "w1": s * jax.random.normal(keys[4], (D_MODEL, HIDDEN), jnp.float32),
        "b1": jnp.full((1, HIDDEN), 0.01, jnp.float32),
        "w2": s * jax.random.normal(keys[5], (HIDDEN, D_MODEL), jnp.float32),
        "b2": jnp.full((1, D_MODEL), 0.01, jnp.float32),
    }


if __name__ == "__main__":
    key = jax.random.PRNGKey(0)
    k_x, k_p, k_x2 = jax.random.split(key, 3)
    params = init_params(k_p)
    packed = pack_params(params)   # one-time: fuse QKV, lane-pad, cast to bf16

    # Tolerance sized for bf16 MXU operands vs. the f32 reference (the K=2048
    # FFN contraction dominates the ~1e-3-level rounding error).
    ATOL = RTOL = 1e-2

    # Case 1: B=2, S=8 (2-step parallel grid, one batch row per step).
    B, S = 2, 8
    x = jax.random.normal(k_x, (B, S, D_MODEL), jnp.float32)
    mask = jnp.ones((B, S, S), jnp.float32).at[:, :, -2:].set(0.0)
    out = jax.block_until_ready(encoder_block(x, mask, packed))
    ref = reference_encoder_block(x, mask, params)
    assert out.shape == (B, S, D_MODEL)
    assert jnp.allclose(out, ref, atol=ATOL, rtol=RTOL), (
        f"max abs err {jnp.max(jnp.abs(out - ref))}")

    # Case 2: B=3 with block_b=2 — exercises batch padding + a 2-step grid.
    B2 = 3
    x2 = jax.random.normal(k_x2, (B2, S, D_MODEL), jnp.float32)
    mask2 = jnp.ones((B2, S, S), jnp.float32).at[:, :, -1:].set(0.0)
    out2 = jax.block_until_ready(encoder_block(x2, mask2, packed, block_b=2))
    ref2 = reference_encoder_block(x2, mask2, params)
    assert out2.shape == (B2, S, D_MODEL)
    assert jnp.allclose(out2, ref2, atol=ATOL, rtol=RTOL), (
        f"max abs err {jnp.max(jnp.abs(out2 - ref2))}")

    print("KERNEL_OK")
</pallas_src>

<mosaic_0001>
module attributes {stable_mosaic.version = 11 : i64} {
  func.func @encoder_block_kernel(%arg0: i32, %arg1: memref<1x8x128xf32, #tpu.memory_space<vmem>>, %arg2: memref<1x8x8xbf16, #tpu.memory_space<vmem>>, %arg3: memref<128x96xbf16, #tpu.memory_space<vmem>>, %arg4: memref<1x96xf32, #tpu.memory_space<vmem>>, %arg5: memref<32x128xbf16, #tpu.memory_space<vmem>>, %arg6: memref<1x128xf32, #tpu.memory_space<vmem>>, %arg7: memref<128x2048xbf16, #tpu.memory_space<vmem>>, %arg8: memref<1x2048xf32, #tpu.memory_space<vmem>>, %arg9: memref<2048x128xbf16, #tpu.memory_space<vmem>>, %arg10: memref<1x128xf32, #tpu.memory_space<vmem>>, %arg11: memref<1x8x128xf32, #tpu.memory_space<vmem>>) attributes {dimension_semantics = [#tpu.dimension_semantics<parallel>], iteration_bounds = array<i64: 2>, scalar_prefetch = 0 : i64, scratch_operands = 0 : i64, tpu.core_type = #tpu.core_type<tc>, window_params = [{transform_indices = @transform_0, window_bounds = array<i64: 1, 8, 128>}, {transform_indices = @transform_1, window_bounds = array<i64: 1, 8, 8>}, {pipeline_mode = #tpu.pipeline_mode<synchronous>, transform_indices = @transform_2, window_bounds = array<i64: 128, 96>}, {pipeline_mode = #tpu.pipeline_mode<synchronous>, transform_indices = @transform_3, window_bounds = array<i64: 1, 96>}, {pipeline_mode = #tpu.pipeline_mode<synchronous>, transform_indices = @transform_4, window_bounds = array<i64: 32, 128>}, {pipeline_mode = #tpu.pipeline_mode<synchronous>, transform_indices = @transform_5, window_bounds = array<i64: 1, 128>}, {pipeline_mode = #tpu.pipeline_mode<synchronous>, transform_indices = @transform_6, window_bounds = array<i64: 128, 2048>}, {pipeline_mode = #tpu.pipeline_mode<synchronous>, transform_indices = @transform_7, window_bounds = array<i64: 1, 2048>}, {pipeline_mode = #tpu.pipeline_mode<synchronous>, transform_indices = @transform_8, window_bounds = array<i64: 2048, 128>}, {pipeline_mode = #tpu.pipeline_mode<synchronous>, transform_indices = @transform_9, window_bounds = array<i64: 1, 128>}, {transform_indices = @transform_10, window_bounds = array<i64: 1, 8, 128>}]} {
    %0 = tpu.iota {dimensions = array<i32: 1>} : vector<1x128xi32>
    %c32_i32 = arith.constant 32 : i32
    %1 = vector.broadcast %c32_i32 : i32 to vector<1x128xi32>
    %2 = arith.cmpi slt, %0, %1 : vector<1x128xi32>
    %3 = arith.extui %2 : vector<1x128xi1> to vector<1x128xi32>
    %4 = arith.sitofp %3 : vector<1x128xi32> to vector<1x128xf32>
    %c0 = arith.constant 0 : index
    %c0_0 = arith.constant 0 : index
    %c0_1 = arith.constant 0 : index
    %5 = vector.load %arg1[%c0, %c0_0, %c0_1] : memref<1x8x128xf32, #tpu.memory_space<vmem>>, vector<1x8x128xf32>
    %6 = vector.shape_cast %5 : vector<1x8x128xf32> to vector<8x128xf32>
    %7 = arith.truncf %6 : vector<8x128xf32> to vector<8x128xbf16>
    %c0_2 = arith.constant 0 : index
    %c0_3 = arith.constant 0 : index
    %8 = vector.load %arg3[%c0_2, %c0_3] : memref<128x96xbf16, #tpu.memory_space<vmem>>, vector<128x96xbf16>
    %cst = arith.constant dense<0.000000e+00> : vector<8x96xf32>
    %9 = tpu.matmul %7, %8, %cst {dimension_numbers = #tpu.dot_dimension_numbers<[1], [0], [0], [1], [0, 0, 1, 1], [], []>} : vector<8x128xbf16>, vector<128x96xbf16>, vector<8x96xf32> -> vector<8x96xf32>
    %c0_4 = arith.constant 0 : index
    %c0_5 = arith.constant 0 : index
    %10 = vector.load %arg4[%c0_4, %c0_5] : memref<1x96xf32, #tpu.memory_space<vmem>>, vector<1x96xf32>
    %11 = vector.broadcast %10 : vector<1x96xf32> to vector<8x96xf32>
    %12 = arith.addf %9, %11 : vector<8x96xf32>
    %13 = vector.shape_cast %12 : vector<8x96xf32> to vector<1x8x96xf32>
    %cst_6 = arith.constant 8.000000e+00 : f32
    %14 = math.sqrt %cst_6 : f32
    %cst_7 = arith.constant 1.000000e+00 : f32
    %15 = arith.divf %cst_7, %14 : f32
    %c0_8 = arith.constant 0 : index
    %c0_9 = arith.constant 0 : index
    %c0_10 = arith.constant 0 : index
    %16 = vector.load %arg2[%c0_8, %c0_9, %c0_10] : memref<1x8x8xbf16, #tpu.memory_space<vmem>>, vector<1x8x8xbf16>
    %17 = arith.extf %16 : vector<1x8x8xbf16> to vector<1x8x8xf32>
    %18 = vector.extract_strided_slice %13 {offsets = [0, 0, 0], sizes = [1, 8, 8], strides = [1, 1, 1]} : vector<1x8x96xf32> to vector<1x8x8xf32>
    %19 = arith.truncf %18 : vector<1x8x8xf32> to vector<1x8x8xbf16>
    %20 = vector.extract_strided_slice %13 {offsets = [0, 0, 32], sizes = [1, 8, 8], strides = [1, 1, 1]} : vector<1x8x96xf32> to vector<1x8x8xf32>
    %21 = arith.truncf %20 : vector<1x8x8xf32> to vector<1x8x8xbf16>
    %22 = vector.extract_strided_slice %13 {offsets = [0, 0, 64], sizes = [1, 8, 8], strides = [1, 1, 1]} : vector<1x8x96xf32> to vector<1x8x8xf32>
    %23 = arith.truncf %22 : vector<1x8x8xf32> to vector<1x8x8xbf16>
    "tpu.trace_start"() <{level = 10 : i32, message = "bqd,bkd->bqk"}> : () -> ()
    %cst_11 = arith.constant dense<0.000000e+00> : vector<1x8x8xf32>
    %24 = tpu.matmul %19, %21, %cst_11 {dimension_numbers = #tpu.dot_dimension_numbers<[2], [2], [1], [1], [0, 0, 0, 1, 1, 1], [0], [0]>} : vector<1x8x8xbf16>, vector<1x8x8xbf16>, vector<1x8x8xf32> -> vector<1x8x8xf32>
    "tpu.trace_stop"() : () -> ()
    %25 = vector.broadcast %15 : f32 to vector<1x8x8xf32>
    %26 = arith.mulf %24, %25 : vector<1x8x8xf32>
    %27 = arith.addf %26, %17 : vector<1x8x8xf32>
    %cst_12 = arith.constant dense<0xFF800000> : vector<1x8xf32>
    %28 = vector.multi_reduction <maximumf>, %27, %cst_12 [2] : vector<1x8x8xf32> to vector<1x8xf32>
    %29 = vector.shape_cast %28 : vector<1x8xf32> to vector<1x8x1xf32>
    %30 = vector.broadcast %29 : vector<1x8x1xf32> to vector<1x8x8xf32>
    %31 = arith.subf %27, %30 : vector<1x8x8xf32>
    %32 = math.exp %31 : vector<1x8x8xf32>
    %cst_13 = arith.constant dense<0.000000e+00> : vector<1x8xf32>
    %33 = vector.multi_reduction <add>, %32, %cst_13 [2] : vector<1x8x8xf32> to vector<1x8xf32>
    %34 = vector.shape_cast %33 : vector<1x8xf32> to vector<1x8x1xf32>
    %35 = tpu.reciprocal %34 {approx = true} : vector<1x8x1xf32> -> vector<1x8x1xf32>
    %36 = arith.mulf %34, %35 : vector<1x8x1xf32>
    %cst_14 = arith.constant 2.000000e+00 : f32
    %37 = vector.broadcast %cst_14 : f32 to vector<1x8x1xf32>
    %38 = arith.subf %37, %36 : vector<1x8x1xf32>
    %39 = arith.mulf %35, %38 : vector<1x8x1xf32>
    %40 = vector.broadcast %39 : vector<1x8x1xf32> to vector<1x8x8xf32>
    %41 = arith.mulf %32, %40 : vector<1x8x8xf32>
    %42 = arith.truncf %41 : vector<1x8x8xf32> to vector<1x8x8xbf16>
    "tpu.trace_start"() <{level = 10 : i32, message = "bqk,bkd->bqd"}> : () -> ()
    %cst_15 = arith.constant dense<0.000000e+00> : vector<1x8x8xf32>
    %43 = tpu.matmul %42, %23, %cst_15 {dimension_numbers = #tpu.dot_dimension_numbers<[2], [1], [1], [2], [0, 0, 0, 1, 1, 2], [0], [0]>} : vector<1x8x8xbf16>, vector<1x8x8xbf16>, vector<1x8x8xf32> -> vector<1x8x8xf32>
    "tpu.trace_stop"() : () -> ()
    %44 = vector.extract_strided_slice %13 {offsets = [0, 0, 8], sizes = [1, 8, 8], strides = [1, 1, 1]} : vector<1x8x96xf32> to vector<1x8x8xf32>
    %45 = arith.truncf %44 : vector<1x8x8xf32> to vector<1x8x8xbf16>
    %46 = vector.extract_strided_slice %13 {offsets = [0, 0, 40], sizes = [1, 8, 8], strides = [1, 1, 1]} : vector<1x8x96xf32> to vector<1x8x8xf32>
    %47 = arith.truncf %46 : vector<1x8x8xf32> to vector<1x8x8xbf16>
    %48 = vector.extract_strided_slice %13 {offsets = [0, 0, 72], sizes = [1, 8, 8], strides = [1, 1, 1]} : vector<1x8x96xf32> to vector<1x8x8xf32>
    %49 = arith.truncf %48 : vector<1x8x8xf32> to vector<1x8x8xbf16>
    "tpu.trace_start"() <{level = 10 : i32, message = "bqd,bkd->bqk"}> : () -> ()
    %cst_16 = arith.constant dense<0.000000e+00> : vector<1x8x8xf32>
    %50 = tpu.matmul %45, %47, %cst_16 {dimension_numbers = #tpu.dot_dimension_numbers<[2], [2], [1], [1], [0, 0, 0, 1, 1, 1], [0], [0]>} : vector<1x8x8xbf16>, vector<1x8x8xbf16>, vector<1x8x8xf32> -> vector<1x8x8xf32>
    "tpu.trace_stop"() : () -> ()
    %51 = vector.broadcast %15 : f32 to vector<1x8x8xf32>
    %52 = arith.mulf %50, %51 : vector<1x8x8xf32>
    %53 = arith.addf %52, %17 : vector<1x8x8xf32>
    %cst_17 = arith.constant dense<0xFF800000> : vector<1x8xf32>
    %54 = vector.multi_reduction <maximumf>, %53, %cst_17 [2] : vector<1x8x8xf32> to vector<1x8xf32>
    %55 = vector.shape_cast %54 : vector<1x8xf32> to vector<1x8x1xf32>
    %56 = vector.broadcast %55 : vector<1x8x1xf32> to vector<1x8x8xf32>
    %57 = arith.subf %53, %56 : vector<1x8x8xf32>
    %58 = math.exp %57 : vector<1x8x8xf32>
    %cst_18 = arith.constant dense<0.000000e+00> : vector<1x8xf32>
    %59 = vector.multi_reduction <add>, %58, %cst_18 [2] : vector<1x8x8xf32> to vector<1x8xf32>
    %60 = vector.shape_cast %59 : vector<1x8xf32> to vector<1x8x1xf32>
    %61 = tpu.reciprocal %60 {approx = true} : vector<1x8x1xf32> -> vector<1x8x1xf32>
    %62 = arith.mulf %60, %61 : vector<1x8x1xf32>
    %cst_19 = arith.constant 2.000000e+00 : f32
    %63 = vector.broadcast %cst_19 : f32 to vector<1x8x1xf32>
    %64 = arith.subf %63, %62 : vector<1x8x1xf32>
    %65 = arith.mulf %61, %64 : vector<1x8x1xf32>
    %66 = vector.broadcast %65 : vector<1x8x1xf32> to vector<1x8x8xf32>
    %67 = arith.mulf %58, %66 : vector<1x8x8xf32>
    %68 = arith.truncf %67 : vector<1x8x8xf32> to vector<1x8x8xbf16>
    "tpu.trace_start"() <{level = 10 : i32, message = "bqk,bkd->bqd"}> : () -> ()
    %cst_20 = arith.constant dense<0.000000e+00> : vector<1x8x8xf32>
    %69 = tpu.matmul %68, %49, %cst_20 {dimension_numbers = #tpu.dot_dimension_numbers<[2], [1], [1], [2], [0, 0, 0, 1, 1, 2], [0], [0]>} : vector<1x8x8xbf16>, vector<1x8x8xbf16>, vector<1x8x8xf32> -> vector<1x8x8xf32>
    "tpu.trace_stop"() : () -> ()
    %70 = vector.extract_strided_slice %13 {offsets = [0, 0, 16], sizes = [1, 8, 8], strides = [1, 1, 1]} : vector<1x8x96xf32> to vector<1x8x8xf32>
    %71 = arith.truncf %70 : vector<1x8x8xf32> to vector<1x8x8xbf16>
    %72 = vector.extract_strided_slice %13 {offsets = [0, 0, 48], sizes = [1, 8, 8], strides = [1, 1, 1]} : vector<1x8x96xf32> to vector<1x8x8xf32>
    %73 = arith.truncf %72 : vector<1x8x8xf32> to vector<1x8x8xbf16>
    %74 = vector.extract_strided_slice %13 {offsets = [0, 0, 80], sizes = [1, 8, 8], strides = [1, 1, 1]} : vector<1x8x96xf32> to vector<1x8x8xf32>
    %75 = arith.truncf %74 : vector<1x8x8xf32> to vector<1x8x8xbf16>
    "tpu.trace_start"() <{level = 10 : i32, message = "bqd,bkd->bqk"}> : () -> ()
    %cst_21 = arith.constant dense<0.000000e+00> : vector<1x8x8xf32>
    %76 = tpu.matmul %71, %73, %cst_21 {dimension_numbers = #tpu.dot_dimension_numbers<[2], [2], [1], [1], [0, 0, 0, 1, 1, 1], [0], [0]>} : vector<1x8x8xbf16>, vector<1x8x8xbf16>, vector<1x8x8xf32> -> vector<1x8x8xf32>
    "tpu.trace_stop"() : () -> ()
    %77 = vector.broadcast %15 : f32 to vector<1x8x8xf32>
    %78 = arith.mulf %76, %77 : vector<1x8x8xf32>
    %79 = arith.addf %78, %17 : vector<1x8x8xf32>
    %cst_22 = arith.constant dense<0xFF800000> : vector<1x8xf32>
    %80 = vector.multi_reduction <maximumf>, %79, %cst_22 [2] : vector<1x8x8xf32> to vector<1x8xf32>
    %81 = vector.shape_cast %80 : vector<1x8xf32> to vector<1x8x1xf32>
    %82 = vector.broadcast %81 : vector<1x8x1xf32> to vector<1x8x8xf32>
    %83 = arith.subf %79, %82 : vector<1x8x8xf32>
    %84 = math.exp %83 : vector<1x8x8xf32>
    %cst_23 = arith.constant dense<0.000000e+00> : vector<1x8xf32>
    %85 = vector.multi_reduction <add>, %84, %cst_23 [2] : vector<1x8x8xf32> to vector<1x8xf32>
    %86 = vector.shape_cast %85 : vector<1x8xf32> to vector<1x8x1xf32>
    %87 = tpu.reciprocal %86 {approx = true} : vector<1x8x1xf32> -> vector<1x8x1xf32>
    %88 = arith.mulf %86, %87 : vector<1x8x1xf32>
    %cst_24 = arith.constant 2.000000e+00 : f32
    %89 = vector.broadcast %cst_24 : f32 to vector<1x8x1xf32>
    %90 = arith.subf %89, %88 : vector<1x8x1xf32>
    %91 = arith.mulf %87, %90 : vector<1x8x1xf32>
    %92 = vector.broadcast %91 : vector<1x8x1xf32> to vector<1x8x8xf32>
    %93 = arith.mulf %84, %92 : vector<1x8x8xf32>
    %94 = arith.truncf %93 : vector<1x8x8xf32> to vector<1x8x8xbf16>
    "tpu.trace_start"() <{level = 10 : i32, message = "bqk,bkd->bqd"}> : () -> ()
    %cst_25 = arith.constant dense<0.000000e+00> : vector<1x8x8xf32>
    %95 = tpu.matmul %94, %75, %cst_25 {dimension_numbers = #tpu.dot_dimension_numbers<[2], [1], [1], [2], [0, 0, 0, 1, 1, 2], [0], [0]>} : vector<1x8x8xbf16>, vector<1x8x8xbf16>, vector<1x8x8xf32> -> vector<1x8x8xf32>
    "tpu.trace_stop"() : () -> ()
    %96 = vector.extract_strided_slice %13 {offsets = [0, 0, 24], sizes = [1, 8, 8], strides = [1, 1, 1]} : vector<1x8x96xf32> to vector<1x8x8xf32>
    %97 = arith.truncf %96 : vector<1x8x8xf32> to vector<1x8x8xbf16>
    %98 = vector.extract_strided_slice %13 {offsets = [0, 0, 56], sizes = [1, 8, 8], strides = [1, 1, 1]} : vector<1x8x96xf32> to vector<1x8x8xf32>
    %99 = arith.truncf %98 : vector<1x8x8xf32> to vector<1x8x8xbf16>
    %100 = vector.extract_strided_slice %13 {offsets = [0, 0, 88], sizes = [1, 8, 8], strides = [1, 1, 1]} : vector<1x8x96xf32> to vector<1x8x8xf32>
    %101 = arith.truncf %100 : vector<1x8x8xf32> to vector<1x8x8xbf16>
    "tpu.trace_start"() <{level = 10 : i32, message = "bqd,bkd->bqk"}> : () -> ()
    %cst_26 = arith.constant dense<0.000000e+00> : vector<1x8x8xf32>
    %102 = tpu.matmul %97, %99, %cst_26 {dimension_numbers = #tpu.dot_dimension_numbers<[2], [2], [1], [1], [0, 0, 0, 1, 1, 1], [0], [0]>} : vector<1x8x8xbf16>, vector<1x8x8xbf16>, vector<1x8x8xf32> -> vector<1x8x8xf32>
    "tpu.trace_stop"() : () -> ()
    %103 = vector.broadcast %15 : f32 to vector<1x8x8xf32>
    %104 = arith.mulf %102, %103 : vector<1x8x8xf32>
    %105 = arith.addf %104, %17 : vector<1x8x8xf32>
    %cst_27 = arith.constant dense<0xFF800000> : vector<1x8xf32>
    %106 = vector.multi_reduction <maximumf>, %105, %cst_27 [2] : vector<1x8x8xf32> to vector<1x8xf32>
    %107 = vector.shape_cast %106 : vector<1x8xf32> to vector<1x8x1xf32>
    %108 = vector.broadcast %107 : vector<1x8x1xf32> to vector<1x8x8xf32>
    %109 = arith.subf %105, %108 : vector<1x8x8xf32>
    %110 = math.exp %109 : vector<1x8x8xf32>
    %cst_28 = arith.constant dense<0.000000e+00> : vector<1x8xf32>
    %111 = vector.multi_reduction <add>, %110, %cst_28 [2] : vector<1x8x8xf32> to vector<1x8xf32>
    %112 = vector.shape_cast %111 : vector<1x8xf32> to vector<1x8x1xf32>
    %113 = tpu.reciprocal %112 {approx = true} : vector<1x8x1xf32> -> vector<1x8x1xf32>
    %114 = arith.mulf %112, %113 : vector<1x8x1xf32>
    %cst_29 = arith.constant 2.000000e+00 : f32
    %115 = vector.broadcast %cst_29 : f32 to vector<1x8x1xf32>
    %116 = arith.subf %115, %114 : vector<1x8x1xf32>
    %117 = arith.mulf %113, %116 : vector<1x8x1xf32>
    %118 = vector.broadcast %117 : vector<1x8x1xf32> to vector<1x8x8xf32>
    %119 = arith.mulf %110, %118 : vector<1x8x8xf32>
    %120 = arith.truncf %119 : vector<1x8x8xf32> to vector<1x8x8xbf16>
    "tpu.trace_start"() <{level = 10 : i32, message = "bqk,bkd->bqd"}> : () -> ()
    %cst_30 = arith.constant dense<0.000000e+00> : vector<1x8x8xf32>
    %121 = tpu.matmul %120, %101, %cst_30 {dimension_numbers = #tpu.dot_dimension_numbers<[2], [1], [1], [2], [0, 0, 0, 1, 1, 2], [0], [0]>} : vector<1x8x8xbf16>, vector<1x8x8xbf16>, vector<1x8x8xf32> -> vector<1x8x8xf32>
    "tpu.trace_stop"() : () -> ()
    %122 = tpu.concatenate %43, %69, %95, %121 in 2 : vector<1x8x8xf32>, vector<1x8x8xf32>, vector<1x8x8xf32>, vector<1x8x8xf32> -> vector<1x8x32xf32>
    %123 = vector.shape_cast %122 : vector<1x8x32xf32> to vector<8x32xf32>
    %124 = arith.truncf %123 : vector<8x32xf32> to vector<8x32xbf16>
    %c0_31 = arith.constant 0 : index
    %c0_32 = arith.constant 0 : index
    %125 = vector.load %arg5[%c0_31, %c0_32] : memref<32x128xbf16, #tpu.memory_space<vmem>>, vector<32x128xbf16>
    %cst_33 = arith.constant dense<0.000000e+00> : vector<8x128xf32>
    %126 = tpu.matmul %124, %125, %cst_33 {dimension_numbers = #tpu.dot_dimension_numbers<[1], [0], [0], [1], [0, 0, 1, 1], [], []>} : vector<8x32xbf16>, vector<32x128xbf16>, vector<8x128xf32> -> vector<8x128xf32>
    %c0_34 = arith.constant 0 : index
    %c0_35 = arith.constant 0 : index
    %127 = vector.load %arg6[%c0_34, %c0_35] : memref<1x128xf32, #tpu.memory_space<vmem>>, vector<1x128xf32>
    %128 = vector.broadcast %127 : vector<1x128xf32> to vector<8x128xf32>
    %129 = arith.addf %126, %128 : vector<8x128xf32>
    %130 = arith.addf %6, %129 : vector<8x128xf32>
    %131 = vector.broadcast %4 : vector<1x128xf32> to vector<8x128xf32>
    %132 = arith.mulf %130, %131 : vector<8x128xf32>
    %cst_36 = arith.constant dense<0.000000e+00> : vector<8xf32>
    %133 = vector.multi_reduction <add>, %132, %cst_36 [1] : vector<8x128xf32> to vector<8xf32>
    %134 = vector.shape_cast %133 : vector<8xf32> to vector<8x1xf32>
    %cst_37 = arith.constant 3.125000e-02 : f32
    %135 = vector.broadcast %cst_37 : f32 to vector<8x1xf32>
    %136 = arith.mulf %134, %135 : vector<8x1xf32>
    %137 = arith.mulf %132, %132 : vector<8x128xf32>
    %cst_38 = arith.constant dense<0.000000e+00> : vector<8xf32>
    %138 = vector.multi_reduction <add>, %137, %cst_38 [1] : vector<8x128xf32> to vector<8xf32>
    %139 = vector.shape_cast %138 : vector<8xf32> to vector<8x1xf32>
    %cst_39 = arith.constant 3.125000e-02 : f32
    %140 = vector.broadcast %cst_39 : f32 to vector<8x1xf32>
    %141 = arith.mulf %139, %140 : vector<8x1xf32>
    %142 = arith.mulf %136, %136 : vector<8x1xf32>
    %143 = arith.subf %141, %142 : vector<8x1xf32>
    %cst_40 = arith.constant 0.000000e+00 : f32
    %144 = vector.broadcast %cst_40 : f32 to vector<8x1xf32>
    %145 = arith.maximumf %143, %144 : vector<8x1xf32>
    %146 = vector.broadcast %136 : vector<8x1xf32> to vector<8x128xf32>
    %147 = arith.subf %132, %146 : vector<8x128xf32>
    %cst_41 = arith.constant 9.99999974E-6 : f32
    %148 = vector.broadcast %cst_41 : f32 to vector<8x1xf32>
    %149 = arith.addf %145, %148 : vector<8x1xf32>
    %150 = math.rsqrt %149 : vector<8x1xf32>
    %151 = vector.broadcast %150 : vector<8x1xf32> to vector<8x128xf32>
    %152 = arith.mulf %147, %151 : vector<8x128xf32>
    %153 = vector.broadcast %4 : vector<1x128xf32> to vector<8x128xf32>
    %154 = arith.mulf %152, %153 : vector<8x128xf32>
    %155 = arith.truncf %154 : vector<8x128xf32> to vector<8x128xbf16>
    %c0_42 = arith.constant 0 : index
    %c0_43 = arith.constant 0 : index
    %156 = vector.load %arg7[%c0_42, %c0_43] : memref<128x2048xbf16, #tpu.memory_space<vmem>>, vector<128x2048xbf16>
    %cst_44 = arith.constant dense<0.000000e+00> : vector<8x2048xf32>
    %157 = tpu.matmul %155, %156, %cst_44 {dimension_numbers = #tpu.dot_dimension_numbers<[1], [0], [0], [1], [0, 0, 1, 1], [], []>} : vector<8x128xbf16>, vector<128x2048xbf16>, vector<8x2048xf32> -> vector<8x2048xf32>
    %c0_45 = arith.constant 0 : index
    %c0_46 = arith.constant 0 : index
    %158 = vector.load %arg8[%c0_45, %c0_46] : memref<1x2048xf32, #tpu.memory_space<vmem>>, vector<1x2048xf32>
    %159 = vector.broadcast %158 : vector<1x2048xf32> to vector<8x2048xf32>
    %160 = arith.addf %157, %159 : vector<8x2048xf32>
    %cst_47 = arith.constant 0.000000e+00 : f32
    %161 = vector.broadcast %cst_47 : f32 to vector<8x2048xf32>
    %162 = arith.maximumf %160, %161 : vector<8x2048xf32>
    %163 = arith.truncf %162 : vector<8x2048xf32> to vector<8x2048xbf16>
    %c0_48 = arith.constant 0 : index
    %c0_49 = arith.constant 0 : index
    %164 = vector.load %arg9[%c0_48, %c0_49] : memref<2048x128xbf16, #tpu.memory_space<vmem>>, vector<2048x128xbf16>
    %cst_50 = arith.constant dense<0.000000e+00> : vector<8x128xf32>
    %165 = tpu.matmul %163, %164, %cst_50 {dimension_numbers = #tpu.dot_dimension_numbers<[1], [0], [0], [1], [0, 0, 1, 1], [], []>} : vector<8x2048xbf16>, vector<2048x128xbf16>, vector<8x128xf32> -> vector<8x128xf32>
    %c0_51 = arith.constant 0 : index
    %c0_52 = arith.constant 0 : index
    %166 = vector.load %arg10[%c0_51, %c0_52] : memref<1x128xf32, #tpu.memory_space<vmem>>, vector<1x128xf32>
    %167 = vector.broadcast %166 : vector<1x128xf32> to vector<8x128xf32>
    %168 = arith.addf %165, %167 : vector<8x128xf32>
    %169 = arith.addf %154, %168 : vector<8x128xf32>
    %170 = vector.broadcast %4 : vector<1x128xf32> to vector<8x128xf32>
    %171 = arith.mulf %169, %170 : vector<8x128xf32>
    %cst_53 = arith.constant dense<0.000000e+00> : vector<8xf32>
    %172 = vector.multi_reduction <add>, %171, %cst_53 [1] : vector<8x128xf32> to vector<8xf32>
    %173 = vector.shape_cast %172 : vector<8xf32> to vector<8x1xf32>
    %cst_54 = arith.constant 3.125000e-02 : f32
    %174 = vector.broadcast %cst_54 : f32 to vector<8x1xf32>
    %175 = arith.mulf %173, %174 : vector<8x1xf32>
    %176 = arith.mulf %171, %171 : vector<8x128xf32>
    %cst_55 = arith.constant dense<0.000000e+00> : vector<8xf32>
    %177 = vector.multi_reduction <add>, %176, %cst_55 [1] : vector<8x128xf32> to vector<8xf32>
    %178 = vector.shape_cast %177 : vector<8xf32> to vector<8x1xf32>
    %cst_56 = arith.constant 3.125000e-02 : f32
    %179 = vector.broadcast %cst_56 : f32 to vector<8x1xf32>
    %180 = arith.mulf %178, %179 : vector<8x1xf32>
    %181 = arith.mulf %175, %175 : vector<8x1xf32>
    %182 = arith.subf %180, %181 : vector<8x1xf32>
    %cst_57 = arith.constant 0.000000e+00 : f32
    %183 = vector.broadcast %cst_57 : f32 to vector<8x1xf32>
    %184 = arith.maximumf %182, %183 : vector<8x1xf32>
    %185 = vector.broadcast %175 : vector<8x1xf32> to vector<8x128xf32>
    %186 = arith.subf %171, %185 : vector<8x128xf32>
    %cst_58 = arith.constant 9.99999974E-6 : f32
    %187 = vector.broadcast %cst_58 : f32 to vector<8x1xf32>
    %188 = arith.addf %184, %187 : vector<8x1xf32>
    %189 = math.rsqrt %188 : vector<8x1xf32>
    %190 = vector.broadcast %189 : vector<8x1xf32> to vector<8x128xf32>
    %191 = arith.mulf %186, %190 : vector<8x128xf32>
    %192 = vector.broadcast %4 : vector<1x128xf32> to vector<8x128xf32>
    %193 = arith.mulf %191, %192 : vector<8x128xf32>
    %194 = vector.shape_cast %193 : vector<8x128xf32> to vector<1x8x128xf32>
    %c0_59 = arith.constant 0 : index
    %c0_60 = arith.constant 0 : index
    %c0_61 = arith.constant 0 : index
    %195 = vector.load %arg11[%c0_59, %c0_60, %c0_61] : memref<1x8x128xf32, #tpu.memory_space<vmem>>, vector<1x8x128xf32>
    tpu.vector_store %arg11[%c0_59, %c0_60, %c0_61], %194 {strides = array<i32>} : memref<1x8x128xf32, #tpu.memory_space<vmem>>, vector<1x8x128xf32>,
    return
  }
  func.func @transform_0(%arg0: i32) -> (i32, i32, i32) {
    %c0_i32 = arith.constant 0 : i32
    %c0_i32_0 = arith.constant 0 : i32
    %c0_i32_1 = arith.constant 0 : i32
    return %arg0, %c0_i32, %c0_i32_0 : i32, i32, i32
  }
  func.func @transform_1(%arg0: i32) -> (i32, i32, i32) {
    %c0_i32 = arith.constant 0 : i32
    %c0_i32_0 = arith.constant 0 : i32
    %c0_i32_1 = arith.constant 0 : i32
    return %arg0, %c0_i32, %c0_i32_0 : i32, i32, i32
  }
  func.func @transform_2(%arg0: i32) -> (i32, i32) {
    %c0_i32 = arith.constant 0 : i32
    %c0_i32_0 = arith.constant 0 : i32
    %c0_i32_1 = arith.constant 0 : i32
    return %c0_i32, %c0_i32_0 : i32, i32
  }
  func.func @transform_3(%arg0: i32) -> (i32, i32) {
    %c0_i32 = arith.constant 0 : i32
    %c0_i32_0 = arith.constant 0 : i32
    %c0_i32_1 = arith.constant 0 : i32
    return %c0_i32, %c0_i32_0 : i32, i32
  }
  func.func @transform_4(%arg0: i32) -> (i32, i32) {
    %c0_i32 = arith.constant 0 : i32
    %c0_i32_0 = arith.constant 0 : i32
    %c0_i32_1 = arith.constant 0 : i32
    return %c0_i32, %c0_i32_0 : i32, i32
  }
  func.func @transform_5(%arg0: i32) -> (i32, i32) {
    %c0_i32 = arith.constant 0 : i32
    %c0_i32_0 = arith.constant 0 : i32
    %c0_i32_1 = arith.constant 0 : i32
    return %c0_i32, %c0_i32_0 : i32, i32
  }
  func.func @transform_6(%arg0: i32) -> (i32, i32) {
    %c0_i32 = arith.constant 0 : i32
    %c0_i32_0 = arith.constant 0 : i32
    %c0_i32_1 = arith.constant 0 : i32
    return %c0_i32, %c0_i32_0 : i32, i32
  }
  func.func @transform_7(%arg0: i32) -> (i32, i32) {
    %c0_i32 = arith.constant 0 : i32
    %c0_i32_0 = arith.constant 0 : i32
    %c0_i32_1 = arith.constant 0 : i32
    return %c0_i32, %c0_i32_0 : i32, i32
  }
  func.func @transform_8(%arg0: i32) -> (i32, i32) {
    %c0_i32 = arith.constant 0 : i32
    %c0_i32_0 = arith.constant 0 : i32
    %c0_i32_1 = arith.constant 0 : i32
    return %c0_i32, %c0_i32_0 : i32, i32
  }
  func.func @transform_9(%arg0: i32) -> (i32, i32) {
    %c0_i32 = arith.constant 0 : i32
    %c0_i32_0 = arith.constant 0 : i32
    %c0_i32_1 = arith.constant 0 : i32
    return %c0_i32, %c0_i32_0 : i32, i32
  }
  func.func @transform_10(%arg0: i32) -> (i32, i32, i32) {
    %c0_i32 = arith.constant 0 : i32
    %c0_i32_0 = arith.constant 0 : i32
    %c0_i32_1 = arith.constant 0 : i32
    return %arg0, %c0_i32, %c0_i32_0 : i32, i32, i32
  }
}

</mosaic_0001>

<llo_original>
// kernel: tpu_custom_call.1
$region0: #{tpu_custom_call.1}
  #allocation0 [shape = 'u32[]', space=smem, size = 0x4, offset = 0x4, fixed_abs, tag = 'smem constant byte address 0x4 - core index']
  #allocation1 [shape = 'u32[144,128]{1,0:T(1,128)}', space=vmem, size = 0x12000, scoped, tag = 'internal scratch']
  %s0 = inlined_call_operand.vmem [shape: f32[2,8,128], index: 0, kind: input, shape index: {}]
  %s1 = inlined_call_operand.vmem [shape: bf16[2,8,8], index: 1, kind: input, shape index: {}]
  %s2 = inlined_call_operand.vmem [shape: bf16[128,96], index: 2, kind: input, shape index: {}]
  %s3 = inlined_call_operand.vmem [shape: f32[1,96], index: 3, kind: input, shape index: {}]
  %s4 = inlined_call_operand.vmem [shape: bf16[32,128], index: 4, kind: input, shape index: {}]
  %s5 = inlined_call_operand.vmem [shape: f32[1,128], index: 5, kind: input, shape index: {}]
  %s6 = inlined_call_operand.hbm [shape: bf16[128,2048], index: 6, kind: input, shape index: {}]
  %s7 = inlined_call_operand.vmem [shape: f32[1,2048], index: 7, kind: input, shape index: {}]
  %s8 = inlined_call_operand.hbm [shape: bf16[2048,128], index: 8, kind: input, shape index: {}]
  %s9 = inlined_call_operand.vmem [shape: f32[1,128], index: 9, kind: input, shape index: {}]
  %s10 = inlined_call_operand.hbm [shape: f32[2,8,128], index: 10, kind: output, shape index: {}]
  %s11 = sld [smem:[#allocation0]]
  $region81: #{tpu_custom_call.1} parent=0
    _
  %s13 = ssub.s32 1, %s11
  %s14 = scalar_select 0, %s13, %s11
  $region1: #{tpu_custom_call.1} parent=0
    #allocation2 [shape = 'u8[524288]{0}', space=vmem, size = 0x80000, scoped, tag = 'input window, operand 6, single buffered']
    #allocation3 [shape = 's32[2]{0}', space=sflag, size = 0x8, scoped, tag = 'scoped memory for tpu_custom_call.1']
    #allocation4 [shape = 's32[2]{0}', space=sflag, size = 0x8, scoped, tag = 'scoped memory for tpu_custom_call.1']
    #allocation5 [shape = 'u8[524288]{0}', space=vmem, size = 0x80000, scoped, tag = 'input window, operand 8, single buffered']
    #allocation6 [shape = 's32[1]{0}', space=sflag, size = 0x4, scoped, tag = 'scoped memory for tpu_custom_call.1']
    #allocation7 [shape = 'u8[8192]{0}', space=vmem, size = 0x2000, scoped, tag = 'output window, operand 0']
    %15 = vsyncpa [#allocation3], 0
    %16 = vsyncpa [#allocation6], 0
    %17 = vsyncpa [#allocation4], 0
    %s18 = scalar_lea.sflag [#allocation4], 1
    %19 = vsyncpa %s18, 0
    loop: start=0, step=1, limit=4
    $region2: #{tpu_custom_call.1} parent=1 // loop_pre_header
      _
    $region3: #{tpu_custom_call.1} parent=1 // loop_header
      %s21 = sphi 0, %s25
      %p22 = scmp.ge.s32.totalorder %s21, 4
      %s31 = sphi 0, %s33
      %s34 = sphi 0, %s31
      %s35 = sphi 0, %s34
      %s51 = sphi 0, %s35
      %s57 = sphi 0, %s59
      %s60 = sphi 0, %s57
      %s61 = sphi 0, %s60
      %s77 = sphi 0, %s61
      %s81 = sphi 0, %s81
      %s83 = sphi 0, %s81
      %s84 = sphi 0, %s83
      %s98 = sphi 0, %s84
      %s102 = sphi 0, %s102
      %s104 = sphi 0, %s102
      %s105 = sphi 0, %s104
      %s119 = sphi 0, %s105
      %s123 = sphi 0, %s123
      %s125 = sphi 0, %s123
      %s126 = sphi 0, %s125
      %s140 = sphi 0, %s126
      %s144 = sphi 0, %s144
      %s146 = sphi 0, %s144
      %s147 = sphi 0, %s146
      %s161 = sphi 0, %s147
      %s165 = sphi 0, %s165
      %s167 = sphi 0, %s165
      %s168 = sphi 0, %s167
      %s182 = sphi 0, %s168
      %s186 = sphi 0, %s186
      %s188 = sphi 0, %s186
      %s189 = sphi 0, %s188
      %s203 = sphi 0, %s189
      %s207 = sphi 0, %s207
      %s209 = sphi 0, %s207
      %s210 = sphi 0, %s209
      %s224 = sphi 0, %s210
      %s228 = sphi 0, %s228
      %s230 = sphi 0, %s228
      %s231 = sphi 0, %s230
      %s245 = sphi 0, %s231
      %s251 = sphi 0, %s253
      %s254 = sphi 0, %s251
      %s255 = sphi 0, %s254
      %s271 = sphi 0, %s255
    $region4: #{tpu_custom_call.1} parent=1 // loop_header_branch
      %24 = sbr.rel (%p22) target = $region8
    $region5: #{tpu_custom_call.1} parent=1 // loop_body
      %s26 = ssub.s32 %s21, 1
      %s27 = ssub.s32 %s21, 2
      %s28 = sadd.s32 %s21, 1
      %s29 = ssub.s32 %s21, %s28
      %p30 = scmp.eq.s32.totalorder %s29, 0
      %s32 = sadd.s32 %s31, 1
      %s33 = scalar_select %p30, %s31, %s32
      %p36 = pneg %p30
      %p37 = scmp.eq.s32.totalorder %s21, 1
      %p38 = por %p36, %p37
      %p39 = scmp.ne.s32.totalorder %s31, %s34
      %p40 = scmp.eq.s32.totalorder %s21, 0
      %p41 = por %p39, %p40
      %p42 = scmp.ne.s32.totalorder %s31, %s34
      %p43 = scmp.eq.s32.totalorder %s26, 1
      %p44 = por %p42, %p43
      %p45 = scmp.ne.s32.totalorder %s34, %s35
      %p46 = scmp.eq.s32.totalorder %s26, 0
      %p47 = por %p45, %p46
      %p48 = scmp.ne.s32.totalorder %s34, %s35
      %p49 = scmp.eq.s32.totalorder %s27, 1
      %p50 = por %p48, %p49
      %p52 = scmp.ne.s32.totalorder %s35, %s51
      %p53 = scmp.eq.s32.totalorder %s27, 0
      %p54 = por %p52, %p53
      %s55 = ssub.s32 %s21, %s28
      %p56 = scmp.eq.s32.totalorder %s55, 0
      %s58 = sadd.s32 %s57, 1
      %s59 = scalar_select %p56, %s57, %s58
      %p62 = pneg %p56
      %p63 = scmp.eq.s32.totalorder %s21, 1
      %p64 = por %p62, %p63
      %p65 = scmp.ne.s32.totalorder %s57, %s60
      %p66 = scmp.eq.s32.totalorder %s21, 0
      %p67 = por %p65, %p66
      %p68 = scmp.ne.s32.totalorder %s57, %s60
      %p69 = scmp.eq.s32.totalorder %s26, 1
      %p70 = por %p68, %p69
      %p71 = scmp.ne.s32.totalorder %s60, %s61
      %p72 = scmp.eq.s32.totalorder %s26, 0
      %p73 = por %p71, %p72
      %p74 = scmp.ne.s32.totalorder %s60, %s61
      %p75 = scmp.eq.s32.totalorder %s27, 1
      %p76 = por %p74, %p75
      %p78 = scmp.ne.s32.totalorder %s61, %s77
      %p79 = scmp.eq.s32.totalorder %s27, 0
      %p80 = por %p78, %p79
      %s82 = sadd.s32 %s81, 1
      %p85 = scmp.eq.s32.totalorder %s21, 1
      %p86 = scmp.ne.s32.totalorder %s81, %s83
      %p87 = scmp.eq.s32.totalorder %s21, 0
      %p88 = por %p86, %p87
      %p89 = scmp.ne.s32.totalorder %s81, %s83
      %p90 = scmp.eq.s32.totalorder %s26, 1
      %p91 = por %p89, %p90
      %p92 = scmp.ne.s32.totalorder %s83, %s84
      %p93 = scmp.eq.s32.totalorder %s26, 0
      %p94 = por %p92, %p93
      %p95 = scmp.ne.s32.totalorder %s83, %s84
      %p96 = scmp.eq.s32.totalorder %s27, 1
      %p97 = por %p95, %p96
      %p99 = scmp.ne.s32.totalorder %s84, %s98
      %p100 = scmp.eq.s32.totalorder %s27, 0
      %p101 = por %p99, %p100
      %s103 = sadd.s32 %s102, 1
      %p106 = scmp.eq.s32.totalorder %s21, 1
      %p107 = scmp.ne.s32.totalorder %s102, %s104
      %p108 = scmp.eq.s32.totalorder %s21, 0
      %p109 = por %p107, %p108
      %p110 = scmp.ne.s32.totalorder %s102, %s104
      %p111 = scmp.eq.s32.totalorder %s26, 1
      %p112 = por %p110, %p111
      %p113 = scmp.ne.s32.totalorder %s104, %s105
      %p114 = scmp.eq.s32.totalorder %s26, 0
      %p115 = por %p113, %p114
      %p116 = scmp.ne.s32.totalorder %s104, %s105
      %p117 = scmp.eq.s32.totalorder %s27, 1
      %p118 = por %p116, %p117
      %p120 = scmp.ne.s32.totalorder %s105, %s119
      %p121 = scmp.eq.s32.totalorder %s27, 0
      %p122 = por %p120, %p121
      %s124 = sadd.s32 %s123, 1
      %p127 = scmp.eq.s32.totalorder %s21, 1
      %p128 = scmp.ne.s32.totalorder %s123, %s125
      %p129 = scmp.eq.s32.totalorder %s21, 0
      %p130 = por %p128, %p129
      %p131 = scmp.ne.s32.totalorder %s123, %s125
      %p132 = scmp.eq.s32.totalorder %s26, 1
      %p133 = por %p131, %p132
      %p134 = scmp.ne.s32.totalorder %s125, %s126
      %p135 = scmp.eq.s32.totalorder %s26, 0
      %p136 = por %p134, %p135
      %p137 = scmp.ne.s32.totalorder %s125, %s126
      %p138 = scmp.eq.s32.totalorder %s27, 1
      %p139 = por %p137, %p138
      %p141 = scmp.ne.s32.totalorder %s126, %s140
      %p142 = scmp.eq.s32.totalorder %s27, 0
      %p143 = por %p141, %p142
      %s145 = sadd.s32 %s144, 1
      %p148 = scmp.eq.s32.totalorder %s21, 1
      %p149 = scmp.ne.s32.totalorder %s144, %s146
      %p150 = scmp.eq.s32.totalorder %s21, 0
      %p151 = por %p149, %p150
      %p152 = scmp.ne.s32.totalorder %s144, %s146
      %p153 = scmp.eq.s32.totalorder %s26, 1
      %p154 = por %p152, %p153
      %p155 = scmp.ne.s32.totalorder %s146, %s147
      %p156 = scmp.eq.s32.totalorder %s26, 0
      %p157 = por %p155, %p156
      %p158 = scmp.ne.s32.totalorder %s146, %s147
      %p159 = scmp.eq.s32.totalorder %s27, 1
      %p160 = por %p158, %p159
      %p162 = scmp.ne.s32.totalorder %s147, %s161
      %p163 = scmp.eq.s32.totalorder %s27, 0
      %p164 = por %p162, %p163
      %s166 = sadd.s32 %s165, 1
      %p169 = scmp.eq.s32.totalorder %s21, 1
      %p170 = scmp.ne.s32.totalorder %s165, %s167
      %p171 = scmp.eq.s32.totalorder %s21, 0
      %p172 = por %p170, %p171
      %p173 = scmp.ne.s32.totalorder %s165, %s167
      %p174 = scmp.eq.s32.totalorder %s26, 1
      %p175 = por %p173, %p174
      %p176 = scmp.ne.s32.totalorder %s167, %s168
      %p177 = scmp.eq.s32.totalorder %s26, 0
      %p178 = por %p176, %p177
      %p179 = scmp.ne.s32.totalorder %s167, %s168
      %p180 = scmp.eq.s32.totalorder %s27, 1
      %p181 = por %p179, %p180
      %p183 = scmp.ne.s32.totalorder %s168, %s182
      %p184 = scmp.eq.s32.totalorder %s27, 0
      %p185 = por %p183, %p184
      %s187 = sadd.s32 %s186, 1
      %p190 = scmp.eq.s32.totalorder %s21, 1
      %p191 = scmp.ne.s32.totalorder %s186, %s188
      %p192 = scmp.eq.s32.totalorder %s21, 0
      %p193 = por %p191, %p192
      %p194 = scmp.ne.s32.totalorder %s186, %s188
      %p195 = scmp.eq.s32.totalorder %s26, 1
      %p196 = por %p194, %p195
      %p197 = scmp.ne.s32.totalorder %s188, %s189
      %p198 = scmp.eq.s32.totalorder %s26, 0
      %p199 = por %p197, %p198
      %p200 = scmp.ne.s32.totalorder %s188, %s189
      %p201 = scmp.eq.s32.totalorder %s27, 1
      %p202 = por %p200, %p201
      %p204 = scmp.ne.s32.totalorder %s189, %s203
      %p205 = scmp.eq.s32.totalorder %s27, 0
      %p206 = por %p204, %p205
      %s208 = sadd.s32 %s207, 1
      %p211 = scmp.eq.s32.totalorder %s21, 1
      %p212 = scmp.ne.s32.totalorder %s207, %s209
      %p213 = scmp.eq.s32.totalorder %s21, 0
      %p214 = por %p212, %p213
      %p215 = scmp.ne.s32.totalorder %s207, %s209
      %p216 = scmp.eq.s32.totalorder %s26, 1
      %p217 = por %p215, %p216
      %p218 = scmp.ne.s32.totalorder %s209, %s210
      %p219 = scmp.eq.s32.totalorder %s26, 0
      %p220 = por %p218, %p219
      %p221 = scmp.ne.s32.totalorder %s209, %s210
      %p222 = scmp.eq.s32.totalorder %s27, 1
      %p223 = por %p221, %p222
      %p225 = scmp.ne.s32.totalorder %s210, %s224
      %p226 = scmp.eq.s32.totalorder %s27, 0
      %p227 = por %p225, %p226
      %s229 = sadd.s32 %s228, 1
      %p232 = scmp.eq.s32.totalorder %s21, 1
      %p233 = scmp.ne.s32.totalorder %s228, %s230
      %p234 = scmp.eq.s32.totalorder %s21, 0
      %p235 = por %p233, %p234
      %p236 = scmp.ne.s32.totalorder %s228, %s230
      %p237 = scmp.eq.s32.totalorder %s26, 1
      %p238 = por %p236, %p237
      %p239 = scmp.ne.s32.totalorder %s230, %s231
      %p240 = scmp.eq.s32.totalorder %s26, 0
      %p241 = por %p239, %p240
      %p242 = scmp.ne.s32.totalorder %s230, %s231
      %p243 = scmp.eq.s32.totalorder %s27, 1
      %p244 = por %p242, %p243
      %p246 = scmp.ne.s32.totalorder %s231, %s245
      %p247 = scmp.eq.s32.totalorder %s27, 0
      %p248 = por %p246, %p247
      %s249 = ssub.s32 %s21, %s28
      %p250 = scmp.eq.s32.totalorder %s249, 0
      %s252 = sadd.s32 %s251, 1
      %s253 = scalar_select %p250, %s251, %s252
      %p256 = pneg %p250
      %p257 = scmp.eq.s32.totalorder %s21, 1
      %p258 = por %p256, %p257
      %p259 = scmp.ne.s32.totalorder %s251, %s254
      %p260 = scmp.eq.s32.totalorder %s21, 0
      %p261 = por %p259, %p260
      %p262 = scmp.ne.s32.totalorder %s251, %s254
      %p263 = scmp.eq.s32.totalorder %s26, 1
      %p264 = por %p262, %p263
      %p265 = scmp.ne.s32.totalorder %s254, %s255
      %p266 = scmp.eq.s32.totalorder %s26, 0
      %p267 = por %p265, %p266
      %p268 = scmp.ne.s32.totalorder %s254, %s255
      %p269 = scmp.eq.s32.totalorder %s27, 1
      %p270 = por %p268, %p269
      %p272 = scmp.ne.s32.totalorder %s255, %s271
      %p273 = scmp.eq.s32.totalorder %s27, 0
      %p274 = por %p272, %p273
      %p275 = scmp.le.s32.totalorder 1, %s21
      %p276 = scmp.lt.s32.totalorder %s21, 3
      %p277 = pnand %p275, %p276
      %p278 = pneg %p277
      // Predicated region
      $region9: #{tpu_custom_call.1} parent=5 // pred_check
        _
      $region10: #{tpu_custom_call.1} parent=5 // pred_check_branch
        %280 = sbr.rel (%p277) target = $region12
      $region11: #{tpu_custom_call.1} parent=5 // pred_region
        %s281 = ssub.s32 %s21, 1
        // Predicated region
        $region13: #{tpu_custom_call.1} parent=11 // pred_check
          %p282 = pneg %p94
        $region14: #{tpu_custom_call.1} parent=11 // pred_check_branch
          %284 = sbr.rel (%p282) target = $region16
        $region15: #{tpu_custom_call.1} parent=11 // pred_region
          _
        $region16: #{tpu_custom_call.1} parent=11 // pred_fallthru
          _
        // Predicated region
        $region17: #{tpu_custom_call.1} parent=11 // pred_check
          %p285 = pneg %p115
        $region18: #{tpu_custom_call.1} parent=11 // pred_check_branch
          %287 = sbr.rel (%p285) target = $region20
        $region19: #{tpu_custom_call.1} parent=11 // pred_region
          _
        $region20: #{tpu_custom_call.1} parent=11 // pred_fallthru
          _
        // Predicated region
        $region21: #{tpu_custom_call.1} parent=11 // pred_check
          %p288 = pneg %p136
        $region22: #{tpu_custom_call.1} parent=11 // pred_check_branch
          %290 = sbr.rel (%p288) target = $region24
        $region23: #{tpu_custom_call.1} parent=11 // pred_region
          _
        $region24: #{tpu_custom_call.1} parent=11 // pred_fallthru
          _
        // Predicated region
        $region25: #{tpu_custom_call.1} parent=11 // pred_check
          %p291 = pneg %p157
        $region26: #{tpu_custom_call.1} parent=11 // pred_check_branch
          %293 = sbr.rel (%p291) target = $region28
        $region27: #{tpu_custom_call.1} parent=11 // pred_region
          _
        $region28: #{tpu_custom_call.1} parent=11 // pred_fallthru
          _
        // Predicated region
        $region29: #{tpu_custom_call.1} parent=11 // pred_check
          %p294 = pneg %p178
        $region30: #{tpu_custom_call.1} parent=11 // pred_check_branch
          %296 = sbr.rel (%p294) target = $region32
        $region31: #{tpu_custom_call.1} parent=11 // pred_region
          %s298 = ssub.s32 16384, 16384
          %299 = vsyncadd [#allocation3], %s298
          %s300 = sshll.u32 [#allocation2], 4
          %s301 = int_to_ptr.vmem [resolvable:$true] %s300
          %306 = dma.hbm_to_vmem [thread:$0]  %s6, 16384, %s301, [#allocation3], 1024, 1024, 64
        $region32: #{tpu_custom_call.1} parent=11 // pred_fallthru
          _
        // Predicated region
        $region33: #{tpu_custom_call.1} parent=11 // pred_check
          %p307 = pneg %p199
        $region34: #{tpu_custom_call.1} parent=11 // pred_check_branch
          %309 = sbr.rel (%p307) target = $region36
        $region35: #{tpu_custom_call.1} parent=11 // pred_region
          _
        $region36: #{tpu_custom_call.1} parent=11 // pred_fallthru
          _
        // Predicated region
        $region37: #{tpu_custom_call.1} parent=11 // pred_check
          %p310 = pneg %p220
        $region38: #{tpu_custom_call.1} parent=11 // pred_check_branch
          %312 = sbr.rel (%p310) target = $region40
        $region39: #{tpu_custom_call.1} parent=11 // pred_region
          %s314 = ssub.s32 16384, 16384
          %315 = vsyncadd [#allocation6], %s314
          %s316 = sshll.u32 [#allocation5], 4
          %s317 = int_to_ptr.vmem [resolvable:$true] %s316
          %322 = dma.hbm_to_vmem [thread:$0]  %s8, 16384, %s317, [#allocation6], 64, 64, 4
        $region40: #{tpu_custom_call.1} parent=11 // pred_fallthru
          _
        // Predicated region
        $region41: #{tpu_custom_call.1} parent=11 // pred_check
          %p323 = pneg %p241
        $region42: #{tpu_custom_call.1} parent=11 // pred_check_branch
          %325 = sbr.rel (%p323) target = $region44
        $region43: #{tpu_custom_call.1} parent=11 // pred_region
          _
        $region44: #{tpu_custom_call.1} parent=11 // pred_fallthru
          _
      $region12: #{tpu_custom_call.1} parent=5 // pred_fallthru
        _
      %p326 = scmp.lt.s32.totalorder %s21, 2
      // Predicated region
      $region45: #{tpu_custom_call.1} parent=5 // pred_check
        %p327 = pneg %p326
      $region46: #{tpu_custom_call.1} parent=5 // pred_check_branch
        %329 = sbr.rel (%p327) target = $region48
      $region47: #{tpu_custom_call.1} parent=5 // pred_region
        // Predicated region
        $region49: #{tpu_custom_call.1} parent=47 // pred_check
          %p330 = pneg %p41
        $region50: #{tpu_custom_call.1} parent=47 // pred_check_branch
          %332 = sbr.rel (%p330) target = $region52
        $region51: #{tpu_custom_call.1} parent=47 // pred_region
          %p333 = scmp.lt.s32.totalorder %s21, 1
          %s334 = scalar_select %p333, %s21, 1
          %s335 = smul.addr %s334, 8
          %s336 = scalar_lea.vmem %s0, %s335
        $region52: #{tpu_custom_call.1} parent=47 // pred_fallthru
          _
        // Predicated region
        $region53: #{tpu_custom_call.1} parent=47 // pred_check
          %p337 = pneg %p67
        $region54: #{tpu_custom_call.1} parent=47 // pred_check_branch
          %339 = sbr.rel (%p337) target = $region56
        $region55: #{tpu_custom_call.1} parent=47 // pred_region
          %p340 = scmp.lt.s32.totalorder %s21, 1
          %s341 = scalar_select %p340, %s21, 1
          %s342 = smul.addr %s341, 4
          %s343 = scalar_lea.vmem %s1, %s342
        $region56: #{tpu_custom_call.1} parent=47 // pred_fallthru
          _
      $region48: #{tpu_custom_call.1} parent=5 // pred_fallthru
        _
      %p344 = scmp.le.s32.totalorder 1, %s21
      %p345 = scmp.lt.s32.totalorder %s21, 3
      %p346 = pnand %p344, %p345
      %p347 = pneg %p346
      // Predicated region
      $region57: #{tpu_custom_call.1} parent=5 // pred_check
        _
      $region58: #{tpu_custom_call.1} parent=5 // pred_check_branch
        %349 = sbr.rel (%p346) target = $region60
      $region59: #{tpu_custom_call.1} parent=5 // pred_region
        %s350 = ssub.s32 %s21, 1
        // Predicated region
        $region61: #{tpu_custom_call.1} parent=59 // pred_check
          %p351 = pneg %p178
        $region62: #{tpu_custom_call.1} parent=59 // pred_check_branch
          %353 = sbr.rel (%p351) target = $region64
        $region63: #{tpu_custom_call.1} parent=59 // pred_region
          %354 = dma.done [#allocation3], 16384
        $region64: #{tpu_custom_call.1} parent=59 // pred_fallthru
          _
        // Predicated region
        $region65: #{tpu_custom_call.1} parent=59 // pred_check
          %p355 = pneg %p220
        $region66: #{tpu_custom_call.1} parent=59 // pred_check_branch
          %357 = sbr.rel (%p355) target = $region68
        $region67: #{tpu_custom_call.1} parent=59 // pred_region
          %358 = dma.done [#allocation6], 16384
        $region68: #{tpu_custom_call.1} parent=59 // pred_fallthru
          _
        %p359 = scmp.lt.s32.totalorder %s26, 1
        %s360 = scalar_select %p359, %s26, 1
        %s361 = smul.addr %s360, 8
        %s362 = scalar_lea.vmem %s0, %s361
        %p363 = pneg %p47
        %p364 = pneg %p44
        %p365 = scmp.lt.s32.totalorder %s26, 1
        %s366 = scalar_select %p365, %s26, 1
        %s367 = smul.addr %s366, 4
        %s368 = scalar_lea.vmem %s1, %s367
        %p369 = pneg %p73
        %p370 = pneg %p70
        %p371 = pneg %p94
        %p372 = pneg %p91
        %p373 = pneg %p115
        %p374 = pneg %p112
        %p375 = pneg %p136
        %p376 = pneg %p133
        %p377 = pneg %p157
        %p378 = pneg %p154
        %p379 = pneg %p178
        %p380 = pneg %p175
        %p381 = pneg %p199
        %p382 = pneg %p196
        %p383 = pneg %p220
        %p384 = pneg %p217
        %p385 = pneg %p241
        %p386 = pneg %p238
        %p387 = pneg %p267
        %p388 = pneg %p264
        %s389 = sand.u32 %s254, 1
        %s390 = scalar_lea.sflag [#allocation4], %s389
        %s391 = sand.u32 %s254, 1
        %s392 = smul.addr %s391, 8
        %s393 = scalar_lea.vmem [#allocation7], %s392
        %p394 = scmp.lt.s32.totalorder %s26, 1
        %s395 = scalar_select %p394, %s26, 1
        %s396 = smul.addr %s395, 8
        %s397 = scalar_lea.vmem %s0, %s396
        %p398 = scmp.lt.s32.totalorder %s26, 1
        %s399 = scalar_select %p398, %s26, 1
        %s400 = smul.addr %s399, 4
        %s401 = scalar_lea.vmem %s1, %s400
        %v403 = vlaneseq
        %v404 = vand.u32 %v403, 127
        %vm405 = vcmp.lt.s32.totalorder %v404, 32
        %v406 = vsel %vm405, 1, 0
        %v407 = vcvt.s32.f32 %v406
        %v408 = vld [vmem:[%s397] sm:$0xff]
        %v409 = vpack.c.bf16 %v408, %v408
        %v410 = vld [vmem:[%s2] sm:$0xf]
        %v411 = vld [vmem:[%s2 + $0x4] sm:$0xf]
        %v412 = vld [vmem:[%s2 + $0x8] sm:$0xf]
        %v413 = vld [vmem:[%s2 + $0xc] sm:$0xf]
        %v414 = vld [vmem:[%s2 + $0x10] sm:$0xf]
        %v415 = vld [vmem:[%s2 + $0x14] sm:$0xf]
        %v416 = vld [vmem:[%s2 + $0x18] sm:$0xf]
        %v417 = vld [vmem:[%s2 + $0x1c] sm:$0xf]
        %v418 = vld [vmem:[%s2 + $0x20] sm:$0xf]
        %v419 = vld [vmem:[%s2 + $0x24] sm:$0xf]
        %v420 = vld [vmem:[%s2 + $0x28] sm:$0xf]
        %v421 = vld [vmem:[%s2 + $0x2c] sm:$0xf]
        %v422 = vld [vmem:[%s2 + $0x30] sm:$0xf]
        %v423 = vld [vmem:[%s2 + $0x34] sm:$0xf]
        %v424 = vld [vmem:[%s2 + $0x38] sm:$0xf]
        %v425 = vld [vmem:[%s2 + $0x3c] sm:$0xf]
        %v426 = vld [vmem:[%s3] sm:$0x1]
        %v428 = vlaneseq
        %v429 = vshrl.u32 %v428, 7
        %v430 = vsub.s32 0, %v429
        %v431 = vrot.slane %v426, %v430
        %v449 = vunpack.c.l.b16 %v410
        %v450 = vunpack.c.l.b16 %v411
        %v451 = vunpack.c.l.b16 %v412
        %v452 = vunpack.c.l.b16 %v413
        %v453 = vunpack.c.l.b16 %v414
        %v454 = vunpack.c.l.b16 %v415
        %v455 = vunpack.c.l.b16 %v416
        %v456 = vunpack.c.l.b16 %v417
        %v457 = vunpack.c.l.b16 %v418
        %v458 = vunpack.c.l.b16 %v419
        %v459 = vunpack.c.l.b16 %v420
        %v460 = vunpack.c.l.b16 %v421
        %v461 = vunpack.c.l.b16 %v422
        %v462 = vunpack.c.l.b16 %v423
        %v463 = vunpack.c.l.b16 %v424
        %v464 = vunpack.c.l.b16 %v425
        %v465 = vpack.c.b16 %v450, %v449
        %v466 = vpack.c.b16 %v452, %v451
        %v467 = vpack.c.b16 %v454, %v453
        %v468 = vpack.c.b16 %v456, %v455
        %v469 = vpack.c.b16 %v458, %v457
        %v470 = vpack.c.b16 %v460, %v459
        %v471 = vpack.c.b16 %v462, %v461
        %v472 = vpack.c.b16 %v464, %v463
        %481 = vmatprep.subr.bf16.mxu0 0
        %482 = vmatpush1.bf16.msra.mxu0 %v472
        %483 = vmatprep.subr.bf16.mxu0 0
        %484 = vmatpush1.bf16.msra.mxu0 %v471
        %485 = vmatprep.subr.bf16.mxu0 0
        %486 = vmatpush1.bf16.msra.mxu0 %v470
        %487 = vmatprep.subr.bf16.mxu0 0
        %488 = vmatpush1.bf16.msra.mxu0 %v469
        %489 = vmatprep.subr.bf16.mxu0 0
        %490 = vmatpush1.bf16.msra.mxu0 %v468
        %491 = vmatprep.subr.bf16.mxu0 0
        %492 = vmatpush1.bf16.msra.mxu0 %v467
        %493 = vmatprep.subr.bf16.mxu0 0
        %494 = vmatpush1.bf16.msra.mxu0 %v466
        %495 = vmatprep.subr.bf16.mxu0 0
        %496 = vmatpush1.bf16.msra.mxu0 %v465
        %497 = vmatprep.subr.bf16.mxu0 0
        %498 = vmatpush2.bf16.msra.mxu0 0
        %499 = vmatprep.subr.bf16.mxu0 0
        %500 = vmatpush2.bf16.msra.mxu0 0
        %501 = vmatprep.subr.bf16.mxu0 0
        %502 = vmatpush2.bf16.msra.mxu0 0
        %503 = vmatprep.subr.bf16.mxu0 0
        %504 = vmatpush2.bf16.msra.mxu0 0
        %505 = vmatprep.subr.bf16.mxu0 0
        %506 = vmatpush2.bf16.msra.mxu0 0
        %507 = vmatprep.subr.bf16.mxu0 0
        %508 = vmatpush2.bf16.msra.mxu0 0
        %509 = vmatprep.subr.bf16.mxu0 0
        %510 = vmatpush2.bf16.msra.mxu0 0
        %511 = vmatprep.subr.bf16.mxu0 0
        %512 = vmatpush2.bf16.msra.mxu0 0
        %513 = vmatprep.mubr.bf16.mxu0 0
        %514 = vmatmul.mubr.bf16.gmra.mxu0 %v409
        %v515 = vpop.f32.mrf.mxu0
        %v516 = vadd.f32 %v431, %v515
        %v517 = vpop.f32.mrf.mxu0
        %v518 = vpop.f32.mrf.mxu0
        %v519 = vpop.f32.mrf.mxu0
        %520 = vdwg.mxu0
        %v521 = vld [vmem:[%s401] sm:$0xf]
        %v522 = vunpack.c.l.bf16 %v521
        %v523 = vpack.c.bf16 %v516, %v516
        %525 = vrot.lane.b32.xlu0 %v523, 96
        %v526 = vpop.permute.xlu0 %525
        %vm527 = vcmask 64512
        %v529 = vsel %vm527, %v523, 0
        %v532 = vsel %vm527, %v526, 0
        %534 = vmatprep.subr.bf16.mxu0 0
        %535 = vmatpush1.bf16.xpose.msra.mxu0 0
        %536 = vmatprep.subr.bf16.mxu0 0
        %537 = vmatpush1.bf16.xpose.msra.mxu0 0
        %538 = vmatprep.subr.bf16.mxu0 0
        %539 = vmatpush1.bf16.xpose.msra.mxu0 0
        %540 = vmatprep.subr.bf16.mxu0 0
        %541 = vmatpush1.bf16.xpose.msra.mxu0 0
        %542 = vmatprep.subr.bf16.mxu0 0
        %543 = vmatpush1.bf16.xpose.msra.mxu0 0
        %544 = vmatprep.subr.bf16.mxu0 0
        %545 = vmatpush1.bf16.xpose.msra.mxu0 0
        %546 = vmatprep.subr.bf16.mxu0 0
        %547 = vmatpush1.bf16.xpose.msra.mxu0 0
        %548 = vmatprep.subr.bf16.mxu0 0
        %549 = vmatpush1.bf16.xpose.msra.mxu0 %v532
        %550 = vmatprep.subr.bf16.mxu0 0
        %551 = vmatpush2.bf16.xpose.msra.mxu0 0
        %552 = vmatprep.subr.bf16.mxu0 0
        %553 = vmatpush2.bf16.xpose.msra.mxu0 0
        %554 = vmatprep.subr.bf16.mxu0 0
        %555 = vmatpush2.bf16.xpose.msra.mxu0 0
        %556 = vmatprep.subr.bf16.mxu0 0
        %557 = vmatpush2.bf16.xpose.msra.mxu0 0
        %558 = vmatprep.subr.bf16.mxu0 0
        %559 = vmatpush2.bf16.xpose.msra.mxu0 0
        %560 = vmatprep.subr.bf16.mxu0 0
        %561 = vmatpush2.bf16.xpose.msra.mxu0 0
        %562 = vmatprep.subr.bf16.mxu0 0
        %563 = vmatpush2.bf16.xpose.msra.mxu0 0
        %564 = vmatprep.subr.bf16.mxu0 0
        %565 = vmatpush2.bf16.xpose.msra.mxu0 0
        %566 = vmatprep.mubr.bf16.mxu0 0
        %567 = vmatmul.mubr.bf16.gmra.mxu0 %v529
        %v568 = vpop.f32.mrf.mxu0
        %v569 = vadd.f32 0.0, %v568
        %v570 = vpop.f32.mrf.mxu0
        %v571 = vpop.f32.mrf.mxu0
        %v572 = vpop.f32.mrf.mxu0
        %573 = vdwg.mxu0
        %v574 = vmul.f32 %v569, 0.35355338
        %v575 = vadd.f32 %v574, %v522
        %v576 = vsel %vm527, %v575, -inf
        %577 = vmax.xlane.f32.xlu0 %v576
        %v578 = vpop.xlane.xlu0 %577
        %v579 = vsub.f32 %v575, %v578
        %v580 = vmul.f32 %v579, 1.442695
        %v581 = vpow.pop %v580
        %v582 = vsel %vm527, %v581, 0.0
        %583 = vadd.xlane.f32.xlu0 %v582
        %v584 = vpop.xlane.xlu0 %583
        %v585 = vrcp.pop %v584
        %v586 = vmul.f32 %v584, %v585
        %v587 = vsub.f32 2.0, %v586
        %v588 = vmul.f32 %v585, %v587
        %v589 = vmul.f32 %v581, %v588
        %v590 = vpack.c.bf16 %v589, %v589
        %591 = vrot.lane.b32.xlu0 %v523, 64
        %v592 = vpop.permute.xlu0 %591
        %v594 = vsel %vm527, %v590, 0
        %vm596 = vcmask 1043456
        %v598 = vsel %vm596, %v592, 0
        %600 = vmatprep.subr.bf16.mxu0 0
        %601 = vmatpush1.bf16.msra.mxu0 0
        %602 = vmatprep.subr.bf16.mxu0 0
        %603 = vmatpush1.bf16.msra.mxu0 0
        %604 = vmatprep.subr.bf16.mxu0 0
        %605 = vmatpush1.bf16.msra.mxu0 0
        %606 = vmatprep.subr.bf16.mxu0 0
        %607 = vmatpush1.bf16.msra.mxu0 0
        %608 = vmatprep.subr.bf16.mxu0 0
        %609 = vmatpush1.bf16.msra.mxu0 0
        %610 = vmatprep.subr.bf16.mxu0 0
        %611 = vmatpush1.bf16.msra.mxu0 0
        %612 = vmatprep.subr.bf16.mxu0 0
        %613 = vmatpush1.bf16.msra.mxu0 0
        %614 = vmatprep.subr.bf16.mxu0 0
        %615 = vmatpush1.bf16.msra.mxu0 %v598
        %616 = vmatprep.subr.bf16.mxu0 0
        %617 = vmatpush2.bf16.msra.mxu0 0
        %618 = vmatprep.subr.bf16.mxu0 0
        %619 = vmatpush2.bf16.msra.mxu0 0
        %620 = vmatprep.subr.bf16.mxu0 0
        %621 = vmatpush2.bf16.msra.mxu0 0
        %622 = vmatprep.subr.bf16.mxu0 0
        %623 = vmatpush2.bf16.msra.mxu0 0
        %624 = vmatprep.subr.bf16.mxu0 0
        %625 = vmatpush2.bf16.msra.mxu0 0
        %626 = vmatprep.subr.bf16.mxu0 0
        %627 = vmatpush2.bf16.msra.mxu0 0
        %628 = vmatprep.subr.bf16.mxu0 0
        %629 = vmatpush2.bf16.msra.mxu0 0
        %630 = vmatprep.subr.bf16.mxu0 0
        %631 = vmatpush2.bf16.msra.mxu0 0
        %632 = vmatprep.mubr.bf16.mxu0 0
        %633 = vmatmul.mubr.bf16.gmra.mxu0 %v594
        %v634 = vpop.f32.mrf.mxu0
        %v635 = vadd.f32 0.0, %v634
        %v636 = vpop.f32.mrf.mxu0
        %v637 = vpop.f32.mrf.mxu0
        %v638 = vpop.f32.mrf.mxu0
        %639 = vdwg.mxu0
        %640 = vrot.lane.b32.xlu0 %v523, 120
        %v641 = vpop.permute.xlu0 %640
        %642 = vrot.lane.b32.xlu0 %v523, 88
        %v643 = vpop.permute.xlu0 %642
        %v645 = vsel %vm527, %v641, 0
        %v648 = vsel %vm527, %v643, 0
        %650 = vmatprep.subr.bf16.mxu0 0
        %651 = vmatpush1.bf16.xpose.msra.mxu0 0
        %652 = vmatprep.subr.bf16.mxu0 0
        %653 = vmatpush1.bf16.xpose.msra.mxu0 0
        %654 = vmatprep.subr.bf16.mxu0 0
        %655 = vmatpush1.bf16.xpose.msra.mxu0 0
        %656 = vmatprep.subr.bf16.mxu0 0
        %657 = vmatpush1.bf16.xpose.msra.mxu0 0
        %658 = vmatprep.subr.bf16.mxu0 0
        %659 = vmatpush1.bf16.xpose.msra.mxu0 0
        %660 = vmatprep.subr.bf16.mxu0 0
        %661 = vmatpush1.bf16.xpose.msra.mxu0 0
        %662 = vmatprep.subr.bf16.mxu0 0
        %663 = vmatpush1.bf16.xpose.msra.mxu0 0
        %664 = vmatprep.subr.bf16.mxu0 0
        %665 = vmatpush1.bf16.xpose.msra.mxu0 %v648
        %666 = vmatprep.subr.bf16.mxu0 0
        %667 = vmatpush2.bf16.xpose.msra.mxu0 0
        %668 = vmatprep.subr.bf16.mxu0 0
        %669 = vmatpush2.bf16.xpose.msra.mxu0 0
        %670 = vmatprep.subr.bf16.mxu0 0
        %671 = vmatpush2.bf16.xpose.msra.mxu0 0
        %672 = vmatprep.subr.bf16.mxu0 0
        %673 = vmatpush2.bf16.xpose.msra.mxu0 0
        %674 = vmatprep.subr.bf16.mxu0 0
        %675 = vmatpush2.bf16.xpose.msra.mxu0 0
        %676 = vmatprep.subr.bf16.mxu0 0
        %677 = vmatpush2.bf16.xpose.msra.mxu0 0
        %678 = vmatprep.subr.bf16.mxu0 0
        %679 = vmatpush2.bf16.xpose.msra.mxu0 0
        %680 = vmatprep.subr.bf16.mxu0 0
        %681 = vmatpush2.bf16.xpose.msra.mxu0 0
        %682 = vmatprep.mubr.bf16.mxu0 0
        %683 = vmatmul.mubr.bf16.gmra.mxu0 %v645
        %v684 = vpop.f32.mrf.mxu0
        %v685 = vadd.f32 0.0, %v684
        %v686 = vpop.f32.mrf.mxu0
        %v687 = vpop.f32.mrf.mxu0
        %v688 = vpop.f32.mrf.mxu0
        %689 = vdwg.mxu0
        %v690 = vmul.f32 %v685, 0.35355338
        %v691 = vadd.f32 %v690, %v522
        %v692 = vsel %vm527, %v691, -inf
        %693 = vmax.xlane.f32.xlu0 %v692
        %v694 = vpop.xlane.xlu0 %693
        %v695 = vsub.f32 %v691, %v694
        %v696 = vmul.f32 %v695, 1.442695
        %v697 = vpow.pop %v696
        %v698 = vsel %vm527, %v697, 0.0
        %699 = vadd.xlane.f32.xlu0 %v698
        %v700 = vpop.xlane.xlu0 %699
        %v701 = vrcp.pop %v700
        %v702 = vmul.f32 %v700, %v701
        %v703 = vsub.f32 2.0, %v702
        %v704 = vmul.f32 %v701, %v703
        %v705 = vmul.f32 %v697, %v704
        %v706 = vpack.c.bf16 %v705, %v705
        %707 = vrot.lane.b32.xlu0 %v523, 56
        %v708 = vpop.permute.xlu0 %707
        %v710 = vsel %vm527, %v706, 0
        %v713 = vsel %vm596, %v708, 0
        %715 = vmatprep.subr.bf16.mxu0 0
        %716 = vmatpush1.bf16.msra.mxu0 0
        %717 = vmatprep.subr.bf16.mxu0 0
        %718 = vmatpush1.bf16.msra.mxu0 0
        %719 = vmatprep.subr.bf16.mxu0 0
        %720 = vmatpush1.bf16.msra.mxu0 0
        %721 = vmatprep.subr.bf16.mxu0 0
        %722 = vmatpush1.bf16.msra.mxu0 0
        %723 = vmatprep.subr.bf16.mxu0 0
        %724 = vmatpush1.bf16.msra.mxu0 0
        %725 = vmatprep.subr.bf16.mxu0 0
        %726 = vmatpush1.bf16.msra.mxu0 0
        %727 = vmatprep.subr.bf16.mxu0 0
        %728 = vmatpush1.bf16.msra.mxu0 0
        %729 = vmatprep.subr.bf16.mxu0 0
        %730 = vmatpush1.bf16.msra.mxu0 %v713
        %731 = vmatprep.subr.bf16.mxu0 0
        %732 = vmatpush2.bf16.msra.mxu0 0
        %733 = vmatprep.subr.bf16.mxu0 0
        %734 = vmatpush2.bf16.msra.mxu0 0
        %735 = vmatprep.subr.bf16.mxu0 0
        %736 = vmatpush2.bf16.msra.mxu0 0
        %737 = vmatprep.subr.bf16.mxu0 0
        %738 = vmatpush2.bf16.msra.mxu0 0
        %739 = vmatprep.subr.bf16.mxu0 0
        %740 = vmatpush2.bf16.msra.mxu0 0
        %741 = vmatprep.subr.bf16.mxu0 0
        %742 = vmatpush2.bf16.msra.mxu0 0
        %743 = vmatprep.subr.bf16.mxu0 0
        %744 = vmatpush2.bf16.msra.mxu0 0
        %745 = vmatprep.subr.bf16.mxu0 0
        %746 = vmatpush2.bf16.msra.mxu0 0
        %747 = vmatprep.mubr.bf16.mxu0 0
        %748 = vmatmul.mubr.bf16.gmra.mxu0 %v710
        %v749 = vpop.f32.mrf.mxu0
        %v750 = vadd.f32 0.0, %v749
        %v751 = vpop.f32.mrf.mxu0
        %v752 = vpop.f32.mrf.mxu0
        %v753 = vpop.f32.mrf.mxu0
        %754 = vdwg.mxu0
        %755 = vrot.lane.b32.xlu0 %v523, 112
        %v756 = vpop.permute.xlu0 %755
        %757 = vrot.lane.b32.xlu0 %v523, 80
        %v758 = vpop.permute.xlu0 %757
        %v760 = vsel %vm527, %v756, 0
        %v763 = vsel %vm527, %v758, 0
        %765 = vmatprep.subr.bf16.mxu0 0
        %766 = vmatpush1.bf16.xpose.msra.mxu0 0
        %767 = vmatprep.subr.bf16.mxu0 0
        %768 = vmatpush1.bf16.xpose.msra.mxu0 0
        %769 = vmatprep.subr.bf16.mxu0 0
        %770 = vmatpush1.bf16.xpose.msra.mxu0 0
        %771 = vmatprep.subr.bf16.mxu0 0
        %772 = vmatpush1.bf16.xpose.msra.mxu0 0
        %773 = vmatprep.subr.bf16.mxu0 0
        %774 = vmatpush1.bf16.xpose.msra.mxu0 0
        %775 = vmatprep.subr.bf16.mxu0 0
        %776 = vmatpush1.bf16.xpose.msra.mxu0 0
        %777 = vmatprep.subr.bf16.mxu0 0
        %778 = vmatpush1.bf16.xpose.msra.mxu0 0
        %779 = vmatprep.subr.bf16.mxu0 0
        %780 = vmatpush1.bf16.xpose.msra.mxu0 %v763
        %781 = vmatprep.subr.bf16.mxu0 0
        %782 = vmatpush2.bf16.xpose.msra.mxu0 0
        %783 = vmatprep.subr.bf16.mxu0 0
        %784 = vmatpush2.bf16.xpose.msra.mxu0 0
        %785 = vmatprep.subr.bf16.mxu0 0
        %786 = vmatpush2.bf16.xpose.msra.mxu0 0
        %787 = vmatprep.subr.bf16.mxu0 0
        %788 = vmatpush2.bf16.xpose.msra.mxu0 0
        %789 = vmatprep.subr.bf16.mxu0 0
        %790 = vmatpush2.bf16.xpose.msra.mxu0 0
        %791 = vmatprep.subr.bf16.mxu0 0
        %792 = vmatpush2.bf16.xpose.msra.mxu0 0
        %793 = vmatprep.subr.bf16.mxu0 0
        %794 = vmatpush2.bf16.xpose.msra.mxu0 0
        %795 = vmatprep.subr.bf16.mxu0 0
        %796 = vmatpush2.bf16.xpose.msra.mxu0 0
        %797 = vmatprep.mubr.bf16.mxu0 0
        %798 = vmatmul.mubr.bf16.gmra.mxu0 %v760
        %v799 = vpop.f32.mrf.mxu0
        %v800 = vadd.f32 0.0, %v799
        %v801 = vpop.f32.mrf.mxu0
        %v802 = vpop.f32.mrf.mxu0
        %v803 = vpop.f32.mrf.mxu0
        %804 = vdwg.mxu0
        %v805 = vmul.f32 %v800, 0.35355338
        %v806 = vadd.f32 %v805, %v522
        %v807 = vsel %vm527, %v806, -inf
        %808 = vmax.xlane.f32.xlu0 %v807
        %v809 = vpop.xlane.xlu0 %808
        %v810 = vsub.f32 %v806, %v809
        %v811 = vmul.f32 %v810, 1.442695
        %v812 = vpow.pop %v811
        %v813 = vsel %vm527, %v812, 0.0
        %814 = vadd.xlane.f32.xlu0 %v813
        %v815 = vpop.xlane.xlu0 %814
        %v816 = vrcp.pop %v815
        %v817 = vmul.f32 %v815, %v816
        %v818 = vsub.f32 2.0, %v817
        %v819 = vmul.f32 %v816, %v818
        %v820 = vmul.f32 %v812, %v819
        %v821 = vpack.c.bf16 %v820, %v820
        %822 = vrot.lane.b32.xlu0 %v523, 48
        %v823 = vpop.permute.xlu0 %822
        %v825 = vsel %vm527, %v821, 0
        %v828 = vsel %vm596, %v823, 0
        %830 = vmatprep.subr.bf16.mxu0 0
        %831 = vmatpush1.bf16.msra.mxu0 0
        %832 = vmatprep.subr.bf16.mxu0 0
        %833 = vmatpush1.bf16.msra.mxu0 0
        %834 = vmatprep.subr.bf16.mxu0 0
        %835 = vmatpush1.bf16.msra.mxu0 0
        %836 = vmatprep.subr.bf16.mxu0 0
        %837 = vmatpush1.bf16.msra.mxu0 0
        %838 = vmatprep.subr.bf16.mxu0 0
        %839 = vmatpush1.bf16.msra.mxu0 0
        %840 = vmatprep.subr.bf16.mxu0 0
        %841 = vmatpush1.bf16.msra.mxu0 0
        %842 = vmatprep.subr.bf16.mxu0 0
        %843 = vmatpush1.bf16.msra.mxu0 0
        %844 = vmatprep.subr.bf16.mxu0 0
        %845 = vmatpush1.bf16.msra.mxu0 %v828
        %846 = vmatprep.subr.bf16.mxu0 0
        %847 = vmatpush2.bf16.msra.mxu0 0
        %848 = vmatprep.subr.bf16.mxu0 0
        %849 = vmatpush2.bf16.msra.mxu0 0
        %850 = vmatprep.subr.bf16.mxu0 0
        %851 = vmatpush2.bf16.msra.mxu0 0
        %852 = vmatprep.subr.bf16.mxu0 0
        %853 = vmatpush2.bf16.msra.mxu0 0
        %854 = vmatprep.subr.bf16.mxu0 0
        %855 = vmatpush2.bf16.msra.mxu0 0
        %856 = vmatprep.subr.bf16.mxu0 0
        %857 = vmatpush2.bf16.msra.mxu0 0
        %858 = vmatprep.subr.bf16.mxu0 0
        %859 = vmatpush2.bf16.msra.mxu0 0
        %860 = vmatprep.subr.bf16.mxu0 0
        %861 = vmatpush2.bf16.msra.mxu0 0
        %862 = vmatprep.mubr.bf16.mxu0 0
        %863 = vmatmul.mubr.bf16.gmra.mxu0 %v825
        %v864 = vpop.f32.mrf.mxu0
        %v865 = vadd.f32 0.0, %v864
        %v866 = vpop.f32.mrf.mxu0
        %v867 = vpop.f32.mrf.mxu0
        %v868 = vpop.f32.mrf.mxu0
        %869 = vdwg.mxu0
        %870 = vrot.lane.b32.xlu0 %v523, 104
        %v871 = vpop.permute.xlu0 %870
        %872 = vrot.lane.b32.xlu0 %v523, 72
        %v873 = vpop.permute.xlu0 %872
        %v875 = vsel %vm527, %v871, 0
        %v878 = vsel %vm527, %v873, 0
        %880 = vmatprep.subr.bf16.mxu0 0
        %881 = vmatpush1.bf16.xpose.msra.mxu0 0
        %882 = vmatprep.subr.bf16.mxu0 0
        %883 = vmatpush1.bf16.xpose.msra.mxu0 0
        %884 = vmatprep.subr.bf16.mxu0 0
        %885 = vmatpush1.bf16.xpose.msra.mxu0 0
        %886 = vmatprep.subr.bf16.mxu0 0
        %887 = vmatpush1.bf16.xpose.msra.mxu0 0
        %888 = vmatprep.subr.bf16.mxu0 0
        %889 = vmatpush1.bf16.xpose.msra.mxu0 0
        %890 = vmatprep.subr.bf16.mxu0 0
        %891 = vmatpush1.bf16.xpose.msra.mxu0 0
        %892 = vmatprep.subr.bf16.mxu0 0
        %893 = vmatpush1.bf16.xpose.msra.mxu0 0
        %894 = vmatprep.subr.bf16.mxu0 0
        %895 = vmatpush1.bf16.xpose.msra.mxu0 %v878
        %896 = vmatprep.subr.bf16.mxu0 0
        %897 = vmatpush2.bf16.xpose.msra.mxu0 0
        %898 = vmatprep.subr.bf16.mxu0 0
        %899 = vmatpush2.bf16.xpose.msra.mxu0 0
        %900 = vmatprep.subr.bf16.mxu0 0
        %901 = vmatpush2.bf16.xpose.msra.mxu0 0
        %902 = vmatprep.subr.bf16.mxu0 0
        %903 = vmatpush2.bf16.xpose.msra.mxu0 0
        %904 = vmatprep.subr.bf16.mxu0 0
        %905 = vmatpush2.bf16.xpose.msra.mxu0 0
        %906 = vmatprep.subr.bf16.mxu0 0
        %907 = vmatpush2.bf16.xpose.msra.mxu0 0
        %908 = vmatprep.subr.bf16.mxu0 0
        %909 = vmatpush2.bf16.xpose.msra.mxu0 0
        %910 = vmatprep.subr.bf16.mxu0 0
        %911 = vmatpush2.bf16.xpose.msra.mxu0 0
        %912 = vmatprep.mubr.bf16.mxu0 0
        %913 = vmatmul.mubr.bf16.gmra.mxu0 %v875
        %v914 = vpop.f32.mrf.mxu0
        %v915 = vadd.f32 0.0, %v914
        %v916 = vpop.f32.mrf.mxu0
        %v917 = vpop.f32.mrf.mxu0
        %v918 = vpop.f32.mrf.mxu0
        %919 = vdwg.mxu0
        %v920 = vmul.f32 %v915, 0.35355338
        %v921 = vadd.f32 %v920, %v522
        %v922 = vsel %vm527, %v921, -inf
        %923 = vmax.xlane.f32.xlu0 %v922
        %v924 = vpop.xlane.xlu0 %923
        %v925 = vsub.f32 %v921, %v924
        %v926 = vmul.f32 %v925, 1.442695
        %v927 = vpow.pop %v926
        %v928 = vsel %vm527, %v927, 0.0
        %929 = vadd.xlane.f32.xlu0 %v928
        %v930 = vpop.xlane.xlu0 %929
        %v931 = vrcp.pop %v930
        %v932 = vmul.f32 %v930, %v931
        %v933 = vsub.f32 2.0, %v932
        %v934 = vmul.f32 %v931, %v933
        %v935 = vmul.f32 %v927, %v934
        %v936 = vpack.c.bf16 %v935, %v935
        %937 = vrot.lane.b32.xlu0 %v523, 40
        %v938 = vpop.permute.xlu0 %937
        %v940 = vsel %vm527, %v936, 0
        %v943 = vsel %vm596, %v938, 0
        %945 = vmatprep.subr.bf16.mxu0 0
        %946 = vmatpush1.bf16.msra.mxu0 0
        %947 = vmatprep.subr.bf16.mxu0 0
        %948 = vmatpush1.bf16.msra.mxu0 0
        %949 = vmatprep.subr.bf16.mxu0 0
        %950 = vmatpush1.bf16.msra.mxu0 0
        %951 = vmatprep.subr.bf16.mxu0 0
        %952 = vmatpush1.bf16.msra.mxu0 0
        %953 = vmatprep.subr.bf16.mxu0 0
        %954 = vmatpush1.bf16.msra.mxu0 0
        %955 = vmatprep.subr.bf16.mxu0 0
        %956 = vmatpush1.bf16.msra.mxu0 0
        %957 = vmatprep.subr.bf16.mxu0 0
        %958 = vmatpush1.bf16.msra.mxu0 0
        %959 = vmatprep.subr.bf16.mxu0 0
        %960 = vmatpush1.bf16.msra.mxu0 %v943
        %961 = vmatprep.subr.bf16.mxu0 0
        %962 = vmatpush2.bf16.msra.mxu0 0
        %963 = vmatprep.subr.bf16.mxu0 0
        %964 = vmatpush2.bf16.msra.mxu0 0
        %965 = vmatprep.subr.bf16.mxu0 0
        %966 = vmatpush2.bf16.msra.mxu0 0
        %967 = vmatprep.subr.bf16.mxu0 0
        %968 = vmatpush2.bf16.msra.mxu0 0
        %969 = vmatprep.subr.bf16.mxu0 0
        %970 = vmatpush2.bf16.msra.mxu0 0
        %971 = vmatprep.subr.bf16.mxu0 0
        %972 = vmatpush2.bf16.msra.mxu0 0
        %973 = vmatprep.subr.bf16.mxu0 0
        %974 = vmatpush2.bf16.msra.mxu0 0
        %975 = vmatprep.subr.bf16.mxu0 0
        %976 = vmatpush2.bf16.msra.mxu0 0
        %977 = vmatprep.mubr.bf16.mxu0 0
        %978 = vmatmul.mubr.bf16.gmra.mxu0 %v940
        %v979 = vpop.f32.mrf.mxu0
        %v980 = vadd.f32 0.0, %v979
        %v981 = vpop.f32.mrf.mxu0
        %v982 = vpop.f32.mrf.mxu0
        %v983 = vpop.f32.mrf.mxu0
        %984 = vdwg.mxu0
        %986 = vrot.lane.b32.xlu0 %v750, 8
        %v987 = vpop.permute.xlu0 %986
        %990 = vrot.lane.b32.xlu0 %v865, 16
        %v991 = vpop.permute.xlu0 %990
        %994 = vrot.lane.b32.xlu0 %v980, 24
        %v995 = vpop.permute.xlu0 %994
        %v997 = vsel %vm527, %v635, %v987
        %vm998 = vcmask 130048
        %v999 = vsel %vm998, %v997, %v991
        %vm1000 = vcmask 195584
        %v1001 = vsel %vm1000, %v999, %v995
        %v1002 = vpack.c.bf16 %v1001, %v1001
        %v1003 = vld [vmem:[%s4] sm:$0xf]
        %v1004 = vld [vmem:[%s4 + $0x4] sm:$0xf]
        %v1005 = vld [vmem:[%s4 + $0x8] sm:$0xf]
        %v1006 = vld [vmem:[%s4 + $0xc] sm:$0xf]
        %v1007 = vld [vmem:[%s5] sm:$0x1]
        %v1009 = vlaneseq
        %v1010 = vshrl.u32 %v1009, 7
        %v1011 = vsub.s32 0, %v1010
        %v1012 = vrot.slane %v1007, %v1011
        %v1018 = vunpack.c.l.b16 %v1003
        %v1019 = vunpack.c.l.b16 %v1004
        %v1020 = vunpack.c.l.b16 %v1005
        %v1021 = vunpack.c.l.b16 %v1006
        %v1022 = vpack.c.b16 %v1019, %v1018
        %v1023 = vpack.c.b16 %v1021, %v1020
        %vm1026 = vcmask 261120
        %v1028 = vsel %vm1026, %v1002, 0
        %1030 = vmatprep.subr.bf16.mxu0 0
        %1031 = vmatpush1.bf16.msra.mxu0 0
        %1032 = vmatprep.subr.bf16.mxu0 0
        %1033 = vmatpush1.bf16.msra.mxu0 0
        %1034 = vmatprep.subr.bf16.mxu0 0
        %1035 = vmatpush1.bf16.msra.mxu0 0
        %1036 = vmatprep.subr.bf16.mxu0 0
        %1037 = vmatpush1.bf16.msra.mxu0 0
        %1038 = vmatprep.subr.bf16.mxu0 0
        %1039 = vmatpush1.bf16.msra.mxu0 0
        %1040 = vmatprep.subr.bf16.mxu0 0
        %1041 = vmatpush1.bf16.msra.mxu0 0
        %1042 = vmatprep.subr.bf16.mxu0 0
        %1043 = vmatpush1.bf16.msra.mxu0 %v1023
        %1044 = vmatprep.subr.bf16.mxu0 0
        %1045 = vmatpush1.bf16.msra.mxu0 %v1022
        %1046 = vmatprep.subr.bf16.mxu0 0
        %1047 = vmatpush2.bf16.msra.mxu0 0
        %1048 = vmatprep.subr.bf16.mxu0 0
        %1049 = vmatpush2.bf16.msra.mxu0 0
        %1050 = vmatprep.subr.bf16.mxu0 0
        %1051 = vmatpush2.bf16.msra.mxu0 0
        %1052 = vmatprep.subr.bf16.mxu0 0
        %1053 = vmatpush2.bf16.msra.mxu0 0
        %1054 = vmatprep.subr.bf16.mxu0 0
        %1055 = vmatpush2.bf16.msra.mxu0 0
        %1056 = vmatprep.subr.bf16.mxu0 0
        %1057 = vmatpush2.bf16.msra.mxu0 0
        %1058 = vmatprep.subr.bf16.mxu0 0
        %1059 = vmatpush2.bf16.msra.mxu0 0
        %1060 = vmatprep.subr.bf16.mxu0 0
        %1061 = vmatpush2.bf16.msra.mxu0 0
        %1062 = vmatprep.mubr.bf16.mxu0 0
        %1063 = vmatmul.mubr.bf16.gmra.mxu0 %v1028
        %v1064 = vpop.f32.mrf.mxu0
        %v1065 = vadd.f32 %v1012, %v1064
        %v1066 = vpop.f32.mrf.mxu0
        %v1067 = vpop.f32.mrf.mxu0
        %v1068 = vpop.f32.mrf.mxu0
        %1069 = vdwg.mxu0
        %v1070 = vadd.f32 %v408, %v1065
        %v1071 = vmul.f32 %v1070, %v407
        %1072 = vadd.xlane.f32.xlu0 %v1071
        %v1073 = vpop.xlane.xlu0 %1072
        %v1074 = vmul.f32 %v1073, 0.03125
        %v1075 = vmul.f32 %v1071, %v1071
        %1076 = vadd.xlane.f32.xlu0 %v1075
        %v1077 = vpop.xlane.xlu0 %1076
        %v1078 = vmul.f32 %v1077, 0.03125
        %v1079 = vmul.f32 %v1074, %v1074
        %v1080 = vsub.f32 %v1078, %v1079
        %v1081 = vmax.f32 %v1080, 0.0
        %v1082 = vsub.f32 %v1071, %v1074
        %v1083 = vadd.f32 %v1081, 1e-05
        %v1084 = vrsqrt.pop %v1083
        %v1085 = vmul.f32 %v1082, %v1084
        %v1086 = vmul.f32 %v1085, %v407
        %v1087 = vpack.c.bf16 %v1086, %v1086
        %v1088 = vld [vmem:[#allocation2] sm:$0xff]
        %v1089 = vld [vmem:[#allocation2 + $0x8] sm:$0xff]
        %v1090 = vld [vmem:[#allocation2 + $0x10] sm:$0xff]
        %v1091 = vld [vmem:[#allocation2 + $0x18] sm:$0xff]
        %v1092 = vld [vmem:[#allocation2 + $0x20] sm:$0xff]
        %v1093 = vld [vmem:[#allocation2 + $0x28] sm:$0xff]
        %v1094 = vld [vmem:[#allocation2 + $0x30] sm:$0xff]
        %v1095 = vld [vmem:[#allocation2 + $0x38] sm:$0xff]
        %v1096 = vld [vmem:[#allocation2 + $0x40] sm:$0xff]
        %v1097 = vld [vmem:[#allocation2 + $0x48] sm:$0xff]
        %v1098 = vld [vmem:[#allocation2 + $0x50] sm:$0xff]
        %v1099 = vld [vmem:[#allocation2 + $0x58] sm:$0xff]
        %v1100 = vld [vmem:[#allocation2 + $0x60] sm:$0xff]
        %v1101 = vld [vmem:[#allocation2 + $0x68] sm:$0xff]
        %v1102 = vld [vmem:[#allocation2 + $0x70] sm:$0xff]
        %v1103 = vld [vmem:[#allocation2 + $0x78] sm:$0xff]
        %v1104 = vld [vmem:[#allocation2 + $0x80] sm:$0xff]
        %v1105 = vld [vmem:[#allocation2 + $0x88] sm:$0xff]
        %v1106 = vld [vmem:[#allocation2 + $0x90] sm:$0xff]
        %v1107 = vld [vmem:[#allocation2 + $0x98] sm:$0xff]
        %v1108 = vld [vmem:[#allocation2 + $0xa0] sm:$0xff]
        %v1109 = vld [vmem:[#allocation2 + $0xa8] sm:$0xff]
        %v1110 = vld [vmem:[#allocation2 + $0xb0] sm:$0xff]
        %v1111 = vld [vmem:[#allocation2 + $0xb8] sm:$0xff]
        %v1112 = vld [vmem:[#allocation2 + $0xc0] sm:$0xff]
        %v1113 = vld [vmem:[#allocation2 + $0xc8] sm:$0xff]
        %v1114 = vld [vmem:[#allocation2 + $0xd0] sm:$0xff]
        %v1115 = vld [vmem:[#allocation2 + $0xd8] sm:$0xff]
        %v1116 = vld [vmem:[#allocation2 + $0xe0] sm:$0xff]
        %v1117 = vld [vmem:[#allocation2 + $0xe8] sm:$0xff]
        %v1118 = vld [vmem:[#allocation2 + $0xf0] sm:$0xff]
        %v1119 = vld [vmem:[#allocation2 + $0xf8] sm:$0xff]
        %v1120 = vld [vmem:[#allocation2 + $0x100] sm:$0xff]
        %v1121 = vld [vmem:[#allocation2 + $0x108] sm:$0xff]
        %v1122 = vld [vmem:[#allocation2 + $0x110] sm:$0xff]
        %v1123 = vld [vmem:[#allocation2 + $0x118] sm:$0xff]
        %v1124 = vld [vmem:[#allocation2 + $0x120] sm:$0xff]
        %v1125 = vld [vmem:[#allocation2 + $0x128] sm:$0xff]
        %v1126 = vld [vmem:[#allocation2 + $0x130] sm:$0xff]
        %v1127 = vld [vmem:[#allocation2 + $0x138] sm:$0xff]
        %v1128 = vld [vmem:[#allocation2 + $0x140] sm:$0xff]
        %v1129 = vld [vmem:[#allocation2 + $0x148] sm:$0xff]
        %v1130 = vld [vmem:[#allocation2 + $0x150] sm:$0xff]
        %v1131 = vld [vmem:[#allocation2 + $0x158] sm:$0xff]
        %v1132 = vld [vmem:[#allocation2 + $0x160] sm:$0xff]
        %v1133 = vld [vmem:[#allocation2 + $0x168] sm:$0xff]
        %v1134 = vld [vmem:[#allocation2 + $0x170] sm:$0xff]
        %v1135 = vld [vmem:[#allocation2 + $0x178] sm:$0xff]
        %v1136 = vld [vmem:[#allocation2 + $0x180] sm:$0xff]
        %v1137 = vld [vmem:[#allocation2 + $0x188] sm:$0xff]
        %v1138 = vld [vmem:[#allocation2 + $0x190] sm:$0xff]
        %v1139 = vld [vmem:[#allocation2 + $0x198] sm:$0xff]
        %v1140 = vld [vmem:[#allocation2 + $0x1a0] sm:$0xff]
        %v1141 = vld [vmem:[#allocation2 + $0x1a8] sm:$0xff]
        %v1142 = vld [vmem:[#allocation2 + $0x1b0] sm:$0xff]
        %v1143 = vld [vmem:[#allocation2 + $0x1b8] sm:$0xff]
        %v1144 = vld [vmem:[#allocation2 + $0x1c0] sm:$0xff]
        %v1145 = vld [vmem:[#allocation2 + $0x1c8] sm:$0xff]
        %v1146 = vld [vmem:[#allocation2 + $0x1d0] sm:$0xff]
        %v1147 = vld [vmem:[#allocation2 + $0x1d8] sm:$0xff]
        %v1148 = vld [vmem:[#allocation2 + $0x1e0] sm:$0xff]
        %v1149 = vld [vmem:[#allocation2 + $0x1e8] sm:$0xff]
        %v1150 = vld [vmem:[#allocation2 + $0x1f0] sm:$0xff]
        %v1151 = vld [vmem:[#allocation2 + $0x1f8] sm:$0xff]
        %v1152 = vld [vmem:[#allocation2 + $0x200] sm:$0xff]
        %v1153 = vld [vmem:[#allocation2 + $0x208] sm:$0xff]
        %v1154 = vld [vmem:[#allocation2 + $0x210] sm:$0xff]
        %v1155 = vld [vmem:[#allocation2 + $0x218] sm:$0xff]
        %v1156 = vld [vmem:[#allocation2 + $0x220] sm:$0xff]
        %v1157 = vld [vmem:[#allocation2 + $0x228] sm:$0xff]
        %v1158 = vld [vmem:[#allocation2 + $0x230] sm:$0xff]
        %v1159 = vld [vmem:[#allocation2 + $0x238] sm:$0xff]
        %v1160 = vld [vmem:[#allocation2 + $0x240] sm:$0xff]
        %v1161 = vld [vmem:[#allocation2 + $0x248] sm:$0xff]
        %v1162 = vld [vmem:[#allocation2 + $0x250] sm:$0xff]
        %v1163 = vld [vmem:[#allocation2 + $0x258] sm:$0xff]
        %v1164 = vld [vmem:[#allocation2 + $0x260] sm:$0xff]
        %v1165 = vld [vmem:[#allocation2 + $0x268] sm:$0xff]
        %v1166 = vld [vmem:[#allocation2 + $0x270] sm:$0xff]
        %v1167 = vld [vmem:[#allocation2 + $0x278] sm:$0xff]
        %v1168 = vld [vmem:[#allocation2 + $0x280] sm:$0xff]
        %v1169 = vld [vmem:[#allocation2 + $0x288] sm:$0xff]
        %v1170 = vld [vmem:[#allocation2 + $0x290] sm:$0xff]
        %v1171 = vld [vmem:[#allocation2 + $0x298] sm:$0xff]
        %v1172 = vld [vmem:[#allocation2 + $0x2a0] sm:$0xff]
        %v1173 = vld [vmem:[#allocation2 + $0x2a8] sm:$0xff]
        %v1174 = vld [vmem:[#allocation2 + $0x2b0] sm:$0xff]
        %v1175 = vld [vmem:[#allocation2 + $0x2b8] sm:$0xff]
        %v1176 = vld [vmem:[#allocation2 + $0x2c0] sm:$0xff]
        %v1177 = vld [vmem:[#allocation2 + $0x2c8] sm:$0xff]
        %v1178 = vld [vmem:[#allocation2 + $0x2d0] sm:$0xff]
        %v1179 = vld [vmem:[#allocation2 + $0x2d8] sm:$0xff]
        %v1180 = vld [vmem:[#allocation2 + $0x2e0] sm:$0xff]
        %v1181 = vld [vmem:[#allocation2 + $0x2e8] sm:$0xff]
        %v1182 = vld [vmem:[#allocation2 + $0x2f0] sm:$0xff]
        %v1183 = vld [vmem:[#allocation2 + $0x2f8] sm:$0xff]
        %v1184 = vld [vmem:[#allocation2 + $0x300] sm:$0xff]
        %v1185 = vld [vmem:[#allocation2 + $0x308] sm:$0xff]
        %v1186 = vld [vmem:[#allocation2 + $0x310] sm:$0xff]
        %v1187 = vld [vmem:[#allocation2 + $0x318] sm:$0xff]
        %v1188 = vld [vmem:[#allocation2 + $0x320] sm:$0xff]
        %v1189 = vld [vmem:[#allocation2 + $0x328] sm:$0xff]
        %v1190 = vld [vmem:[#allocation2 + $0x330] sm:$0xff]
        %v1191 = vld [vmem:[#allocation2 + $0x338] sm:$0xff]
        %v1192 = vld [vmem:[#allocation2 + $0x340] sm:$0xff]
        %v1193 = vld [vmem:[#allocation2 + $0x348] sm:$0xff]
        %v1194 = vld [vmem:[#allocation2 + $0x350] sm:$0xff]
        %v1195 = vld [vmem:[#allocation2 + $0x358] sm:$0xff]
        %v1196 = vld [vmem:[#allocation2 + $0x360] sm:$0xff]
        %v1197 = vld [vmem:[#allocation2 + $0x368] sm:$0xff]
        %v1198 = vld [vmem:[#allocation2 + $0x370] sm:$0xff]
        %v1199 = vld [vmem:[#allocation2 + $0x378] sm:$0xff]
        %v1200 = vld [vmem:[#allocation2 + $0x380] sm:$0xff]
        %v1201 = vld [vmem:[#allocation2 + $0x388] sm:$0xff]
        %v1202 = vld [vmem:[#allocation2 + $0x390] sm:$0xff]
        %v1203 = vld [vmem:[#allocation2 + $0x398] sm:$0xff]
        %v1204 = vld [vmem:[#allocation2 + $0x3a0] sm:$0xff]
        %v1205 = vld [vmem:[#allocation2 + $0x3a8] sm:$0xff]
        %v1206 = vld [vmem:[#allocation2 + $0x3b0] sm:$0xff]
        %v1207 = vld [vmem:[#allocation2 + $0x3b8] sm:$0xff]
        %v1208 = vld [vmem:[#allocation2 + $0x3c0] sm:$0xff]
        %v1209 = vld [vmem:[#allocation2 + $0x3c8] sm:$0xff]
        %v1210 = vld [vmem:[#allocation2 + $0x3d0] sm:$0xff]
        %v1211 = vld [vmem:[#allocation2 + $0x3d8] sm:$0xff]
        %v1212 = vld [vmem:[#allocation2 + $0x3e0] sm:$0xff]
        %v1213 = vld [vmem:[#allocation2 + $0x3e8] sm:$0xff]
        %v1214 = vld [vmem:[#allocation2 + $0x3f0] sm:$0xff]
        %v1215 = vld [vmem:[#allocation2 + $0x3f8] sm:$0xff]
        %v1216 = vld [vmem:[%s7] sm:$0xff]
        %v1217 = vld [vmem:[%s7 + $0x8] sm:$0xff]
        %v1220 = vlaneseq
        %v1221 = vshrl.u32 %v1220, 7
        %v1222 = vsub.s32 0, %v1221
        %v1223 = vrot.slane %v1216, %v1222
        %v1224 = vlaneseq
        %v1225 = vshrl.u32 %v1224, 7
        %v1226 = vsub.s32 1, %v1225
        %v1227 = vrot.slane %v1216, %v1226
        %v1228 = vlaneseq
        %v1229 = vshrl.u32 %v1228, 7
        %v1230 = vsub.s32 2, %v1229
        %v1231 = vrot.slane %v1216, %v1230
        %v1232 = vlaneseq
        %v1233 = vshrl.u32 %v1232, 7
        %v1234 = vsub.s32 3, %v1233
        %v1235 = vrot.slane %v1216, %v1234
        %v1236 = vlaneseq
        %v1237 = vshrl.u32 %v1236, 7
        %v1238 = vsub.s32 4, %v1237
        %v1239 = vrot.slane %v1216, %v1238
        %v1240 = vlaneseq
        %v1241 = vshrl.u32 %v1240, 7
        %v1242 = vsub.s32 5, %v1241
        %v1243 = vrot.slane %v1216, %v1242
        %v1244 = vlaneseq
        %v1245 = vshrl.u32 %v1244, 7
        %v1246 = vsub.s32 6, %v1245
        %v1247 = vrot.slane %v1216, %v1246
        %v1248 = vlaneseq
        %v1249 = vshrl.u32 %v1248, 7
        %v1250 = vsub.s32 7, %v1249
        %v1251 = vrot.slane %v1216, %v1250
        %v1252 = vlaneseq
        %v1253 = vshrl.u32 %v1252, 7
        %v1254 = vsub.s32 0, %v1253
        %v1255 = vrot.slane %v1217, %v1254
        %v1256 = vlaneseq
        %v1257 = vshrl.u32 %v1256, 7
        %v1258 = vsub.s32 1, %v1257
        %v1259 = vrot.slane %v1217, %v1258
        %v1260 = vlaneseq
        %v1261 = vshrl.u32 %v1260, 7
        %v1262 = vsub.s32 2, %v1261
        %v1263 = vrot.slane %v1217, %v1262
        %v1264 = vlaneseq
        %v1265 = vshrl.u32 %v1264, 7
        %v1266 = vsub.s32 3, %v1265
        %v1267 = vrot.slane %v1217, %v1266
        %v1268 = vlaneseq
        %v1269 = vshrl.u32 %v1268, 7
        %v1270 = vsub.s32 4, %v1269
        %v1271 = vrot.slane %v1217, %v1270
        %v1272 = vlaneseq
        %v1273 = vshrl.u32 %v1272, 7
        %v1274 = vsub.s32 5, %v1273
        %v1275 = vrot.slane %v1217, %v1274
        %v1276 = vlaneseq
        %v1277 = vshrl.u32 %v1276, 7
        %v1278 = vsub.s32 6, %v1277
        %v1279 = vrot.slane %v1217, %v1278
        %v1280 = vlaneseq
        %v1281 = vshrl.u32 %v1280, 7
        %v1282 = vsub.s32 7, %v1281
        %v1283 = vrot.slane %v1217, %v1282
        %v1428 = vunpack.c.l.b16 %v1088
        %v1429 = vunpack.c.h.b16 %v1088
        %v1430 = vunpack.c.l.b16 %v1089
        %v1431 = vunpack.c.h.b16 %v1089
        %v1432 = vunpack.c.l.b16 %v1090
        %v1433 = vunpack.c.h.b16 %v1090
        %v1434 = vunpack.c.l.b16 %v1091
        %v1435 = vunpack.c.h.b16 %v1091
        %v1436 = vunpack.c.l.b16 %v1092
        %v1437 = vunpack.c.h.b16 %v1092
        %v1438 = vunpack.c.l.b16 %v1093
        %v1439 = vunpack.c.h.b16 %v1093
        %v1440 = vunpack.c.l.b16 %v1094
        %v1441 = vunpack.c.h.b16 %v1094
        %v1442 = vunpack.c.l.b16 %v1095
        %v1443 = vunpack.c.h.b16 %v1095
        %v1444 = vunpack.c.l.b16 %v1096
        %v1445 = vunpack.c.h.b16 %v1096
        %v1446 = vunpack.c.l.b16 %v1097
        %v1447 = vunpack.c.h.b16 %v1097
        %v1448 = vunpack.c.l.b16 %v1098
        %v1449 = vunpack.c.h.b16 %v1098
        %v1450 = vunpack.c.l.b16 %v1099
        %v1451 = vunpack.c.h.b16 %v1099
        %v1452 = vunpack.c.l.b16 %v1100
        %v1453 = vunpack.c.h.b16 %v1100
        %v1454 = vunpack.c.l.b16 %v1101
        %v1455 = vunpack.c.h.b16 %v1101
        %v1456 = vunpack.c.l.b16 %v1102
        %v1457 = vunpack.c.h.b16 %v1102
        %v1458 = vunpack.c.l.b16 %v1103
        %v1459 = vunpack.c.h.b16 %v1103
        %v1460 = vunpack.c.l.b16 %v1104
        %v1461 = vunpack.c.h.b16 %v1104
        %v1462 = vunpack.c.l.b16 %v1105
        %v1463 = vunpack.c.h.b16 %v1105
        %v1464 = vunpack.c.l.b16 %v1106
        %v1465 = vunpack.c.h.b16 %v1106
        %v1466 = vunpack.c.l.b16 %v1107
        %v1467 = vunpack.c.h.b16 %v1107
        %v1468 = vunpack.c.l.b16 %v1108
        %v1469 = vunpack.c.h.b16 %v1108
        %v1470 = vunpack.c.l.b16 %v1109
        %v1471 = vunpack.c.h.b16 %v1109
        %v1472 = vunpack.c.l.b16 %v1110
        %v1473 = vunpack.c.h.b16 %v1110
        %v1474 = vunpack.c.l.b16 %v1111
        %v1475 = vunpack.c.h.b16 %v1111
        %v1476 = vunpack.c.l.b16 %v1112
        %v1477 = vunpack.c.h.b16 %v1112
        %v1478 = vunpack.c.l.b16 %v1113
        %v1479 = vunpack.c.h.b16 %v1113
        %v1480 = vunpack.c.l.b16 %v1114
        %v1481 = vunpack.c.h.b16 %v1114
        %v1482 = vunpack.c.l.b16 %v1115
        %v1483 = vunpack.c.h.b16 %v1115
        %v1484 = vunpack.c.l.b16 %v1116
        %v1485 = vunpack.c.h.b16 %v1116
        %v1486 = vunpack.c.l.b16 %v1117
        %v1487 = vunpack.c.h.b16 %v1117
        %v1488 = vunpack.c.l.b16 %v1118
        %v1489 = vunpack.c.h.b16 %v1118
        %v1490 = vunpack.c.l.b16 %v1119
        %v1491 = vunpack.c.h.b16 %v1119
        %v1492 = vunpack.c.l.b16 %v1120
        %v1493 = vunpack.c.h.b16 %v1120
        %v1494 = vunpack.c.l.b16 %v1121
        %v1495 = vunpack.c.h.b16 %v1121
        %v1496 = vunpack.c.l.b16 %v1122
        %v1497 = vunpack.c.h.b16 %v1122
        %v1498 = vunpack.c.l.b16 %v1123
        %v1499 = vunpack.c.h.b16 %v1123
        %v1500 = vunpack.c.l.b16 %v1124
        %v1501 = vunpack.c.h.b16 %v1124
        %v1502 = vunpack.c.l.b16 %v1125
        %v1503 = vunpack.c.h.b16 %v1125
        %v1504 = vunpack.c.l.b16 %v1126
        %v1505 = vunpack.c.h.b16 %v1126
        %v1506 = vunpack.c.l.b16 %v1127
        %v1507 = vunpack.c.h.b16 %v1127
        %v1508 = vunpack.c.l.b16 %v1128
        %v1509 = vunpack.c.h.b16 %v1128
        %v1510 = vunpack.c.l.b16 %v1129
        %v1511 = vunpack.c.h.b16 %v1129
        %v1512 = vunpack.c.l.b16 %v1130
        %v1513 = vunpack.c.h.b16 %v1130
        %v1514 = vunpack.c.l.b16 %v1131
        %v1515 = vunpack.c.h.b16 %v1131
        %v1516 = vunpack.c.l.b16 %v1132
        %v1517 = vunpack.c.h.b16 %v1132
        %v1518 = vunpack.c.l.b16 %v1133
        %v1519 = vunpack.c.h.b16 %v1133
        %v1520 = vunpack.c.l.b16 %v1134
        %v1521 = vunpack.c.h.b16 %v1134
        %v1522 = vunpack.c.l.b16 %v1135
        %v1523 = vunpack.c.h.b16 %v1135
        %v1524 = vunpack.c.l.b16 %v1136
        %v1525 = vunpack.c.h.b16 %v1136
        %v1526 = vunpack.c.l.b16 %v1137
        %v1527 = vunpack.c.h.b16 %v1137
        %v1528 = vunpack.c.l.b16 %v1138
        %v1529 = vunpack.c.h.b16 %v1138
        %v1530 = vunpack.c.l.b16 %v1139
        %v1531 = vunpack.c.h.b16 %v1139
        %v1532 = vunpack.c.l.b16 %v1140
        %v1533 = vunpack.c.h.b16 %v1140
        %v1534 = vunpack.c.l.b16 %v1141
        %v1535 = vunpack.c.h.b16 %v1141
        %v1536 = vunpack.c.l.b16 %v1142
        %v1537 = vunpack.c.h.b16 %v1142
        %v1538 = vunpack.c.l.b16 %v1143
        %v1539 = vunpack.c.h.b16 %v1143
        %v1540 = vunpack.c.l.b16 %v1144
        %v1541 = vunpack.c.h.b16 %v1144
        %v1542 = vunpack.c.l.b16 %v1145
        %v1543 = vunpack.c.h.b16 %v1145
        %v1544 = vunpack.c.l.b16 %v1146
        %v1545 = vunpack.c.h.b16 %v1146
        %v1546 = vunpack.c.l.b16 %v1147
        %v1547 = vunpack.c.h.b16 %v1147
        %v1548 = vunpack.c.l.b16 %v1148
        %v1549 = vunpack.c.h.b16 %v1148
        %v1550 = vunpack.c.l.b16 %v1149
        %v1551 = vunpack.c.h.b16 %v1149
        %v1552 = vunpack.c.l.b16 %v1150
        %v1553 = vunpack.c.h.b16 %v1150
        %v1554 = vunpack.c.l.b16 %v1151
        %v1555 = vunpack.c.h.b16 %v1151
        %v1556 = vunpack.c.l.b16 %v1152
        %v1557 = vunpack.c.h.b16 %v1152
        %v1558 = vunpack.c.l.b16 %v1153
        %v1559 = vunpack.c.h.b16 %v1153
        %v1560 = vunpack.c.l.b16 %v1154
        %v1561 = vunpack.c.h.b16 %v1154
        %v1562 = vunpack.c.l.b16 %v1155
        %v1563 = vunpack.c.h.b16 %v1155
        %v1564 = vunpack.c.l.b16 %v1156
        %v1565 = vunpack.c.h.b16 %v1156
        %v1566 = vunpack.c.l.b16 %v1157
        %v1567 = vunpack.c.h.b16 %v1157
        %v1568 = vunpack.c.l.b16 %v1158
        %v1569 = vunpack.c.h.b16 %v1158
        %v1570 = vunpack.c.l.b16 %v1159
        %v1571 = vunpack.c.h.b16 %v1159
        %v1572 = vunpack.c.l.b16 %v1160
        %v1573 = vunpack.c.h.b16 %v1160
        %v1574 = vunpack.c.l.b16 %v1161
        %v1575 = vunpack.c.h.b16 %v1161
        %v1576 = vunpack.c.l.b16 %v1162
        %v1577 = vunpack.c.h.b16 %v1162
        %v1578 = vunpack.c.l.b16 %v1163
        %v1579 = vunpack.c.h.b16 %v1163
        %v1580 = vunpack.c.l.b16 %v1164
        %v1581 = vunpack.c.h.b16 %v1164
        %v1582 = vunpack.c.l.b16 %v1165
        %v1583 = vunpack.c.h.b16 %v1165
        %v1584 = vunpack.c.l.b16 %v1166
        %v1585 = vunpack.c.h.b16 %v1166
        %v1586 = vunpack.c.l.b16 %v1167
        %v1587 = vunpack.c.h.b16 %v1167
        %v1588 = vunpack.c.l.b16 %v1168
        %v1589 = vunpack.c.h.b16 %v1168
        %v1590 = vunpack.c.l.b16 %v1169
        %v1591 = vunpack.c.h.b16 %v1169
        %v1592 = vunpack.c.l.b16 %v1170
        %v1593 = vunpack.c.h.b16 %v1170
        %v1594 = vunpack.c.l.b16 %v1171
        %v1595 = vunpack.c.h.b16 %v1171
        %v1596 = vunpack.c.l.b16 %v1172
        %v1597 = vunpack.c.h.b16 %v1172
        %v1598 = vunpack.c.l.b16 %v1173
        %v1599 = vunpack.c.h.b16 %v1173
        %v1600 = vunpack.c.l.b16 %v1174
        %v1601 = vunpack.c.h.b16 %v1174
        %v1602 = vunpack.c.l.b16 %v1175
        %v1603 = vunpack.c.h.b16 %v1175
        %v1604 = vunpack.c.l.b16 %v1176
        %v1605 = vunpack.c.h.b16 %v1176
        %v1606 = vunpack.c.l.b16 %v1177
        %v1607 = vunpack.c.h.b16 %v1177
        %v1608 = vunpack.c.l.b16 %v1178
        %v1609 = vunpack.c.h.b16 %v1178
        %v1610 = vunpack.c.l.b16 %v1179
        %v1611 = vunpack.c.h.b16 %v1179
        %v1612 = vunpack.c.l.b16 %v1180
        %v1613 = vunpack.c.h.b16 %v1180
        %v1614 = vunpack.c.l.b16 %v1181
        %v1615 = vunpack.c.h.b16 %v1181
        %v1616 = vunpack.c.l.b16 %v1182
        %v1617 = vunpack.c.h.b16 %v1182
        %v1618 = vunpack.c.l.b16 %v1183
        %v1619 = vunpack.c.h.b16 %v1183
        %v1620 = vunpack.c.l.b16 %v1184
        %v1621 = vunpack.c.h.b16 %v1184
        %v1622 = vunpack.c.l.b16 %v1185
        %v1623 = vunpack.c.h.b16 %v1185
        %v1624 = vunpack.c.l.b16 %v1186
        %v1625 = vunpack.c.h.b16 %v1186
        %v1626 = vunpack.c.l.b16 %v1187
        %v1627 = vunpack.c.h.b16 %v1187
        %v1628 = vunpack.c.l.b16 %v1188
        %v1629 = vunpack.c.h.b16 %v1188
        %v1630 = vunpack.c.l.b16 %v1189
        %v1631 = vunpack.c.h.b16 %v1189
        %v1632 = vunpack.c.l.b16 %v1190
        %v1633 = vunpack.c.h.b16 %v1190
        %v1634 = vunpack.c.l.b16 %v1191
        %v1635 = vunpack.c.h.b16 %v1191
        %v1636 = vunpack.c.l.b16 %v1192
        %v1637 = vunpack.c.h.b16 %v1192
        %v1638 = vunpack.c.l.b16 %v1193
        %v1639 = vunpack.c.h.b16 %v1193
        %v1640 = vunpack.c.l.b16 %v1194
        %v1641 = vunpack.c.h.b16 %v1194
        %v1642 = vunpack.c.l.b16 %v1195
        %v1643 = vunpack.c.h.b16 %v1195
        %v1644 = vunpack.c.l.b16 %v1196
        %v1645 = vunpack.c.h.b16 %v1196
        %v1646 = vunpack.c.l.b16 %v1197
        %v1647 = vunpack.c.h.b16 %v1197
        %v1648 = vunpack.c.l.b16 %v1198
        %v1649 = vunpack.c.h.b16 %v1198
        %v1650 = vunpack.c.l.b16 %v1199
        %v1651 = vunpack.c.h.b16 %v1199
        %v1652 = vunpack.c.l.b16 %v1200
        %v1653 = vunpack.c.h.b16 %v1200
        %v1654 = vunpack.c.l.b16 %v1201
        %v1655 = vunpack.c.h.b16 %v1201
        %v1656 = vunpack.c.l.b16 %v1202
        %v1657 = vunpack.c.h.b16 %v1202
        %v1658 = vunpack.c.l.b16 %v1203
        %v1659 = vunpack.c.h.b16 %v1203
        %v1660 = vunpack.c.l.b16 %v1204
        %v1661 = vunpack.c.h.b16 %v1204
        %v1662 = vunpack.c.l.b16 %v1205
        %v1663 = vunpack.c.h.b16 %v1205
        %v1664 = vunpack.c.l.b16 %v1206
        %v1665 = vunpack.c.h.b16 %v1206
        %v1666 = vunpack.c.l.b16 %v1207
        %v1667 = vunpack.c.h.b16 %v1207
        %v1668 = vunpack.c.l.b16 %v1208
        %v1669 = vunpack.c.h.b16 %v1208
        %v1670 = vunpack.c.l.b16 %v1209
        %v1671 = vunpack.c.h.b16 %v1209
        %v1672 = vunpack.c.l.b16 %v1210
        %v1673 = vunpack.c.h.b16 %v1210
        %v1674 = vunpack.c.l.b16 %v1211
        %v1675 = vunpack.c.h.b16 %v1211
        %v1676 = vunpack.c.l.b16 %v1212
        %v1677 = vunpack.c.h.b16 %v1212
        %v1678 = vunpack.c.l.b16 %v1213
        %v1679 = vunpack.c.h.b16 %v1213
        %v1680 = vunpack.c.l.b16 %v1214
        %v1681 = vunpack.c.h.b16 %v1214
        %v1682 = vunpack.c.l.b16 %v1215
        %v1683 = vunpack.c.h.b16 %v1215
        %v1684 = vpack.c.b16 %v1444, %v1428
        %v1685 = vpack.c.b16 %v1445, %v1429
        %v1686 = vpack.c.b16 %v1446, %v1430
        %v1687 = vpack.c.b16 %v1447, %v1431
        %v1688 = vpack.c.b16 %v1448, %v1432
        %v1689 = vpack.c.b16 %v1449, %v1433
        %v1690 = vpack.c.b16 %v1450, %v1434
        %v1691 = vpack.c.b16 %v1451, %v1435
        %v1692 = vpack.c.b16 %v1452, %v1436
        %v1693 = vpack.c.b16 %v1453, %v1437
        %v1694 = vpack.c.b16 %v1454, %v1438
        %v1695 = vpack.c.b16 %v1455, %v1439
        %v1696 = vpack.c.b16 %v1456, %v1440
        %v1697 = vpack.c.b16 %v1457, %v1441
        %v1698 = vpack.c.b16 %v1458, %v1442
        %v1699 = vpack.c.b16 %v1459, %v1443
        %v1700 = vpack.c.b16 %v1476, %v1460
        %v1701 = vpack.c.b16 %v1477, %v1461
        %v1702 = vpack.c.b16 %v1478, %v1462
        %v1703 = vpack.c.b16 %v1479, %v1463
        %v1704 = vpack.c.b16 %v1480, %v1464
        %v1705 = vpack.c.b16 %v1481, %v1465
        %v1706 = vpack.c.b16 %v1482, %v1466
        %v1707 = vpack.c.b16 %v1483, %v1467
        %v1708 = vpack.c.b16 %v1484, %v1468
        %v1709 = vpack.c.b16 %v1485, %v1469
        %v1710 = vpack.c.b16 %v1486, %v1470
        %v1711 = vpack.c.b16 %v1487, %v1471
        %v1712 = vpack.c.b16 %v1488, %v1472
        %v1713 = vpack.c.b16 %v1489, %v1473
        %v1714 = vpack.c.b16 %v1490, %v1474
        %v1715 = vpack.c.b16 %v1491, %v1475
        %v1716 = vpack.c.b16 %v1508, %v1492
        %v1717 = vpack.c.b16 %v1509, %v1493
        %v1718 = vpack.c.b16 %v1510, %v1494
        %v1719 = vpack.c.b16 %v1511, %v1495
        %v1720 = vpack.c.b16 %v1512, %v1496
        %v1721 = vpack.c.b16 %v1513, %v1497
        %v1722 = vpack.c.b16 %v1514, %v1498
        %v1723 = vpack.c.b16 %v1515, %v1499
        %v1724 = vpack.c.b16 %v1516, %v1500
        %v1725 = vpack.c.b16 %v1517, %v1501
        %v1726 = vpack.c.b16 %v1518, %v1502
        %v1727 = vpack.c.b16 %v1519, %v1503
        %v1728 = vpack.c.b16 %v1520, %v1504
        %v1729 = vpack.c.b16 %v1521, %v1505
        %v1730 = vpack.c.b16 %v1522, %v1506
        %v1731 = vpack.c.b16 %v1523, %v1507
        %v1732 = vpack.c.b16 %v1540, %v1524
        %v1733 = vpack.c.b16 %v1541, %v1525
        %v1734 = vpack.c.b16 %v1542, %v1526
        %v1735 = vpack.c.b16 %v1543, %v1527
        %v1736 = vpack.c.b16 %v1544, %v1528
        %v1737 = vpack.c.b16 %v1545, %v1529
        %v1738 = vpack.c.b16 %v1546, %v1530
        %v1739 = vpack.c.b16 %v1547, %v1531
        %v1740 = vpack.c.b16 %v1548, %v1532
        %v1741 = vpack.c.b16 %v1549, %v1533
        %v1742 = vpack.c.b16 %v1550, %v1534
        %v1743 = vpack.c.b16 %v1551, %v1535
        %v1744 = vpack.c.b16 %v1552, %v1536
        %v1745 = vpack.c.b16 %v1553, %v1537
        %v1746 = vpack.c.b16 %v1554, %v1538
        %v1747 = vpack.c.b16 %v1555, %v1539
        %v1748 = vpack.c.b16 %v1572, %v1556
        %v1749 = vpack.c.b16 %v1573, %v1557
        %v1750 = vpack.c.b16 %v1574, %v1558
        %v1751 = vpack.c.b16 %v1575, %v1559
        %v1752 = vpack.c.b16 %v1576, %v1560
        %v1753 = vpack.c.b16 %v1577, %v1561
        %v1754 = vpack.c.b16 %v1578, %v1562
        %v1755 = vpack.c.b16 %v1579, %v1563
        %v1756 = vpack.c.b16 %v1580, %v1564
        %v1757 = vpack.c.b16 %v1581, %v1565
        %v1758 = vpack.c.b16 %v1582, %v1566
        %v1759 = vpack.c.b16 %v1583, %v1567
        %v1760 = vpack.c.b16 %v1584, %v1568
        %v1761 = vpack.c.b16 %v1585, %v1569
        %v1762 = vpack.c.b16 %v1586, %v1570
        %v1763 = vpack.c.b16 %v1587, %v1571
        %v1764 = vpack.c.b16 %v1604, %v1588
        %v1765 = vpack.c.b16 %v1605, %v1589
        %v1766 = vpack.c.b16 %v1606, %v1590
        %v1767 = vpack.c.b16 %v1607, %v1591
        %v1768 = vpack.c.b16 %v1608, %v1592
        %v1769 = vpack.c.b16 %v1609, %v1593
        %v1770 = vpack.c.b16 %v1610, %v1594
        %v1771 = vpack.c.b16 %v1611, %v1595
        %v1772 = vpack.c.b16 %v1612, %v1596
        %v1773 = vpack.c.b16 %v1613, %v1597
        %v1774 = vpack.c.b16 %v1614, %v1598
        %v1775 = vpack.c.b16 %v1615, %v1599
        %v1776 = vpack.c.b16 %v1616, %v1600
        %v1777 = vpack.c.b16 %v1617, %v1601
        %v1778 = vpack.c.b16 %v1618, %v1602
        %v1779 = vpack.c.b16 %v1619, %v1603
        %v1780 = vpack.c.b16 %v1636, %v1620
        %v1781 = vpack.c.b16 %v1637, %v1621
        %v1782 = vpack.c.b16 %v1638, %v1622
        %v1783 = vpack.c.b16 %v1639, %v1623
        %v1784 = vpack.c.b16 %v1640, %v1624
        %v1785 = vpack.c.b16 %v1641, %v1625
        %v1786 = vpack.c.b16 %v1642, %v1626
        %v1787 = vpack.c.b16 %v1643, %v1627
        %v1788 = vpack.c.b16 %v1644, %v1628
        %v1789 = vpack.c.b16 %v1645, %v1629
        %v1790 = vpack.c.b16 %v1646, %v1630
        %v1791 = vpack.c.b16 %v1647, %v1631
        %v1792 = vpack.c.b16 %v1648, %v1632
        %v1793 = vpack.c.b16 %v1649, %v1633
        %v1794 = vpack.c.b16 %v1650, %v1634
        %v1795 = vpack.c.b16 %v1651, %v1635
        %v1796 = vpack.c.b16 %v1668, %v1652
        %v1797 = vpack.c.b16 %v1669, %v1653
        %v1798 = vpack.c.b16 %v1670, %v1654
        %v1799 = vpack.c.b16 %v1671, %v1655
        %v1800 = vpack.c.b16 %v1672, %v1656
        %v1801 = vpack.c.b16 %v1673, %v1657
        %v1802 = vpack.c.b16 %v1674, %v1658
        %v1803 = vpack.c.b16 %v1675, %v1659
        %v1804 = vpack.c.b16 %v1676, %v1660
        %v1805 = vpack.c.b16 %v1677, %v1661
        %v1806 = vpack.c.b16 %v1678, %v1662
        %v1807 = vpack.c.b16 %v1679, %v1663
        %v1808 = vpack.c.b16 %v1680, %v1664
        %v1809 = vpack.c.b16 %v1681, %v1665
        %v1810 = vpack.c.b16 %v1682, %v1666
        %v1811 = vpack.c.b16 %v1683, %v1667
        %1940 = vmatprep.subr.bf16.mxu0 %v1797
        %1941 = vmatpush1.bf16.msra.mxu0 %v1796
        %1942 = vmatprep.subr.bf16.mxu0 %v1781
        %1943 = vmatpush1.bf16.msra.mxu0 %v1780
        %1944 = vmatprep.subr.bf16.mxu0 %v1765
        %1945 = vmatpush1.bf16.msra.mxu0 %v1764
        %1946 = vmatprep.subr.bf16.mxu0 %v1749
        %1947 = vmatpush1.bf16.msra.mxu0 %v1748
        %1948 = vmatprep.subr.bf16.mxu0 %v1733
        %1949 = vmatpush1.bf16.msra.mxu0 %v1732
        %1950 = vmatprep.subr.bf16.mxu0 %v1717
        %1951 = vmatpush1.bf16.msra.mxu0 %v1716
        %1952 = vmatprep.subr.bf16.mxu0 %v1701
        %1953 = vmatpush1.bf16.msra.mxu0 %v1700
        %1954 = vmatprep.subr.bf16.mxu0 %v1685
        %1955 = vmatpush1.bf16.msra.mxu0 %v1684
        %1956 = vmatprep.subr.bf16.mxu0 0
        %1957 = vmatpush2.bf16.msra.mxu0 0
        %1958 = vmatprep.subr.bf16.mxu0 0
        %1959 = vmatpush2.bf16.msra.mxu0 0
        %1960 = vmatprep.subr.bf16.mxu0 0
        %1961 = vmatpush2.bf16.msra.mxu0 0
        %1962 = vmatprep.subr.bf16.mxu0 0
        %1963 = vmatpush2.bf16.msra.mxu0 0
        %1964 = vmatprep.subr.bf16.mxu0 0
        %1965 = vmatpush2.bf16.msra.mxu0 0
        %1966 = vmatprep.subr.bf16.mxu0 0
        %1967 = vmatpush2.bf16.msra.mxu0 0
        %1968 = vmatprep.subr.bf16.mxu0 0
        %1969 = vmatpush2.bf16.msra.mxu0 0
        %1970 = vmatprep.subr.bf16.mxu0 0
        %1971 = vmatpush2.bf16.msra.mxu0 0
        %1972 = vmatprep.mubr.bf16.mxu0 0
        %1973 = vmatmul.mubr.bf16.gmra.mxu0 %v1087
        %v1974 = vpop.f32.mrf.mxu0
        %v1975 = vadd.f32 %v1223, %v1974
        %v1976 = vpop.f32.mrf.mxu0
        %v1977 = vadd.f32 %v1227, %v1976
        %v1978 = vpop.f32.mrf.mxu0
        %v1979 = vpop.f32.mrf.mxu0
        %1980 = vdwg.mxu0
        %1981 = vmatprep.subr.bf16.mxu0 %v1799
        %1982 = vmatpush1.bf16.msra.mxu0 %v1798
        %1983 = vmatprep.subr.bf16.mxu0 %v1783
        %1984 = vmatpush1.bf16.msra.mxu0 %v1782
        %1985 = vmatprep.subr.bf16.mxu0 %v1767
        %1986 = vmatpush1.bf16.msra.mxu0 %v1766
        %1987 = vmatprep.subr.bf16.mxu0 %v1751
        %1988 = vmatpush1.bf16.msra.mxu0 %v1750
        %1989 = vmatprep.subr.bf16.mxu0 %v1735
        %1990 = vmatpush1.bf16.msra.mxu0 %v1734
        %1991 = vmatprep.subr.bf16.mxu0 %v1719
        %1992 = vmatpush1.bf16.msra.mxu0 %v1718
        %1993 = vmatprep.subr.bf16.mxu0 %v1703
        %1994 = vmatpush1.bf16.msra.mxu0 %v1702
        %1995 = vmatprep.subr.bf16.mxu0 %v1687
        %1996 = vmatpush1.bf16.msra.mxu0 %v1686
        %1997 = vmatprep.subr.bf16.mxu0 0
        %1998 = vmatpush2.bf16.msra.mxu0 0
        %1999 = vmatprep.subr.bf16.mxu0 0
        %2000 = vmatpush2.bf16.msra.mxu0 0
        %2001 = vmatprep.subr.bf16.mxu0 0
        %2002 = vmatpush2.bf16.msra.mxu0 0
        %2003 = vmatprep.subr.bf16.mxu0 0
        %2004 = vmatpush2.bf16.msra.mxu0 0
        %2005 = vmatprep.subr.bf16.mxu0 0
        %2006 = vmatpush2.bf16.msra.mxu0 0
        %2007 = vmatprep.subr.bf16.mxu0 0
        %2008 = vmatpush2.bf16.msra.mxu0 0
        %2009 = vmatprep.subr.bf16.mxu0 0
        %2010 = vmatpush2.bf16.msra.mxu0 0
        %2011 = vmatprep.subr.bf16.mxu0 0
        %2012 = vmatpush2.bf16.msra.mxu0 0
        %2013 = vmatprep.mubr.bf16.mxu0 0
        %2014 = vmatmul.mubr.bf16.gmra.mxu0 %v1087
        %v2015 = vpop.f32.mrf.mxu0
        %v2016 = vadd.f32 %v1231, %v2015
        %v2017 = vpop.f32.mrf.mxu0
        %v2018 = vadd.f32 %v1235, %v2017
        %v2019 = vpop.f32.mrf.mxu0
        %v2020 = vpop.f32.mrf.mxu0
        %2021 = vdwg.mxu0
        %2022 = vmatprep.subr.bf16.mxu0 %v1801
        %2023 = vmatpush1.bf16.msra.mxu0 %v1800
        %2024 = vmatprep.subr.bf16.mxu0 %v1785
        %2025 = vmatpush1.bf16.msra.mxu0 %v1784
        %2026 = vmatprep.subr.bf16.mxu0 %v1769
        %2027 = vmatpush1.bf16.msra.mxu0 %v1768
        %2028 = vmatprep.subr.bf16.mxu0 %v1753
        %2029 = vmatpush1.bf16.msra.mxu0 %v1752
        %2030 = vmatprep.subr.bf16.mxu0 %v1737
        %2031 = vmatpush1.bf16.msra.mxu0 %v1736
        %2032 = vmatprep.subr.bf16.mxu0 %v1721
        %2033 = vmatpush1.bf16.msra.mxu0 %v1720
        %2034 = vmatprep.subr.bf16.mxu0 %v1705
        %2035 = vmatpush1.bf16.msra.mxu0 %v1704
        %2036 = vmatprep.subr.bf16.mxu0 %v1689
        %2037 = vmatpush1.bf16.msra.mxu0 %v1688
        %2038 = vmatprep.subr.bf16.mxu0 0
        %2039 = vmatpush2.bf16.msra.mxu0 0
        %2040 = vmatprep.subr.bf16.mxu0 0
        %2041 = vmatpush2.bf16.msra.mxu0 0
        %2042 = vmatprep.subr.bf16.mxu0 0
        %2043 = vmatpush2.bf16.msra.mxu0 0
        %2044 = vmatprep.subr.bf16.mxu0 0
        %2045 = vmatpush2.bf16.msra.mxu0 0
        %2046 = vmatprep.subr.bf16.mxu0 0
        %2047 = vmatpush2.bf16.msra.mxu0 0
        %2048 = vmatprep.subr.bf16.mxu0 0
        %2049 = vmatpush2.bf16.msra.mxu0 0
        %2050 = vmatprep.subr.bf16.mxu0 0
        %2051 = vmatpush2.bf16.msra.mxu0 0
        %2052 = vmatprep.subr.bf16.mxu0 0
        %2053 = vmatpush2.bf16.msra.mxu0 0
        %2054 = vmatprep.mubr.bf16.mxu0 0
        %2055 = vmatmul.mubr.bf16.gmra.mxu0 %v1087
        %v2056 = vpop.f32.mrf.mxu0
        %v2057 = vadd.f32 %v1239, %v2056
        %v2058 = vpop.f32.mrf.mxu0
        %v2059 = vadd.f32 %v1243, %v2058
        %v2060 = vpop.f32.mrf.mxu0
        %v2061 = vpop.f32.mrf.mxu0
        %2062 = vdwg.mxu0
        %2063 = vmatprep.subr.bf16.mxu0 %v1803
        %2064 = vmatpush1.bf16.msra.mxu0 %v1802
        %2065 = vmatprep.subr.bf16.mxu0 %v1787
        %2066 = vmatpush1.bf16.msra.mxu0 %v1786
        %2067 = vmatprep.subr.bf16.mxu0 %v1771
        %2068 = vmatpush1.bf16.msra.mxu0 %v1770
        %2069 = vmatprep.subr.bf16.mxu0 %v1755
        %2070 = vmatpush1.bf16.msra.mxu0 %v1754
        %2071 = vmatprep.subr.bf16.mxu0 %v1739
        %2072 = vmatpush1.bf16.msra.mxu0 %v1738
        %2073 = vmatprep.subr.bf16.mxu0 %v1723
        %2074 = vmatpush1.bf16.msra.mxu0 %v1722
        %2075 = vmatprep.subr.bf16.mxu0 %v1707
        %2076 = vmatpush1.bf16.msra.mxu0 %v1706
        %2077 = vmatprep.subr.bf16.mxu0 %v1691
        %2078 = vmatpush1.bf16.msra.mxu0 %v1690
        %2079 = vmatprep.subr.bf16.mxu0 0
        %2080 = vmatpush2.bf16.msra.mxu0 0
        %2081 = vmatprep.subr.bf16.mxu0 0
        %2082 = vmatpush2.bf16.msra.mxu0 0
        %2083 = vmatprep.subr.bf16.mxu0 0
        %2084 = vmatpush2.bf16.msra.mxu0 0
        %2085 = vmatprep.subr.bf16.mxu0 0
        %2086 = vmatpush2.bf16.msra.mxu0 0
        %2087 = vmatprep.subr.bf16.mxu0 0
        %2088 = vmatpush2.bf16.msra.mxu0 0
        %2089 = vmatprep.subr.bf16.mxu0 0
        %2090 = vmatpush2.bf16.msra.mxu0 0
        %2091 = vmatprep.subr.bf16.mxu0 0
        %2092 = vmatpush2.bf16.msra.mxu0 0
        %2093 = vmatprep.subr.bf16.mxu0 0
        %2094 = vmatpush2.bf16.msra.mxu0 0
        %2095 = vmatprep.mubr.bf16.mxu0 0
        %2096 = vmatmul.mubr.bf16.gmra.mxu0 %v1087
        %v2097 = vpop.f32.mrf.mxu0
        %v2098 = vadd.f32 %v1247, %v2097
        %v2099 = vpop.f32.mrf.mxu0
        %v2100 = vadd.f32 %v1251, %v2099
        %v2101 = vpop.f32.mrf.mxu0
        %v2102 = vpop.f32.mrf.mxu0
        %2103 = vdwg.mxu0
        %2104 = vmatprep.subr.bf16.mxu0 %v1805
        %2105 = vmatpush1.bf16.msra.mxu0 %v1804
        %2106 = vmatprep.subr.bf16.mxu0 %v1789
        %2107 = vmatpush1.bf16.msra.mxu0 %v1788
        %2108 = vmatprep.subr.bf16.mxu0 %v1773
        %2109 = vmatpush1.bf16.msra.mxu0 %v1772
        %2110 = vmatprep.subr.bf16.mxu0 %v1757
        %2111 = vmatpush1.bf16.msra.mxu0 %v1756
        %2112 = vmatprep.subr.bf16.mxu0 %v1741
        %2113 = vmatpush1.bf16.msra.mxu0 %v1740
        %2114 = vmatprep.subr.bf16.mxu0 %v1725
        %2115 = vmatpush1.bf16.msra.mxu0 %v1724
        %2116 = vmatprep.subr.bf16.mxu0 %v1709
        %2117 = vmatpush1.bf16.msra.mxu0 %v1708
        %2118 = vmatprep.subr.bf16.mxu0 %v1693
        %2119 = vmatpush1.bf16.msra.mxu0 %v1692
        %2120 = vmatprep.subr.bf16.mxu0 0
        %2121 = vmatpush2.bf16.msra.mxu0 0
        %2122 = vmatprep.subr.bf16.mxu0 0
        %2123 = vmatpush2.bf16.msra.mxu0 0
        %2124 = vmatprep.subr.bf16.mxu0 0
        %2125 = vmatpush2.bf16.msra.mxu0 0
        %2126 = vmatprep.subr.bf16.mxu0 0
        %2127 = vmatpush2.bf16.msra.mxu0 0
        %2128 = vmatprep.subr.bf16.mxu0 0
        %2129 = vmatpush2.bf16.msra.mxu0 0
        %2130 = vmatprep.subr.bf16.mxu0 0
        %2131 = vmatpush2.bf16.msra.mxu0 0
        %2132 = vmatprep.subr.bf16.mxu0 0
        %2133 = vmatpush2.bf16.msra.mxu0 0
        %2134 = vmatprep.subr.bf16.mxu0 0
        %2135 = vmatpush2.bf16.msra.mxu0 0
        %2136 = vmatprep.mubr.bf16.mxu0 0
        %2137 = vmatmul.mubr.bf16.gmra.mxu0 %v1087
        %v2138 = vpop.f32.mrf.mxu0
        %v2139 = vadd.f32 %v1255, %v2138
        %v2140 = vpop.f32.mrf.mxu0
        %v2141 = vadd.f32 %v1259, %v2140
        %v2142 = vpop.f32.mrf.mxu0
        %v2143 = vpop.f32.mrf.mxu0
        %2144 = vdwg.mxu0
        %2145 = vmatprep.subr.bf16.mxu0 %v1807
        %2146 = vmatpush1.bf16.msra.mxu0 %v1806
        %2147 = vmatprep.subr.bf16.mxu0 %v1791
        %2148 = vmatpush1.bf16.msra.mxu0 %v1790
        %2149 = vmatprep.subr.bf16.mxu0 %v1775
        %2150 = vmatpush1.bf16.msra.mxu0 %v1774
        %2151 = vmatprep.subr.bf16.mxu0 %v1759
        %2152 = vmatpush1.bf16.msra.mxu0 %v1758
        %2153 = vmatprep.subr.bf16.mxu0 %v1743
        %2154 = vmatpush1.bf16.msra.mxu0 %v1742
        %2155 = vmatprep.subr.bf16.mxu0 %v1727
        %2156 = vmatpush1.bf16.msra.mxu0 %v1726
        %2157 = vmatprep.subr.bf16.mxu0 %v1711
        %2158 = vmatpush1.bf16.msra.mxu0 %v1710
        %2159 = vmatprep.subr.bf16.mxu0 %v1695
        %2160 = vmatpush1.bf16.msra.mxu0 %v1694
        %2161 = vmatprep.subr.bf16.mxu0 0
        %2162 = vmatpush2.bf16.msra.mxu0 0
        %2163 = vmatprep.subr.bf16.mxu0 0
        %2164 = vmatpush2.bf16.msra.mxu0 0
        %2165 = vmatprep.subr.bf16.mxu0 0
        %2166 = vmatpush2.bf16.msra.mxu0 0
        %2167 = vmatprep.subr.bf16.mxu0 0
        %2168 = vmatpush2.bf16.msra.mxu0 0
        %2169 = vmatprep.subr.bf16.mxu0 0
        %2170 = vmatpush2.bf16.msra.mxu0 0
        %2171 = vmatprep.subr.bf16.mxu0 0
        %2172 = vmatpush2.bf16.msra.mxu0 0
        %2173 = vmatprep.subr.bf16.mxu0 0
        %2174 = vmatpush2.bf16.msra.mxu0 0
        %2175 = vmatprep.subr.bf16.mxu0 0
        %2176 = vmatpush2.bf16.msra.mxu0 0
        %2177 = vmatprep.mubr.bf16.mxu0 0
        %2178 = vmatmul.mubr.bf16.gmra.mxu0 %v1087
        %v2179 = vpop.f32.mrf.mxu0
        %v2180 = vadd.f32 %v1263, %v2179
        %v2181 = vpop.f32.mrf.mxu0
        %v2182 = vadd.f32 %v1267, %v2181
        %v2183 = vpop.f32.mrf.mxu0
        %v2184 = vpop.f32.mrf.mxu0
        %2185 = vdwg.mxu0
        %2186 = vmatprep.subr.bf16.mxu0 %v1809
        %2187 = vmatpush1.bf16.msra.mxu0 %v1808
        %2188 = vmatprep.subr.bf16.mxu0 %v1793
        %2189 = vmatpush1.bf16.msra.mxu0 %v1792
        %2190 = vmatprep.subr.bf16.mxu0 %v1777
        %2191 = vmatpush1.bf16.msra.mxu0 %v1776
        %2192 = vmatprep.subr.bf16.mxu0 %v1761
        %2193 = vmatpush1.bf16.msra.mxu0 %v1760
        %2194 = vmatprep.subr.bf16.mxu0 %v1745
        %2195 = vmatpush1.bf16.msra.mxu0 %v1744
        %2196 = vmatprep.subr.bf16.mxu0 %v1729
        %2197 = vmatpush1.bf16.msra.mxu0 %v1728
        %2198 = vmatprep.subr.bf16.mxu0 %v1713
        %2199 = vmatpush1.bf16.msra.mxu0 %v1712
        %2200 = vmatprep.subr.bf16.mxu0 %v1697
        %2201 = vmatpush1.bf16.msra.mxu0 %v1696
        %2202 = vmatprep.subr.bf16.mxu0 0
        %2203 = vmatpush2.bf16.msra.mxu0 0
        %2204 = vmatprep.subr.bf16.mxu0 0
        %2205 = vmatpush2.bf16.msra.mxu0 0
        %2206 = vmatprep.subr.bf16.mxu0 0
        %2207 = vmatpush2.bf16.msra.mxu0 0
        %2208 = vmatprep.subr.bf16.mxu0 0
        %2209 = vmatpush2.bf16.msra.mxu0 0
        %2210 = vmatprep.subr.bf16.mxu0 0
        %2211 = vmatpush2.bf16.msra.mxu0 0
        %2212 = vmatprep.subr.bf16.mxu0 0
        %2213 = vmatpush2.bf16.msra.mxu0 0
        %2214 = vmatprep.subr.bf16.mxu0 0
        %2215 = vmatpush2.bf16.msra.mxu0 0
        %2216 = vmatprep.subr.bf16.mxu0 0
        %2217 = vmatpush2.bf16.msra.mxu0 0
        %2218 = vmatprep.mubr.bf16.mxu0 0
        %2219 = vmatmul.mubr.bf16.gmra.mxu0 %v1087
        %v2220 = vpop.f32.mrf.mxu0
        %v2221 = vadd.f32 %v1271, %v2220
        %v2222 = vpop.f32.mrf.mxu0
        %v2223 = vadd.f32 %v1275, %v2222
        %v2224 = vpop.f32.mrf.mxu0
        %v2225 = vpop.f32.mrf.mxu0
        %2226 = vdwg.mxu0
        %2227 = vmatprep.subr.bf16.mxu0 %v1811
        %2228 = vmatpush1.bf16.msra.mxu0 %v1810
        %2229 = vmatprep.subr.bf16.mxu0 %v1795
        %2230 = vmatpush1.bf16.msra.mxu0 %v1794
        %2231 = vmatprep.subr.bf16.mxu0 %v1779
        %2232 = vmatpush1.bf16.msra.mxu0 %v1778
        %2233 = vmatprep.subr.bf16.mxu0 %v1763
        %2234 = vmatpush1.bf16.msra.mxu0 %v1762
        %2235 = vmatprep.subr.bf16.mxu0 %v1747
        %2236 = vmatpush1.bf16.msra.mxu0 %v1746
        %2237 = vmatprep.subr.bf16.mxu0 %v1731
        %2238 = vmatpush1.bf16.msra.mxu0 %v1730
        %2239 = vmatprep.subr.bf16.mxu0 %v1715
        %2240 = vmatpush1.bf16.msra.mxu0 %v1714
        %2241 = vmatprep.subr.bf16.mxu0 %v1699
        %2242 = vmatpush1.bf16.msra.mxu0 %v1698
        %2243 = vmatprep.subr.bf16.mxu0 0
        %2244 = vmatpush2.bf16.msra.mxu0 0
        %2245 = vmatprep.subr.bf16.mxu0 0
        %2246 = vmatpush2.bf16.msra.mxu0 0
        %2247 = vmatprep.subr.bf16.mxu0 0
        %2248 = vmatpush2.bf16.msra.mxu0 0
        %2249 = vmatprep.subr.bf16.mxu0 0
        %2250 = vmatpush2.bf16.msra.mxu0 0
        %2251 = vmatprep.subr.bf16.mxu0 0
        %2252 = vmatpush2.bf16.msra.mxu0 0
        %2253 = vmatprep.subr.bf16.mxu0 0
        %2254 = vmatpush2.bf16.msra.mxu0 0
        %2255 = vmatprep.subr.bf16.mxu0 0
        %2256 = vmatpush2.bf16.msra.mxu0 0
        %2257 = vmatprep.subr.bf16.mxu0 0
        %2258 = vmatpush2.bf16.msra.mxu0 0
        %2259 = vmatprep.mubr.bf16.mxu0 0
        %2260 = vmatmul.mubr.bf16.gmra.mxu0 %v1087
        %v2261 = vpop.f32.mrf.mxu0
        %v2262 = vadd.f32 %v1279, %v2261
        %v2263 = vpop.f32.mrf.mxu0
        %v2264 = vadd.f32 %v1283, %v2263
        %v2265 = vpop.f32.mrf.mxu0
        %v2266 = vpop.f32.mrf.mxu0
        %2267 = vdwg.mxu0
        %v2268 = vmax.f32 %v1975, 0.0
        %v2269 = vmax.f32 %v1977, 0.0
        %v2270 = vmax.f32 %v2016, 0.0
        %v2271 = vmax.f32 %v2018, 0.0
        %v2272 = vmax.f32 %v2057, 0.0
        %v2273 = vmax.f32 %v2059, 0.0
        %v2274 = vmax.f32 %v2098, 0.0
        %v2275 = vmax.f32 %v2100, 0.0
        %v2276 = vmax.f32 %v2139, 0.0
        %v2277 = vmax.f32 %v2141, 0.0
        %v2278 = vmax.f32 %v2180, 0.0
        %v2279 = vmax.f32 %v2182, 0.0
        %v2280 = vmax.f32 %v2221, 0.0
        %v2281 = vmax.f32 %v2223, 0.0
        %v2282 = vmax.f32 %v2262, 0.0
        %v2283 = vmax.f32 %v2264, 0.0
        %v2284 = vpack.c.bf16 %v2268, %v2268
        %v2285 = vpack.c.bf16 %v2269, %v2269
        %v2286 = vpack.c.bf16 %v2270, %v2270
        %v2287 = vpack.c.bf16 %v2271, %v2271
        %v2288 = vpack.c.bf16 %v2272, %v2272
        %v2289 = vpack.c.bf16 %v2273, %v2273
        %v2290 = vpack.c.bf16 %v2274, %v2274
        %v2291 = vpack.c.bf16 %v2275, %v2275
        %v2292 = vpack.c.bf16 %v2276, %v2276
        %v2293 = vpack.c.bf16 %v2277, %v2277
        %v2294 = vpack.c.bf16 %v2278, %v2278
        %v2295 = vpack.c.bf16 %v2279, %v2279
        %v2296 = vpack.c.bf16 %v2280, %v2280
        %v2297 = vpack.c.bf16 %v2281, %v2281
        %v2298 = vpack.c.bf16 %v2282, %v2282
        %v2299 = vpack.c.bf16 %v2283, %v2283
        %v2300 = vld [vmem:[#allocation5] sm:$0xf]
        %v2301 = vld [vmem:[#allocation5 + $0x4] sm:$0xf]
        %v2302 = vld [vmem:[#allocation5 + $0x8] sm:$0xf]
        %v2303 = vld [vmem:[#allocation5 + $0xc] sm:$0xf]
        %v2304 = vld [vmem:[#allocation5 + $0x10] sm:$0xf]
        %v2305 = vld [vmem:[#allocation5 + $0x14] sm:$0xf]
        %v2306 = vld [vmem:[#allocation5 + $0x18] sm:$0xf]
        %v2307 = vld [vmem:[#allocation5 + $0x1c] sm:$0xf]
        %v2308 = vld [vmem:[#allocation5 + $0x20] sm:$0xf]
        %v2309 = vld [vmem:[#allocation5 + $0x24] sm:$0xf]
        %v2310 = vld [vmem:[#allocation5 + $0x28] sm:$0xf]
        %v2311 = vld [vmem:[#allocation5 + $0x2c] sm:$0xf]
        %v2312 = vld [vmem:[#allocation5 + $0x30] sm:$0xf]
        %v2313 = vld [vmem:[#allocation5 + $0x34] sm:$0xf]
        %v2314 = vld [vmem:[#allocation5 + $0x38] sm:$0xf]
        %v2315 = vld [vmem:[#allocation5 + $0x3c] sm:$0xf]
        %v2316 = vld [vmem:[#allocation5 + $0x40] sm:$0xf]
        %v2317 = vld [vmem:[#allocation5 + $0x44] sm:$0xf]
        %v2318 = vld [vmem:[#allocation5 + $0x48] sm:$0xf]
        %v2319 = vld [vmem:[#allocation5 + $0x4c] sm:$0xf]
        %v2320 = vld [vmem:[#allocation5 + $0x50] sm:$0xf]
        %v2321 = vld [vmem:[#allocation5 + $0x54] sm:$0xf]
        %v2322 = vld [vmem:[#allocation5 + $0x58] sm:$0xf]
        %v2323 = vld [vmem:[#allocation5 + $0x5c] sm:$0xf]
        %v2324 = vld [vmem:[#allocation5 + $0x60] sm:$0xf]
        %v2325 = vld [vmem:[#allocation5 + $0x64] sm:$0xf]
        %v2326 = vld [vmem:[#allocation5 + $0x68] sm:$0xf]
        %v2327 = vld [vmem:[#allocation5 + $0x6c] sm:$0xf]
        %v2328 = vld [vmem:[#allocation5 + $0x70] sm:$0xf]
        %v2329 = vld [vmem:[#allocation5 + $0x74] sm:$0xf]
        %v2330 = vld [vmem:[#allocation5 + $0x78] sm:$0xf]
        %v2331 = vld [vmem:[#allocation5 + $0x7c] sm:$0xf]
        %v2332 = vld [vmem:[#allocation5 + $0x80] sm:$0xf]
        %v2333 = vld [vmem:[#allocation5 + $0x84] sm:$0xf]
        %v2334 = vld [vmem:[#allocation5 + $0x88] sm:$0xf]
        %v2335 = vld [vmem:[#allocation5 + $0x8c] sm:$0xf]
        %v2336 = vld [vmem:[#allocation5 + $0x90] sm:$0xf]
        %v2337 = vld [vmem:[#allocation5 + $0x94] sm:$0xf]
        %v2338 = vld [vmem:[#allocation5 + $0x98] sm:$0xf]
        %v2339 = vld [vmem:[#allocation5 + $0x9c] sm:$0xf]
        %v2340 = vld [vmem:[#allocation5 + $0xa0] sm:$0xf]
        %v2341 = vld [vmem:[#allocation5 + $0xa4] sm:$0xf]
        %v2342 = vld [vmem:[#allocation5 + $0xa8] sm:$0xf]
        %v2343 = vld [vmem:[#allocation5 + $0xac] sm:$0xf]
        %v2344 = vld [vmem:[#allocation5 + $0xb0] sm:$0xf]
        %v2345 = vld [vmem:[#allocation5 + $0xb4] sm:$0xf]
        %v2346 = vld [vmem:[#allocation5 + $0xb8] sm:$0xf]
        %v2347 = vld [vmem:[#allocation5 + $0xbc] sm:$0xf]
        %v2348 = vld [vmem:[#allocation5 + $0xc0] sm:$0xf]
        %v2349 = vld [vmem:[#allocation5 + $0xc4] sm:$0xf]
        %v2350 = vld [vmem:[#allocation5 + $0xc8] sm:$0xf]
        %v2351 = vld [vmem:[#allocation5 + $0xcc] sm:$0xf]
        %v2352 = vld [vmem:[#allocation5 + $0xd0] sm:$0xf]
        %v2353 = vld [vmem:[#allocation5 + $0xd4] sm:$0xf]
        %v2354 = vld [vmem:[#allocation5 + $0xd8] sm:$0xf]
        %v2355 = vld [vmem:[#allocation5 + $0xdc] sm:$0xf]
        %v2356 = vld [vmem:[#allocation5 + $0xe0] sm:$0xf]
        %v2357 = vld [vmem:[#allocation5 + $0xe4] sm:$0xf]
        %v2358 = vld [vmem:[#allocation5 + $0xe8] sm:$0xf]
        %v2359 = vld [vmem:[#allocation5 + $0xec] sm:$0xf]
        %v2360 = vld [vmem:[#allocation5 + $0xf0] sm:$0xf]
        %v2361 = vld [vmem:[#allocation5 + $0xf4] sm:$0xf]
        %v2362 = vld [vmem:[#allocation5 + $0xf8] sm:$0xf]
        %v2363 = vld [vmem:[#allocation5 + $0xfc] sm:$0xf]
        %v2364 = vld [vmem:[#allocation5 + $0x100] sm:$0xf]
        %v2365 = vld [vmem:[#allocation5 + $0x104] sm:$0xf]
        %v2366 = vld [vmem:[#allocation5 + $0x108] sm:$0xf]
        %v2367 = vld [vmem:[#allocation5 + $0x10c] sm:$0xf]
        %v2368 = vld [vmem:[#allocation5 + $0x110] sm:$0xf]
        %v2369 = vld [vmem:[#allocation5 + $0x114] sm:$0xf]
        %v2370 = vld [vmem:[#allocation5 + $0x118] sm:$0xf]
        %v2371 = vld [vmem:[#allocation5 + $0x11c] sm:$0xf]
        %v2372 = vld [vmem:[#allocation5 + $0x120] sm:$0xf]
        %v2373 = vld [vmem:[#allocation5 + $0x124] sm:$0xf]
        %v2374 = vld [vmem:[#allocation5 + $0x128] sm:$0xf]
        %v2375 = vld [vmem:[#allocation5 + $0x12c] sm:$0xf]
        %v2376 = vld [vmem:[#allocation5 + $0x130] sm:$0xf]
        %v2377 = vld [vmem:[#allocation5 + $0x134] sm:$0xf]
        %v2378 = vld [vmem:[#allocation5 + $0x138] sm:$0xf]
        %v2379 = vld [vmem:[#allocation5 + $0x13c] sm:$0xf]
        %v2380 = vld [vmem:[#allocation5 + $0x140] sm:$0xf]
        %v2381 = vld [vmem:[#allocation5 + $0x144] sm:$0xf]
        %v2382 = vld [vmem:[#allocation5 + $0x148] sm:$0xf]
        %v2383 = vld [vmem:[#allocation5 + $0x14c] sm:$0xf]
        %v2384 = vld [vmem:[#allocation5 + $0x150] sm:$0xf]
        %v2385 = vld [vmem:[#allocation5 + $0x154] sm:$0xf]
        %v2386 = vld [vmem:[#allocation5 + $0x158] sm:$0xf]
        %v2387 = vld [vmem:[#allocation5 + $0x15c] sm:$0xf]
        %v2388 = vld [vmem:[#allocation5 + $0x160] sm:$0xf]
        %v2389 = vld [vmem:[#allocation5 + $0x164] sm:$0xf]
        %v2390 = vld [vmem:[#allocation5 + $0x168] sm:$0xf]
        %v2391 = vld [vmem:[#allocation5 + $0x16c] sm:$0xf]
        %v2392 = vld [vmem:[#allocation5 + $0x170] sm:$0xf]
        %v2393 = vld [vmem:[#allocation5 + $0x174] sm:$0xf]
        %v2394 = vld [vmem:[#allocation5 + $0x178] sm:$0xf]
        %v2395 = vld [vmem:[#allocation5 + $0x17c] sm:$0xf]
        %v2396 = vld [vmem:[#allocation5 + $0x180] sm:$0xf]
        %v2397 = vld [vmem:[#allocation5 + $0x184] sm:$0xf]
        %v2398 = vld [vmem:[#allocation5 + $0x188] sm:$0xf]
        %v2399 = vld [vmem:[#allocation5 + $0x18c] sm:$0xf]
        %v2400 = vld [vmem:[#allocation5 + $0x190] sm:$0xf]
        %v2401 = vld [vmem:[#allocation5 + $0x194] sm:$0xf]
        %v2402 = vld [vmem:[#allocation5 + $0x198] sm:$0xf]
        %v2403 = vld [vmem:[#allocation5 + $0x19c] sm:$0xf]
        %v2404 = vld [vmem:[#allocation5 + $0x1a0] sm:$0xf]
        %v2405 = vld [vmem:[#allocation5 + $0x1a4] sm:$0xf]
        %v2406 = vld [vmem:[#allocation5 + $0x1a8] sm:$0xf]
        %v2407 = vld [vmem:[#allocation5 + $0x1ac] sm:$0xf]
        %v2408 = vld [vmem:[#allocation5 + $0x1b0] sm:$0xf]
        %v2409 = vld [vmem:[#allocation5 + $0x1b4] sm:$0xf]
        %v2410 = vld [vmem:[#allocation5 + $0x1b8] sm:$0xf]
        %v2411 = vld [vmem:[#allocation5 + $0x1bc] sm:$0xf]
        %v2412 = vld [vmem:[#allocation5 + $0x1c0] sm:$0xf]
        %v2413 = vld [vmem:[#allocation5 + $0x1c4] sm:$0xf]
        %v2414 = vld [vmem:[#allocation5 + $0x1c8] sm:$0xf]
        %v2415 = vld [vmem:[#allocation5 + $0x1cc] sm:$0xf]
        %v2416 = vld [vmem:[#allocation5 + $0x1d0] sm:$0xf]
        %v2417 = vld [vmem:[#allocation5 + $0x1d4] sm:$0xf]
        %v2418 = vld [vmem:[#allocation5 + $0x1d8] sm:$0xf]
        %v2419 = vld [vmem:[#allocation5 + $0x1dc] sm:$0xf]
        %v2420 = vld [vmem:[#allocation5 + $0x1e0] sm:$0xf]
        %v2421 = vld [vmem:[#allocation5 + $0x1e4] sm:$0xf]
        %v2422 = vld [vmem:[#allocation5 + $0x1e8] sm:$0xf]
        %v2423 = vld [vmem:[#allocation5 + $0x1ec] sm:$0xf]
        %v2424 = vld [vmem:[#allocation5 + $0x1f0] sm:$0xf]
        %v2425 = vld [vmem:[#allocation5 + $0x1f4] sm:$0xf]
        %v2426 = vld [vmem:[#allocation5 + $0x1f8] sm:$0xf]
        %v2427 = vld [vmem:[#allocation5 + $0x1fc] sm:$0xf]
        %v2428 = vld [vmem:[#allocation5 + $0x200] sm:$0xf]
        %v2429 = vld [vmem:[#allocation5 + $0x204] sm:$0xf]
        %v2430 = vld [vmem:[#allocation5 + $0x208] sm:$0xf]
        %v2431 = vld [vmem:[#allocation5 + $0x20c] sm:$0xf]
        %v2432 = vld [vmem:[#allocation5 + $0x210] sm:$0xf]
        %v2433 = vld [vmem:[#allocation5 + $0x214] sm:$0xf]
        %v2434 = vld [vmem:[#allocation5 + $0x218] sm:$0xf]
        %v2435 = vld [vmem:[#allocation5 + $0x21c] sm:$0xf]
        %v2436 = vld [vmem:[#allocation5 + $0x220] sm:$0xf]
        %v2437 = vld [vmem:[#allocation5 + $0x224] sm:$0xf]
        %v2438 = vld [vmem:[#allocation5 + $0x228] sm:$0xf]
        %v2439 = vld [vmem:[#allocation5 + $0x22c] sm:$0xf]
        %v2440 = vld [vmem:[#allocation5 + $0x230] sm:$0xf]
        %v2441 = vld [vmem:[#allocation5 + $0x234] sm:$0xf]
        %v2442 = vld [vmem:[#allocation5 + $0x238] sm:$0xf]
        %v2443 = vld [vmem:[#allocation5 + $0x23c] sm:$0xf]
        %v2444 = vld [vmem:[#allocation5 + $0x240] sm:$0xf]
        %v2445 = vld [vmem:[#allocation5 + $0x244] sm:$0xf]
        %v2446 = vld [vmem:[#allocation5 + $0x248] sm:$0xf]
        %v2447 = vld [vmem:[#allocation5 + $0x24c] sm:$0xf]
        %v2448 = vld [vmem:[#allocation5 + $0x250] sm:$0xf]
        %v2449 = vld [vmem:[#allocation5 + $0x254] sm:$0xf]
        %v2450 = vld [vmem:[#allocation5 + $0x258] sm:$0xf]
        %v2451 = vld [vmem:[#allocation5 + $0x25c] sm:$0xf]
        %v2452 = vld [vmem:[#allocation5 + $0x260] sm:$0xf]
        %v2453 = vld [vmem:[#allocation5 + $0x264] sm:$0xf]
        %v2454 = vld [vmem:[#allocation5 + $0x268] sm:$0xf]
        %v2455 = vld [vmem:[#allocation5 + $0x26c] sm:$0xf]
        %v2456 = vld [vmem:[#allocation5 + $0x270] sm:$0xf]
        %v2457 = vld [vmem:[#allocation5 + $0x274] sm:$0xf]
        %v2458 = vld [vmem:[#allocation5 + $0x278] sm:$0xf]
        %v2459 = vld [vmem:[#allocation5 + $0x27c] sm:$0xf]
        %v2460 = vld [vmem:[#allocation5 + $0x280] sm:$0xf]
        %v2461 = vld [vmem:[#allocation5 + $0x284] sm:$0xf]
        %v2462 = vld [vmem:[#allocation5 + $0x288] sm:$0xf]
        %v2463 = vld [vmem:[#allocation5 + $0x28c] sm:$0xf]
        %v2464 = vld [vmem:[#allocation5 + $0x290] sm:$0xf]
        %v2465 = vld [vmem:[#allocation5 + $0x294] sm:$0xf]
        %v2466 = vld [vmem:[#allocation5 + $0x298] sm:$0xf]
        %v2467 = vld [vmem:[#allocation5 + $0x29c] sm:$0xf]
        %v2468 = vld [vmem:[#allocation5 + $0x2a0] sm:$0xf]
        %v2469 = vld [vmem:[#allocation5 + $0x2a4] sm:$0xf]
        %v2470 = vld [vmem:[#allocation5 + $0x2a8] sm:$0xf]
        %v2471 = vld [vmem:[#allocation5 + $0x2ac] sm:$0xf]
        %v2472 = vld [vmem:[#allocation5 + $0x2b0] sm:$0xf]
        %v2473 = vld [vmem:[#allocation5 + $0x2b4] sm:$0xf]
        %v2474 = vld [vmem:[#allocation5 + $0x2b8] sm:$0xf]
        %v2475 = vld [vmem:[#allocation5 + $0x2bc] sm:$0xf]
        %v2476 = vld [vmem:[#allocation5 + $0x2c0] sm:$0xf]
        %v2477 = vld [vmem:[#allocation5 + $0x2c4] sm:$0xf]
        %v2478 = vld [vmem:[#allocation5 + $0x2c8] sm:$0xf]
        %v2479 = vld [vmem:[#allocation5 + $0x2cc] sm:$0xf]
        %v2480 = vld [vmem:[#allocation5 + $0x2d0] sm:$0xf]
        %v2481 = vld [vmem:[#allocation5 + $0x2d4] sm:$0xf]
        %v2482 = vld [vmem:[#allocation5 + $0x2d8] sm:$0xf]
        %v2483 = vld [vmem:[#allocation5 + $0x2dc] sm:$0xf]
        %v2484 = vld [vmem:[#allocation5 + $0x2e0] sm:$0xf]
        %v2485 = vld [vmem:[#allocation5 + $0x2e4] sm:$0xf]
        %v2486 = vld [vmem:[#allocation5 + $0x2e8] sm:$0xf]
        %v2487 = vld [vmem:[#allocation5 + $0x2ec] sm:$0xf]
        %v2488 = vld [vmem:[#allocation5 + $0x2f0] sm:$0xf]
        %v2489 = vld [vmem:[#allocation5 + $0x2f4] sm:$0xf]
        %v2490 = vld [vmem:[#allocation5 + $0x2f8] sm:$0xf]
        %v2491 = vld [vmem:[#allocation5 + $0x2fc] sm:$0xf]
        %v2492 = vld [vmem:[#allocation5 + $0x300] sm:$0xf]
        %v2493 = vld [vmem:[#allocation5 + $0x304] sm:$0xf]
        %v2494 = vld [vmem:[#allocation5 + $0x308] sm:$0xf]
        %v2495 = vld [vmem:[#allocation5 + $0x30c] sm:$0xf]
        %v2496 = vld [vmem:[#allocation5 + $0x310] sm:$0xf]
        %v2497 = vld [vmem:[#allocation5 + $0x314] sm:$0xf]
        %v2498 = vld [vmem:[#allocation5 + $0x318] sm:$0xf]
        %v2499 = vld [vmem:[#allocation5 + $0x31c] sm:$0xf]
        %v2500 = vld [vmem:[#allocation5 + $0x320] sm:$0xf]
        %v2501 = vld [vmem:[#allocation5 + $0x324] sm:$0xf]
        %v2502 = vld [vmem:[#allocation5 + $0x328] sm:$0xf]
        %v2503 = vld [vmem:[#allocation5 + $0x32c] sm:$0xf]
        %v2504 = vld [vmem:[#allocation5 + $0x330] sm:$0xf]
        %v2505 = vld [vmem:[#allocation5 + $0x334] sm:$0xf]
        %v2506 = vld [vmem:[#allocation5 + $0x338] sm:$0xf]
        %v2507 = vld [vmem:[#allocation5 + $0x33c] sm:$0xf]
        %v2508 = vld [vmem:[#allocation5 + $0x340] sm:$0xf]
        %v2509 = vld [vmem:[#allocation5 + $0x344] sm:$0xf]
        %v2510 = vld [vmem:[#allocation5 + $0x348] sm:$0xf]
        %v2511 = vld [vmem:[#allocation5 + $0x34c] sm:$0xf]
        %v2512 = vld [vmem:[#allocation5 + $0x350] sm:$0xf]
        %v2513 = vld [vmem:[#allocation5 + $0x354] sm:$0xf]
        %v2514 = vld [vmem:[#allocation5 + $0x358] sm:$0xf]
        %v2515 = vld [vmem:[#allocation5 + $0x35c] sm:$0xf]
        %v2516 = vld [vmem:[#allocation5 + $0x360] sm:$0xf]
        %v2517 = vld [vmem:[#allocation5 + $0x364] sm:$0xf]
        %v2518 = vld [vmem:[#allocation5 + $0x368] sm:$0xf]
        %v2519 = vld [vmem:[#allocation5 + $0x36c] sm:$0xf]
        %v2520 = vld [vmem:[#allocation5 + $0x370] sm:$0xf]
        %v2521 = vld [vmem:[#allocation5 + $0x374] sm:$0xf]
        %v2522 = vld [vmem:[#allocation5 + $0x378] sm:$0xf]
        %v2523 = vld [vmem:[#allocation5 + $0x37c] sm:$0xf]
        %v2524 = vld [vmem:[#allocation5 + $0x380] sm:$0xf]
        %v2525 = vld [vmem:[#allocation5 + $0x384] sm:$0xf]
        %v2526 = vld [vmem:[#allocation5 + $0x388] sm:$0xf]
        %v2527 = vld [vmem:[#allocation5 + $0x38c] sm:$0xf]
        %v2528 = vld [vmem:[#allocation5 + $0x390] sm:$0xf]
        %v2529 = vld [vmem:[#allocation5 + $0x394] sm:$0xf]
        %v2530 = vld [vmem:[#allocation5 + $0x398] sm:$0xf]
        %v2531 = vld [vmem:[#allocation5 + $0x39c] sm:$0xf]
        %v2532 = vld [vmem:[#allocation5 + $0x3a0] sm:$0xf]
        %v2533 = vld [vmem:[#allocation5 + $0x3a4] sm:$0xf]
        %v2534 = vld [vmem:[#allocation5 + $0x3a8] sm:$0xf]
        %v2535 = vld [vmem:[#allocation5 + $0x3ac] sm:$0xf]
        %v2536 = vld [vmem:[#allocation5 + $0x3b0] sm:$0xf]
        %v2537 = vld [vmem:[#allocation5 + $0x3b4] sm:$0xf]
        %v2538 = vld [vmem:[#allocation5 + $0x3b8] sm:$0xf]
        %v2539 = vld [vmem:[#allocation5 + $0x3bc] sm:$0xf]
        %v2540 = vld [vmem:[#allocation5 + $0x3c0] sm:$0xf]
        %v2541 = vld [vmem:[#allocation5 + $0x3c4] sm:$0xf]
        %v2542 = vld [vmem:[#allocation5 + $0x3c8] sm:$0xf]
        %v2543 = vld [vmem:[#allocation5 + $0x3cc] sm:$0xf]
        %v2544 = vld [vmem:[#allocation5 + $0x3d0] sm:$0xf]
        %v2545 = vld [vmem:[#allocation5 + $0x3d4] sm:$0xf]
        %v2546 = vld [vmem:[#allocation5 + $0x3d8] sm:$0xf]
        %v2547 = vld [vmem:[#allocation5 + $0x3dc] sm:$0xf]
        %v2548 = vld [vmem:[#allocation5 + $0x3e0] sm:$0xf]
        %v2549 = vld [vmem:[#allocation5 + $0x3e4] sm:$0xf]
        %v2550 = vld [vmem:[#allocation5 + $0x3e8] sm:$0xf]
        %v2551 = vld [vmem:[#allocation5 + $0x3ec] sm:$0xf]
        %v2552 = vld [vmem:[#allocation5 + $0x3f0] sm:$0xf]
        %v2553 = vld [vmem:[#allocation5 + $0x3f4] sm:$0xf]
        %v2554 = vld [vmem:[#allocation5 + $0x3f8] sm:$0xf]
        %v2555 = vld [vmem:[#allocation5 + $0x3fc] sm:$0xf]
        %v2556 = vld [vmem:[%s9] sm:$0x1]
        %v2558 = vlaneseq
        %v2559 = vshrl.u32 %v2558, 7
        %v2560 = vsub.s32 0, %v2559
        %v2561 = vrot.slane %v2556, %v2560
        %v2819 = vunpack.c.l.b16 %v2300
        %v2820 = vunpack.c.l.b16 %v2301
        %v2821 = vunpack.c.l.b16 %v2302
        %v2822 = vunpack.c.l.b16 %v2303
        %v2823 = vunpack.c.l.b16 %v2304
        %v2824 = vunpack.c.l.b16 %v2305
        %v2825 = vunpack.c.l.b16 %v2306
        %v2826 = vunpack.c.l.b16 %v2307
        %v2827 = vunpack.c.l.b16 %v2308
        %v2828 = vunpack.c.l.b16 %v2309
        %v2829 = vunpack.c.l.b16 %v2310
        %v2830 = vunpack.c.l.b16 %v2311
        %v2831 = vunpack.c.l.b16 %v2312
        %v2832 = vunpack.c.l.b16 %v2313
        %v2833 = vunpack.c.l.b16 %v2314
        %v2834 = vunpack.c.l.b16 %v2315
        %v2835 = vunpack.c.l.b16 %v2316
        %v2836 = vunpack.c.l.b16 %v2317
        %v2837 = vunpack.c.l.b16 %v2318
        %v2838 = vunpack.c.l.b16 %v2319
        %v2839 = vunpack.c.l.b16 %v2320
        %v2840 = vunpack.c.l.b16 %v2321
        %v2841 = vunpack.c.l.b16 %v2322
        %v2842 = vunpack.c.l.b16 %v2323
        %v2843 = vunpack.c.l.b16 %v2324
        %v2844 = vunpack.c.l.b16 %v2325
        %v2845 = vunpack.c.l.b16 %v2326
        %v2846 = vunpack.c.l.b16 %v2327
        %v2847 = vunpack.c.l.b16 %v2328
        %v2848 = vunpack.c.l.b16 %v2329
        %v2849 = vunpack.c.l.b16 %v2330
        %v2850 = vunpack.c.l.b16 %v2331
        %v2851 = vunpack.c.l.b16 %v2332
        %v2852 = vunpack.c.l.b16 %v2333
        %v2853 = vunpack.c.l.b16 %v2334
        %v2854 = vunpack.c.l.b16 %v2335
        %v2855 = vunpack.c.l.b16 %v2336
        %v2856 = vunpack.c.l.b16 %v2337
        %v2857 = vunpack.c.l.b16 %v2338
        %v2858 = vunpack.c.l.b16 %v2339
        %v2859 = vunpack.c.l.b16 %v2340
        %v2860 = vunpack.c.l.b16 %v2341
        %v2861 = vunpack.c.l.b16 %v2342
        %v2862 = vunpack.c.l.b16 %v2343
        %v2863 = vunpack.c.l.b16 %v2344
        %v2864 = vunpack.c.l.b16 %v2345
        %v2865 = vunpack.c.l.b16 %v2346
        %v2866 = vunpack.c.l.b16 %v2347
        %v2867 = vunpack.c.l.b16 %v2348
        %v2868 = vunpack.c.l.b16 %v2349
        %v2869 = vunpack.c.l.b16 %v2350
        %v2870 = vunpack.c.l.b16 %v2351
        %v2871 = vunpack.c.l.b16 %v2352
        %v2872 = vunpack.c.l.b16 %v2353
        %v2873 = vunpack.c.l.b16 %v2354
        %v2874 = vunpack.c.l.b16 %v2355
        %v2875 = vunpack.c.l.b16 %v2356
        %v2876 = vunpack.c.l.b16 %v2357
        %v2877 = vunpack.c.l.b16 %v2358
        %v2878 = vunpack.c.l.b16 %v2359
        %v2879 = vunpack.c.l.b16 %v2360
        %v2880 = vunpack.c.l.b16 %v2361
        %v2881 = vunpack.c.l.b16 %v2362
        %v2882 = vunpack.c.l.b16 %v2363
        %v2883 = vunpack.c.l.b16 %v2364
        %v2884 = vunpack.c.l.b16 %v2365
        %v2885 = vunpack.c.l.b16 %v2366
        %v2886 = vunpack.c.l.b16 %v2367
        %v2887 = vunpack.c.l.b16 %v2368
        %v2888 = vunpack.c.l.b16 %v2369
        %v2889 = vunpack.c.l.b16 %v2370
        %v2890 = vunpack.c.l.b16 %v2371
        %v2891 = vunpack.c.l.b16 %v2372
        %v2892 = vunpack.c.l.b16 %v2373
        %v2893 = vunpack.c.l.b16 %v2374
        %v2894 = vunpack.c.l.b16 %v2375
        %v2895 = vunpack.c.l.b16 %v2376
        %v2896 = vunpack.c.l.b16 %v2377
        %v2897 = vunpack.c.l.b16 %v2378
        %v2898 = vunpack.c.l.b16 %v2379
        %v2899 = vunpack.c.l.b16 %v2380
        %v2900 = vunpack.c.l.b16 %v2381
        %v2901 = vunpack.c.l.b16 %v2382
        %v2902 = vunpack.c.l.b16 %v2383
        %v2903 = vunpack.c.l.b16 %v2384
        %v2904 = vunpack.c.l.b16 %v2385
        %v2905 = vunpack.c.l.b16 %v2386
        %v2906 = vunpack.c.l.b16 %v2387
        %v2907 = vunpack.c.l.b16 %v2388
        %v2908 = vunpack.c.l.b16 %v2389
        %v2909 = vunpack.c.l.b16 %v2390
        %v2910 = vunpack.c.l.b16 %v2391
        %v2911 = vunpack.c.l.b16 %v2392
        %v2912 = vunpack.c.l.b16 %v2393
        %v2913 = vunpack.c.l.b16 %v2394
        %v2914 = vunpack.c.l.b16 %v2395
        %v2915 = vunpack.c.l.b16 %v2396
        %v2916 = vunpack.c.l.b16 %v2397
        %v2917 = vunpack.c.l.b16 %v2398
        %v2918 = vunpack.c.l.b16 %v2399
        %v2919 = vunpack.c.l.b16 %v2400
        %v2920 = vunpack.c.l.b16 %v2401
        %v2921 = vunpack.c.l.b16 %v2402
        %v2922 = vunpack.c.l.b16 %v2403
        %v2923 = vunpack.c.l.b16 %v2404
        %v2924 = vunpack.c.l.b16 %v2405
        %v2925 = vunpack.c.l.b16 %v2406
        %v2926 = vunpack.c.l.b16 %v2407
        %v2927 = vunpack.c.l.b16 %v2408
        %v2928 = vunpack.c.l.b16 %v2409
        %v2929 = vunpack.c.l.b16 %v2410
        %v2930 = vunpack.c.l.b16 %v2411
        %v2931 = vunpack.c.l.b16 %v2412
        %v2932 = vunpack.c.l.b16 %v2413
        %v2933 = vunpack.c.l.b16 %v2414
        %v2934 = vunpack.c.l.b16 %v2415
        %v2935 = vunpack.c.l.b16 %v2416
        %v2936 = vunpack.c.l.b16 %v2417
        %v2937 = vunpack.c.l.b16 %v2418
        %v2938 = vunpack.c.l.b16 %v2419
        %v2939 = vunpack.c.l.b16 %v2420
        %v2940 = vunpack.c.l.b16 %v2421
        %v2941 = vunpack.c.l.b16 %v2422
        %v2942 = vunpack.c.l.b16 %v2423
        %v2943 = vunpack.c.l.b16 %v2424
        %v2944 = vunpack.c.l.b16 %v2425
        %v2945 = vunpack.c.l.b16 %v2426
        %v2946 = vunpack.c.l.b16 %v2427
        %v2947 = vunpack.c.l.b16 %v2428
        %v2948 = vunpack.c.l.b16 %v2429
        %v2949 = vunpack.c.l.b16 %v2430
        %v2950 = vunpack.c.l.b16 %v2431
        %v2951 = vunpack.c.l.b16 %v2432
        %v2952 = vunpack.c.l.b16 %v2433
        %v2953 = vunpack.c.l.b16 %v2434
        %v2954 = vunpack.c.l.b16 %v2435
        %v2955 = vunpack.c.l.b16 %v2436
        %v2956 = vunpack.c.l.b16 %v2437
        %v2957 = vunpack.c.l.b16 %v2438
        %v2958 = vunpack.c.l.b16 %v2439
        %v2959 = vunpack.c.l.b16 %v2440
        %v2960 = vunpack.c.l.b16 %v2441
        %v2961 = vunpack.c.l.b16 %v2442
        %v2962 = vunpack.c.l.b16 %v2443
        %v2963 = vunpack.c.l.b16 %v2444
        %v2964 = vunpack.c.l.b16 %v2445
        %v2965 = vunpack.c.l.b16 %v2446
        %v2966 = vunpack.c.l.b16 %v2447
        %v2967 = vunpack.c.l.b16 %v2448
        %v2968 = vunpack.c.l.b16 %v2449
        %v2969 = vunpack.c.l.b16 %v2450
        %v2970 = vunpack.c.l.b16 %v2451
        %v2971 = vunpack.c.l.b16 %v2452
        %v2972 = vunpack.c.l.b16 %v2453
        %v2973 = vunpack.c.l.b16 %v2454
        %v2974 = vunpack.c.l.b16 %v2455
        %v2975 = vunpack.c.l.b16 %v2456
        %v2976 = vunpack.c.l.b16 %v2457
        %v2977 = vunpack.c.l.b16 %v2458
        %v2978 = vunpack.c.l.b16 %v2459
        %v2979 = vunpack.c.l.b16 %v2460
        %v2980 = vunpack.c.l.b16 %v2461
        %v2981 = vunpack.c.l.b16 %v2462
        %v2982 = vunpack.c.l.b16 %v2463
        %v2983 = vunpack.c.l.b16 %v2464
        %v2984 = vunpack.c.l.b16 %v2465
        %v2985 = vunpack.c.l.b16 %v2466
        %v2986 = vunpack.c.l.b16 %v2467
        %v2987 = vunpack.c.l.b16 %v2468
        %v2988 = vunpack.c.l.b16 %v2469
        %v2989 = vunpack.c.l.b16 %v2470
        %v2990 = vunpack.c.l.b16 %v2471
        %v2991 = vunpack.c.l.b16 %v2472
        %v2992 = vunpack.c.l.b16 %v2473
        %v2993 = vunpack.c.l.b16 %v2474
        %v2994 = vunpack.c.l.b16 %v2475
        %v2995 = vunpack.c.l.b16 %v2476
        %v2996 = vunpack.c.l.b16 %v2477
        %v2997 = vunpack.c.l.b16 %v2478
        %v2998 = vunpack.c.l.b16 %v2479
        %v2999 = vunpack.c.l.b16 %v2480
        %v3000 = vunpack.c.l.b16 %v2481
        %v3001 = vunpack.c.l.b16 %v2482
        %v3002 = vunpack.c.l.b16 %v2483
        %v3003 = vunpack.c.l.b16 %v2484
        %v3004 = vunpack.c.l.b16 %v2485
        %v3005 = vunpack.c.l.b16 %v2486
        %v3006 = vunpack.c.l.b16 %v2487
        %v3007 = vunpack.c.l.b16 %v2488
        %v3008 = vunpack.c.l.b16 %v2489
        %v3009 = vunpack.c.l.b16 %v2490
        %v3010 = vunpack.c.l.b16 %v2491
        %v3011 = vunpack.c.l.b16 %v2492
        %v3012 = vunpack.c.l.b16 %v2493
        %v3013 = vunpack.c.l.b16 %v2494
        %v3014 = vunpack.c.l.b16 %v2495
        %v3015 = vunpack.c.l.b16 %v2496
        %v3016 = vunpack.c.l.b16 %v2497
        %v3017 = vunpack.c.l.b16 %v2498
        %v3018 = vunpack.c.l.b16 %v2499
        %v3019 = vunpack.c.l.b16 %v2500
        %v3020 = vunpack.c.l.b16 %v2501
        %v3021 = vunpack.c.l.b16 %v2502
        %v3022 = vunpack.c.l.b16 %v2503
        %v3023 = vunpack.c.l.b16 %v2504
        %v3024 = vunpack.c.l.b16 %v2505
        %v3025 = vunpack.c.l.b16 %v2506
        %v3026 = vunpack.c.l.b16 %v2507
        %v3027 = vunpack.c.l.b16 %v2508
        %v3028 = vunpack.c.l.b16 %v2509
        %v3029 = vunpack.c.l.b16 %v2510
        %v3030 = vunpack.c.l.b16 %v2511
        %v3031 = vunpack.c.l.b16 %v2512
        %v3032 = vunpack.c.l.b16 %v2513
        %v3033 = vunpack.c.l.b16 %v2514
        %v3034 = vunpack.c.l.b16 %v2515
        %v3035 = vunpack.c.l.b16 %v2516
        %v3036 = vunpack.c.l.b16 %v2517
        %v3037 = vunpack.c.l.b16 %v2518
        %v3038 = vunpack.c.l.b16 %v2519
        %v3039 = vunpack.c.l.b16 %v2520
        %v3040 = vunpack.c.l.b16 %v2521
        %v3041 = vunpack.c.l.b16 %v2522
        %v3042 = vunpack.c.l.b16 %v2523
        %v3043 = vunpack.c.l.b16 %v2524
        %v3044 = vunpack.c.l.b16 %v2525
        %v3045 = vunpack.c.l.b16 %v2526
        %v3046 = vunpack.c.l.b16 %v2527
        %v3047 = vunpack.c.l.b16 %v2528
        %v3048 = vunpack.c.l.b16 %v2529
        %v3049 = vunpack.c.l.b16 %v2530
        %v3050 = vunpack.c.l.b16 %v2531
        %v3051 = vunpack.c.l.b16 %v2532
        %v3052 = vunpack.c.l.b16 %v2533
        %v3053 = vunpack.c.l.b16 %v2534
        %v3054 = vunpack.c.l.b16 %v2535
        %v3055 = vunpack.c.l.b16 %v2536
        %v3056 = vunpack.c.l.b16 %v2537
        %v3057 = vunpack.c.l.b16 %v2538
        %v3058 = vunpack.c.l.b16 %v2539
        %v3059 = vunpack.c.l.b16 %v2540
        %v3060 = vunpack.c.l.b16 %v2541
        %v3061 = vunpack.c.l.b16 %v2542
        %v3062 = vunpack.c.l.b16 %v2543
        %v3063 = vunpack.c.l.b16 %v2544
        %v3064 = vunpack.c.l.b16 %v2545
        %v3065 = vunpack.c.l.b16 %v2546
        %v3066 = vunpack.c.l.b16 %v2547
        %v3067 = vunpack.c.l.b16 %v2548
        %v3068 = vunpack.c.l.b16 %v2549
        %v3069 = vunpack.c.l.b16 %v2550
        %v3070 = vunpack.c.l.b16 %v2551
        %v3071 = vunpack.c.l.b16 %v2552
        %v3072 = vunpack.c.l.b16 %v2553
        %v3073 = vunpack.c.l.b16 %v2554
        %v3074 = vunpack.c.l.b16 %v2555
        %v3075 = vpack.c.b16 %v2820, %v2819
        %v3076 = vpack.c.b16 %v2822, %v2821
        %v3077 = vpack.c.b16 %v2824, %v2823
        %v3078 = vpack.c.b16 %v2826, %v2825
        %v3079 = vpack.c.b16 %v2828, %v2827
        %v3080 = vpack.c.b16 %v2830, %v2829
        %v3081 = vpack.c.b16 %v2832, %v2831
        %v3082 = vpack.c.b16 %v2834, %v2833
        %v3083 = vpack.c.b16 %v2836, %v2835
        %v3084 = vpack.c.b16 %v2838, %v2837
        %v3085 = vpack.c.b16 %v2840, %v2839
        %v3086 = vpack.c.b16 %v2842, %v2841
        %v3087 = vpack.c.b16 %v2844, %v2843
        %v3088 = vpack.c.b16 %v2846, %v2845
        %v3089 = vpack.c.b16 %v2848, %v2847
        %v3090 = vpack.c.b16 %v2850, %v2849
        %v3091 = vpack.c.b16 %v2852, %v2851
        %v3092 = vpack.c.b16 %v2854, %v2853
        %v3093 = vpack.c.b16 %v2856, %v2855
        %v3094 = vpack.c.b16 %v2858, %v2857
        %v3095 = vpack.c.b16 %v2860, %v2859
        %v3096 = vpack.c.b16 %v2862, %v2861
        %v3097 = vpack.c.b16 %v2864, %v2863
        %v3098 = vpack.c.b16 %v2866, %v2865
        %v3099 = vpack.c.b16 %v2868, %v2867
        %v3100 = vpack.c.b16 %v2870, %v2869
        %v3101 = vpack.c.b16 %v2872, %v2871
        %v3102 = vpack.c.b16 %v2874, %v2873
        %v3103 = vpack.c.b16 %v2876, %v2875
        %v3104 = vpack.c.b16 %v2878, %v2877
        %v3105 = vpack.c.b16 %v2880, %v2879
        %v3106 = vpack.c.b16 %v2882, %v2881
        %v3107 = vpack.c.b16 %v2884, %v2883
        %v3108 = vpack.c.b16 %v2886, %v2885
        %v3109 = vpack.c.b16 %v2888, %v2887
        %v3110 = vpack.c.b16 %v2890, %v2889
        %v3111 = vpack.c.b16 %v2892, %v2891
        %v3112 = vpack.c.b16 %v2894, %v2893
        %v3113 = vpack.c.b16 %v2896, %v2895
        %v3114 = vpack.c.b16 %v2898, %v2897
        %v3115 = vpack.c.b16 %v2900, %v2899
        %v3116 = vpack.c.b16 %v2902, %v2901
        %v3117 = vpack.c.b16 %v2904, %v2903
        %v3118 = vpack.c.b16 %v2906, %v2905
        %v3119 = vpack.c.b16 %v2908, %v2907
        %v3120 = vpack.c.b16 %v2910, %v2909
        %v3121 = vpack.c.b16 %v2912, %v2911
        %v3122 = vpack.c.b16 %v2914, %v2913
        %v3123 = vpack.c.b16 %v2916, %v2915
        %v3124 = vpack.c.b16 %v2918, %v2917
        %v3125 = vpack.c.b16 %v2920, %v2919
        %v3126 = vpack.c.b16 %v2922, %v2921
        %v3127 = vpack.c.b16 %v2924, %v2923
        %v3128 = vpack.c.b16 %v2926, %v2925
        %v3129 = vpack.c.b16 %v2928, %v2927
        %v3130 = vpack.c.b16 %v2930, %v2929
        %v3131 = vpack.c.b16 %v2932, %v2931
        %v3132 = vpack.c.b16 %v2934, %v2933
        %v3133 = vpack.c.b16 %v2936, %v2935
        %v3134 = vpack.c.b16 %v2938, %v2937
        %v3135 = vpack.c.b16 %v2940, %v2939
        %v3136 = vpack.c.b16 %v2942, %v2941
        %v3137 = vpack.c.b16 %v2944, %v2943
        %v3138 = vpack.c.b16 %v2946, %v2945
        %v3139 = vpack.c.b16 %v2948, %v2947
        %v3140 = vpack.c.b16 %v2950, %v2949
        %v3141 = vpack.c.b16 %v2952, %v2951
        %v3142 = vpack.c.b16 %v2954, %v2953
        %v3143 = vpack.c.b16 %v2956, %v2955
        %v3144 = vpack.c.b16 %v2958, %v2957
        %v3145 = vpack.c.b16 %v2960, %v2959
        %v3146 = vpack.c.b16 %v2962, %v2961
        %v3147 = vpack.c.b16 %v2964, %v2963
        %v3148 = vpack.c.b16 %v2966, %v2965
        %v3149 = vpack.c.b16 %v2968, %v2967
        %v3150 = vpack.c.b16 %v2970, %v2969
        %v3151 = vpack.c.b16 %v2972, %v2971
        %v3152 = vpack.c.b16 %v2974, %v2973
        %v3153 = vpack.c.b16 %v2976, %v2975
        %v3154 = vpack.c.b16 %v2978, %v2977
        %v3155 = vpack.c.b16 %v2980, %v2979
        %v3156 = vpack.c.b16 %v2982, %v2981
        %v3157 = vpack.c.b16 %v2984, %v2983
        %v3158 = vpack.c.b16 %v2986, %v2985
        %v3159 = vpack.c.b16 %v2988, %v2987
        %v3160 = vpack.c.b16 %v2990, %v2989
        %v3161 = vpack.c.b16 %v2992, %v2991
        %v3162 = vpack.c.b16 %v2994, %v2993
        %v3163 = vpack.c.b16 %v2996, %v2995
        %v3164 = vpack.c.b16 %v2998, %v2997
        %v3165 = vpack.c.b16 %v3000, %v2999
        %v3166 = vpack.c.b16 %v3002, %v3001
        %v3167 = vpack.c.b16 %v3004, %v3003
        %v3168 = vpack.c.b16 %v3006, %v3005
        %v3169 = vpack.c.b16 %v3008, %v3007
        %v3170 = vpack.c.b16 %v3010, %v3009
        %v3171 = vpack.c.b16 %v3012, %v3011
        %v3172 = vpack.c.b16 %v3014, %v3013
        %v3173 = vpack.c.b16 %v3016, %v3015
        %v3174 = vpack.c.b16 %v3018, %v3017
        %v3175 = vpack.c.b16 %v3020, %v3019
        %v3176 = vpack.c.b16 %v3022, %v3021
        %v3177 = vpack.c.b16 %v3024, %v3023
        %v3178 = vpack.c.b16 %v3026, %v3025
        %v3179 = vpack.c.b16 %v3028, %v3027
        %v3180 = vpack.c.b16 %v3030, %v3029
        %v3181 = vpack.c.b16 %v3032, %v3031
        %v3182 = vpack.c.b16 %v3034, %v3033
        %v3183 = vpack.c.b16 %v3036, %v3035
        %v3184 = vpack.c.b16 %v3038, %v3037
        %v3185 = vpack.c.b16 %v3040, %v3039
        %v3186 = vpack.c.b16 %v3042, %v3041
        %v3187 = vpack.c.b16 %v3044, %v3043
        %v3188 = vpack.c.b16 %v3046, %v3045
        %v3189 = vpack.c.b16 %v3048, %v3047
        %v3190 = vpack.c.b16 %v3050, %v3049
        %v3191 = vpack.c.b16 %v3052, %v3051
        %v3192 = vpack.c.b16 %v3054, %v3053
        %v3193 = vpack.c.b16 %v3056, %v3055
        %v3194 = vpack.c.b16 %v3058, %v3057
        %v3195 = vpack.c.b16 %v3060, %v3059
        %v3196 = vpack.c.b16 %v3062, %v3061
        %v3197 = vpack.c.b16 %v3064, %v3063
        %v3198 = vpack.c.b16 %v3066, %v3065
        %v3199 = vpack.c.b16 %v3068, %v3067
        %v3200 = vpack.c.b16 %v3070, %v3069
        %v3201 = vpack.c.b16 %v3072, %v3071
        %v3202 = vpack.c.b16 %v3074, %v3073
        %3331 = vmatprep.subr.bf16.mxu0 0
        %3332 = vmatpush1.bf16.msra.mxu0 %v3082
        %3333 = vmatprep.subr.bf16.mxu0 0
        %3334 = vmatpush1.bf16.msra.mxu0 %v3081
        %3335 = vmatprep.subr.bf16.mxu0 0
        %3336 = vmatpush1.bf16.msra.mxu0 %v3080
        %3337 = vmatprep.subr.bf16.mxu0 0
        %3338 = vmatpush1.bf16.msra.mxu0 %v3079
        %3339 = vmatprep.subr.bf16.mxu0 0
        %3340 = vmatpush1.bf16.msra.mxu0 %v3078
        %3341 = vmatprep.subr.bf16.mxu0 0
        %3342 = vmatpush1.bf16.msra.mxu0 %v3077
        %3343 = vmatprep.subr.bf16.mxu0 0
        %3344 = vmatpush1.bf16.msra.mxu0 %v3076
        %3345 = vmatprep.subr.bf16.mxu0 0
        %3346 = vmatpush1.bf16.msra.mxu0 %v3075
        %3347 = vmatprep.subr.bf16.mxu0 0
        %3348 = vmatpush2.bf16.msra.mxu0 %v3090
        %3349 = vmatprep.subr.bf16.mxu0 0
        %3350 = vmatpush2.bf16.msra.mxu0 %v3089
        %3351 = vmatprep.subr.bf16.mxu0 0
        %3352 = vmatpush2.bf16.msra.mxu0 %v3088
        %3353 = vmatprep.subr.bf16.mxu0 0
        %3354 = vmatpush2.bf16.msra.mxu0 %v3087
        %3355 = vmatprep.subr.bf16.mxu0 0
        %3356 = vmatpush2.bf16.msra.mxu0 %v3086
        %3357 = vmatprep.subr.bf16.mxu0 0
        %3358 = vmatpush2.bf16.msra.mxu0 %v3085
        %3359 = vmatprep.subr.bf16.mxu0 0
        %3360 = vmatpush2.bf16.msra.mxu0 %v3084
        %3361 = vmatprep.subr.bf16.mxu0 0
        %3362 = vmatpush2.bf16.msra.mxu0 %v3083
        %3363 = vmatprep.mubr.bf16.mxu0 %v2285
        %3364 = vmatmul.mubr.bf16.gmra.mxu0 %v2284
        %v3365 = vpop.f32.mrf.mxu0
        %v3366 = vadd.f32 %v2561, %v3365
        %v3367 = vpop.f32.mrf.mxu0
        %v3368 = vpop.f32.mrf.mxu0
        %v3369 = vpop.f32.mrf.mxu0
        %3370 = vdwg.mxu0
        %3371 = vmatprep.subr.bf16.mxu0 0
        %3372 = vmatpush1.bf16.msra.mxu0 %v3098
        %3373 = vmatprep.subr.bf16.mxu0 0
        %3374 = vmatpush1.bf16.msra.mxu0 %v3097
        %3375 = vmatprep.subr.bf16.mxu0 0
        %3376 = vmatpush1.bf16.msra.mxu0 %v3096
        %3377 = vmatprep.subr.bf16.mxu0 0
        %3378 = vmatpush1.bf16.msra.mxu0 %v3095
        %3379 = vmatprep.subr.bf16.mxu0 0
        %3380 = vmatpush1.bf16.msra.mxu0 %v3094
        %3381 = vmatprep.subr.bf16.mxu0 0
        %3382 = vmatpush1.bf16.msra.mxu0 %v3093
        %3383 = vmatprep.subr.bf16.mxu0 0
        %3384 = vmatpush1.bf16.msra.mxu0 %v3092
        %3385 = vmatprep.subr.bf16.mxu0 0
        %3386 = vmatpush1.bf16.msra.mxu0 %v3091
        %3387 = vmatprep.subr.bf16.mxu0 0
        %3388 = vmatpush2.bf16.msra.mxu0 %v3106
        %3389 = vmatprep.subr.bf16.mxu0 0
        %3390 = vmatpush2.bf16.msra.mxu0 %v3105
        %3391 = vmatprep.subr.bf16.mxu0 0
        %3392 = vmatpush2.bf16.msra.mxu0 %v3104
        %3393 = vmatprep.subr.bf16.mxu0 0
        %3394 = vmatpush2.bf16.msra.mxu0 %v3103
        %3395 = vmatprep.subr.bf16.mxu0 0
        %3396 = vmatpush2.bf16.msra.mxu0 %v3102
        %3397 = vmatprep.subr.bf16.mxu0 0
        %3398 = vmatpush2.bf16.msra.mxu0 %v3101
        %3399 = vmatprep.subr.bf16.mxu0 0
        %3400 = vmatpush2.bf16.msra.mxu0 %v3100
        %3401 = vmatprep.subr.bf16.mxu0 0
        %3402 = vmatpush2.bf16.msra.mxu0 %v3099
        %3403 = vmatprep.mubr.bf16.mxu0 %v2287
        %3404 = vmatmul.mubr.bf16.gmra.mxu0 %v2286
        %v3405 = vpop.f32.mrf.mxu0
        %v3406 = vadd.f32 %v3366, %v3405
        %v3407 = vpop.f32.mrf.mxu0
        %v3408 = vpop.f32.mrf.mxu0
        %v3409 = vpop.f32.mrf.mxu0
        %3410 = vdwg.mxu0
        %3411 = vmatprep.subr.bf16.mxu0 0
        %3412 = vmatpush1.bf16.msra.mxu0 %v3114
        %3413 = vmatprep.subr.bf16.mxu0 0
        %3414 = vmatpush1.bf16.msra.mxu0 %v3113
        %3415 = vmatprep.subr.bf16.mxu0 0
        %3416 = vmatpush1.bf16.msra.mxu0 %v3112
        %3417 = vmatprep.subr.bf16.mxu0 0
        %3418 = vmatpush1.bf16.msra.mxu0 %v3111
        %3419 = vmatprep.subr.bf16.mxu0 0
        %3420 = vmatpush1.bf16.msra.mxu0 %v3110
        %3421 = vmatprep.subr.bf16.mxu0 0
        %3422 = vmatpush1.bf16.msra.mxu0 %v3109
        %3423 = vmatprep.subr.bf16.mxu0 0
        %3424 = vmatpush1.bf16.msra.mxu0 %v3108
        %3425 = vmatprep.subr.bf16.mxu0 0
        %3426 = vmatpush1.bf16.msra.mxu0 %v3107
        %3427 = vmatprep.subr.bf16.mxu0 0
        %3428 = vmatpush2.bf16.msra.mxu0 %v3122
        %3429 = vmatprep.subr.bf16.mxu0 0
        %3430 = vmatpush2.bf16.msra.mxu0 %v3121
        %3431 = vmatprep.subr.bf16.mxu0 0
        %3432 = vmatpush2.bf16.msra.mxu0 %v3120
        %3433 = vmatprep.subr.bf16.mxu0 0
        %3434 = vmatpush2.bf16.msra.mxu0 %v3119
        %3435 = vmatprep.subr.bf16.mxu0 0
        %3436 = vmatpush2.bf16.msra.mxu0 %v3118
        %3437 = vmatprep.subr.bf16.mxu0 0
        %3438 = vmatpush2.bf16.msra.mxu0 %v3117
        %3439 = vmatprep.subr.bf16.mxu0 0
        %3440 = vmatpush2.bf16.msra.mxu0 %v3116
        %3441 = vmatprep.subr.bf16.mxu0 0
        %3442 = vmatpush2.bf16.msra.mxu0 %v3115
        %3443 = vmatprep.mubr.bf16.mxu0 %v2289
        %3444 = vmatmul.mubr.bf16.gmra.mxu0 %v2288
        %v3445 = vpop.f32.mrf.mxu0
        %v3446 = vadd.f32 %v3406, %v3445
        %v3447 = vpop.f32.mrf.mxu0
        %v3448 = vpop.f32.mrf.mxu0
        %v3449 = vpop.f32.mrf.mxu0
        %3450 = vdwg.mxu0
        %3451 = vmatprep.subr.bf16.mxu0 0
        %3452 = vmatpush1.bf16.msra.mxu0 %v3130
        %3453 = vmatprep.subr.bf16.mxu0 0
        %3454 = vmatpush1.bf16.msra.mxu0 %v3129
        %3455 = vmatprep.subr.bf16.mxu0 0
        %3456 = vmatpush1.bf16.msra.mxu0 %v3128
        %3457 = vmatprep.subr.bf16.mxu0 0
        %3458 = vmatpush1.bf16.msra.mxu0 %v3127
        %3459 = vmatprep.subr.bf16.mxu0 0
        %3460 = vmatpush1.bf16.msra.mxu0 %v3126
        %3461 = vmatprep.subr.bf16.mxu0 0
        %3462 = vmatpush1.bf16.msra.mxu0 %v3125
        %3463 = vmatprep.subr.bf16.mxu0 0
        %3464 = vmatpush1.bf16.msra.mxu0 %v3124
        %3465 = vmatprep.subr.bf16.mxu0 0
        %3466 = vmatpush1.bf16.msra.mxu0 %v3123
        %3467 = vmatprep.subr.bf16.mxu0 0
        %3468 = vmatpush2.bf16.msra.mxu0 %v3138
        %3469 = vmatprep.subr.bf16.mxu0 0
        %3470 = vmatpush2.bf16.msra.mxu0 %v3137
        %3471 = vmatprep.subr.bf16.mxu0 0
        %3472 = vmatpush2.bf16.msra.mxu0 %v3136
        %3473 = vmatprep.subr.bf16.mxu0 0
        %3474 = vmatpush2.bf16.msra.mxu0 %v3135
        %3475 = vmatprep.subr.bf16.mxu0 0
        %3476 = vmatpush2.bf16.msra.mxu0 %v3134
        %3477 = vmatprep.subr.bf16.mxu0 0
        %3478 = vmatpush2.bf16.msra.mxu0 %v3133
        %3479 = vmatprep.subr.bf16.mxu0 0
        %3480 = vmatpush2.bf16.msra.mxu0 %v3132
        %3481 = vmatprep.subr.bf16.mxu0 0
        %3482 = vmatpush2.bf16.msra.mxu0 %v3131
        %3483 = vmatprep.mubr.bf16.mxu0 %v2291
        %3484 = vmatmul.mubr.bf16.gmra.mxu0 %v2290
        %v3485 = vpop.f32.mrf.mxu0
        %v3486 = vadd.f32 %v3446, %v3485
        %v3487 = vpop.f32.mrf.mxu0
        %v3488 = vpop.f32.mrf.mxu0
        %v3489 = vpop.f32.mrf.mxu0
        %3490 = vdwg.mxu0
        %3491 = vmatprep.subr.bf16.mxu0 0
        %3492 = vmatpush1.bf16.msra.mxu0 %v3146
        %3493 = vmatprep.subr.bf16.mxu0 0
        %3494 = vmatpush1.bf16.msra.mxu0 %v3145
        %3495 = vmatprep.subr.bf16.mxu0 0
        %3496 = vmatpush1.bf16.msra.mxu0 %v3144
        %3497 = vmatprep.subr.bf16.mxu0 0
        %3498 = vmatpush1.bf16.msra.mxu0 %v3143
        %3499 = vmatprep.subr.bf16.mxu0 0
        %3500 = vmatpush1.bf16.msra.mxu0 %v3142
        %3501 = vmatprep.subr.bf16.mxu0 0
        %3502 = vmatpush1.bf16.msra.mxu0 %v3141
        %3503 = vmatprep.subr.bf16.mxu0 0
        %3504 = vmatpush1.bf16.msra.mxu0 %v3140
        %3505 = vmatprep.subr.bf16.mxu0 0
        %3506 = vmatpush1.bf16.msra.mxu0 %v3139
        %3507 = vmatprep.subr.bf16.mxu0 0
        %3508 = vmatpush2.bf16.msra.mxu0 %v3154
        %3509 = vmatprep.subr.bf16.mxu0 0
        %3510 = vmatpush2.bf16.msra.mxu0 %v3153
        %3511 = vmatprep.subr.bf16.mxu0 0
        %3512 = vmatpush2.bf16.msra.mxu0 %v3152
        %3513 = vmatprep.subr.bf16.mxu0 0
        %3514 = vmatpush2.bf16.msra.mxu0 %v3151
        %3515 = vmatprep.subr.bf16.mxu0 0
        %3516 = vmatpush2.bf16.msra.mxu0 %v3150
        %3517 = vmatprep.subr.bf16.mxu0 0
        %3518 = vmatpush2.bf16.msra.mxu0 %v3149
        %3519 = vmatprep.subr.bf16.mxu0 0
        %3520 = vmatpush2.bf16.msra.mxu0 %v3148
        %3521 = vmatprep.subr.bf16.mxu0 0
        %3522 = vmatpush2.bf16.msra.mxu0 %v3147
        %3523 = vmatprep.mubr.bf16.mxu0 %v2293
        %3524 = vmatmul.mubr.bf16.gmra.mxu0 %v2292
        %v3525 = vpop.f32.mrf.mxu0
        %v3526 = vadd.f32 %v3486, %v3525
        %v3527 = vpop.f32.mrf.mxu0
        %v3528 = vpop.f32.mrf.mxu0
        %v3529 = vpop.f32.mrf.mxu0
        %3530 = vdwg.mxu0
        %3531 = vmatprep.subr.bf16.mxu0 0
        %3532 = vmatpush1.bf16.msra.mxu0 %v3162
        %3533 = vmatprep.subr.bf16.mxu0 0
        %3534 = vmatpush1.bf16.msra.mxu0 %v3161
        %3535 = vmatprep.subr.bf16.mxu0 0
        %3536 = vmatpush1.bf16.msra.mxu0 %v3160
        %3537 = vmatprep.subr.bf16.mxu0 0
        %3538 = vmatpush1.bf16.msra.mxu0 %v3159
        %3539 = vmatprep.subr.bf16.mxu0 0
        %3540 = vmatpush1.bf16.msra.mxu0 %v3158
        %3541 = vmatprep.subr.bf16.mxu0 0
        %3542 = vmatpush1.bf16.msra.mxu0 %v3157
        %3543 = vmatprep.subr.bf16.mxu0 0
        %3544 = vmatpush1.bf16.msra.mxu0 %v3156
        %3545 = vmatprep.subr.bf16.mxu0 0
        %3546 = vmatpush1.bf16.msra.mxu0 %v3155
        %3547 = vmatprep.subr.bf16.mxu0 0
        %3548 = vmatpush2.bf16.msra.mxu0 %v3170
        %3549 = vmatprep.subr.bf16.mxu0 0
        %3550 = vmatpush2.bf16.msra.mxu0 %v3169
        %3551 = vmatprep.subr.bf16.mxu0 0
        %3552 = vmatpush2.bf16.msra.mxu0 %v3168
        %3553 = vmatprep.subr.bf16.mxu0 0
        %3554 = vmatpush2.bf16.msra.mxu0 %v3167
        %3555 = vmatprep.subr.bf16.mxu0 0
        %3556 = vmatpush2.bf16.msra.mxu0 %v3166
        %3557 = vmatprep.subr.bf16.mxu0 0
        %3558 = vmatpush2.bf16.msra.mxu0 %v3165
        %3559 = vmatprep.subr.bf16.mxu0 0
        %3560 = vmatpush2.bf16.msra.mxu0 %v3164
        %3561 = vmatprep.subr.bf16.mxu0 0
        %3562 = vmatpush2.bf16.msra.mxu0 %v3163
        %3563 = vmatprep.mubr.bf16.mxu0 %v2295
        %3564 = vmatmul.mubr.bf16.gmra.mxu0 %v2294
        %v3565 = vpop.f32.mrf.mxu0
        %v3566 = vadd.f32 %v3526, %v3565
        %v3567 = vpop.f32.mrf.mxu0
        %v3568 = vpop.f32.mrf.mxu0
        %v3569 = vpop.f32.mrf.mxu0
        %3570 = vdwg.mxu0
        %3571 = vmatprep.subr.bf16.mxu0 0
        %3572 = vmatpush1.bf16.msra.mxu0 %v3178
        %3573 = vmatprep.subr.bf16.mxu0 0
        %3574 = vmatpush1.bf16.msra.mxu0 %v3177
        %3575 = vmatprep.subr.bf16.mxu0 0
        %3576 = vmatpush1.bf16.msra.mxu0 %v3176
        %3577 = vmatprep.subr.bf16.mxu0 0
        %3578 = vmatpush1.bf16.msra.mxu0 %v3175
        %3579 = vmatprep.subr.bf16.mxu0 0
        %3580 = vmatpush1.bf16.msra.mxu0 %v3174
        %3581 = vmatprep.subr.bf16.mxu0 0
        %3582 = vmatpush1.bf16.msra.mxu0 %v3173
        %3583 = vmatprep.subr.bf16.mxu0 0
        %3584 = vmatpush1.bf16.msra.mxu0 %v3172
        %3585 = vmatprep.subr.bf16.mxu0 0
        %3586 = vmatpush1.bf16.msra.mxu0 %v3171
        %3587 = vmatprep.subr.bf16.mxu0 0
        %3588 = vmatpush2.bf16.msra.mxu0 %v3186
        %3589 = vmatprep.subr.bf16.mxu0 0
        %3590 = vmatpush2.bf16.msra.mxu0 %v3185
        %3591 = vmatprep.subr.bf16.mxu0 0
        %3592 = vmatpush2.bf16.msra.mxu0 %v3184
        %3593 = vmatprep.subr.bf16.mxu0 0
        %3594 = vmatpush2.bf16.msra.mxu0 %v3183
        %3595 = vmatprep.subr.bf16.mxu0 0
        %3596 = vmatpush2.bf16.msra.mxu0 %v3182
        %3597 = vmatprep.subr.bf16.mxu0 0
        %3598 = vmatpush2.bf16.msra.mxu0 %v3181
        %3599 = vmatprep.subr.bf16.mxu0 0
        %3600 = vmatpush2.bf16.msra.mxu0 %v3180
        %3601 = vmatprep.subr.bf16.mxu0 0
        %3602 = vmatpush2.bf16.msra.mxu0 %v3179
        %3603 = vmatprep.mubr.bf16.mxu0 %v2297
        %3604 = vmatmul.mubr.bf16.gmra.mxu0 %v2296
        %v3605 = vpop.f32.mrf.mxu0
        %v3606 = vadd.f32 %v3566, %v3605
        %v3607 = vpop.f32.mrf.mxu0
        %v3608 = vpop.f32.mrf.mxu0
        %v3609 = vpop.f32.mrf.mxu0
        %3610 = vdwg.mxu0
        %3611 = vmatprep.subr.bf16.mxu0 0
        %3612 = vmatpush1.bf16.msra.mxu0 %v3194
        %3613 = vmatprep.subr.bf16.mxu0 0
        %3614 = vmatpush1.bf16.msra.mxu0 %v3193
        %3615 = vmatprep.subr.bf16.mxu0 0
        %3616 = vmatpush1.bf16.msra.mxu0 %v3192
        %3617 = vmatprep.subr.bf16.mxu0 0
        %3618 = vmatpush1.bf16.msra.mxu0 %v3191
        %3619 = vmatprep.subr.bf16.mxu0 0
        %3620 = vmatpush1.bf16.msra.mxu0 %v3190
        %3621 = vmatprep.subr.bf16.mxu0 0
        %3622 = vmatpush1.bf16.msra.mxu0 %v3189
        %3623 = vmatprep.subr.bf16.mxu0 0
        %3624 = vmatpush1.bf16.msra.mxu0 %v3188
        %3625 = vmatprep.subr.bf16.mxu0 0
        %3626 = vmatpush1.bf16.msra.mxu0 %v3187
        %3627 = vmatprep.subr.bf16.mxu0 0
        %3628 = vmatpush2.bf16.msra.mxu0 %v3202
        %3629 = vmatprep.subr.bf16.mxu0 0
        %3630 = vmatpush2.bf16.msra.mxu0 %v3201
        %3631 = vmatprep.subr.bf16.mxu0 0
        %3632 = vmatpush2.bf16.msra.mxu0 %v3200
        %3633 = vmatprep.subr.bf16.mxu0 0
        %3634 = vmatpush2.bf16.msra.mxu0 %v3199
        %3635 = vmatprep.subr.bf16.mxu0 0
        %3636 = vmatpush2.bf16.msra.mxu0 %v3198
        %3637 = vmatprep.subr.bf16.mxu0 0
        %3638 = vmatpush2.bf16.msra.mxu0 %v3197
        %3639 = vmatprep.subr.bf16.mxu0 0
        %3640 = vmatpush2.bf16.msra.mxu0 %v3196
        %3641 = vmatprep.subr.bf16.mxu0 0
        %3642 = vmatpush2.bf16.msra.mxu0 %v3195
        %3643 = vmatprep.mubr.bf16.mxu0 %v2299
        %3644 = vmatmul.mubr.bf16.gmra.mxu0 %v2298
        %v3645 = vpop.f32.mrf.mxu0
        %v3646 = vadd.f32 %v3606, %v3645
        %v3647 = vpop.f32.mrf.mxu0
        %v3648 = vpop.f32.mrf.mxu0
        %v3649 = vpop.f32.mrf.mxu0
        %3650 = vdwg.mxu0
        %v3651 = vadd.f32 %v1086, %v3646
        %v3652 = vmul.f32 %v3651, %v407
        %3653 = vadd.xlane.f32.xlu0 %v3652
        %v3654 = vpop.xlane.xlu0 %3653
        %v3655 = vmul.f32 %v3654, 0.03125
        %v3656 = vmul.f32 %v3652, %v3652
        %3657 = vadd.xlane.f32.xlu0 %v3656
        %v3658 = vpop.xlane.xlu0 %3657
        %v3659 = vmul.f32 %v3658, 0.03125
        %v3660 = vmul.f32 %v3655, %v3655
        %v3661 = vsub.f32 %v3659, %v3660
        %v3662 = vmax.f32 %v3661, 0.0
        %v3663 = vsub.f32 %v3652, %v3655
        %v3664 = vadd.f32 %v3662, 1e-05
        %v3665 = vrsqrt.pop %v3664
        %v3666 = vmul.f32 %v3663, %v3665
        %v3667 = vmul.f32 %v3666, %v407
        %3668 = vst [vmem:[%s393] sm:$0xff] %v3667
        %s3669 = sand.u32 %s254, 1
        %s3670 = scalar_lea.sflag [#allocation4], %s3669
        %s3671 = sand.u32 %s254, 1
        %s3672 = smul.addr %s3671, 8
        %s3673 = scalar_lea.vmem [#allocation7], %s3672
        // Predicated region
        $region69: #{tpu_custom_call.1} parent=59 // pred_check
          %p3674 = pneg %p264
        $region70: #{tpu_custom_call.1} parent=59 // pred_check_branch
          %3676 = sbr.rel (%p3674) target = $region72
        $region71: #{tpu_custom_call.1} parent=59 // pred_region
          %s3678 = ssub.s32 128, 128
          %3679 = vsyncadd %s3670, %s3678
          %s3680 = smul.addr %s26, 128
          %s3681 = scalar_lea.hbm %s10, %s3680
          %s3683 = sshll.u32 %s3673, 4
          %s3684 = int_to_ptr.vmem [resolvable:$true] %s3683
          %3686 = dma.vmem_to_hbm [thread:$0]  %s3684, 128, %s3681, %s3670
        $region72: #{tpu_custom_call.1} parent=59 // pred_fallthru
          _
      $region60: #{tpu_custom_call.1} parent=5 // pred_fallthru
        _
      %p3687 = scmp.le.s32.totalorder 2, %s21
      // Predicated region
      $region73: #{tpu_custom_call.1} parent=5 // pred_check
        %p3688 = pneg %p3687
      $region74: #{tpu_custom_call.1} parent=5 // pred_check_branch
        %3690 = sbr.rel (%p3688) target = $region76
      $region75: #{tpu_custom_call.1} parent=5 // pred_region
        %s3691 = ssub.s32 %s21, 2
        // Predicated region
        $region77: #{tpu_custom_call.1} parent=75 // pred_check
          %p3692 = pneg %p270
        $region78: #{tpu_custom_call.1} parent=75 // pred_check_branch
          %3694 = sbr.rel (%p3692) target = $region80
        $region79: #{tpu_custom_call.1} parent=75 // pred_region
          %s3695 = sand.u32 %s255, 1
          %s3696 = scalar_lea.sflag [#allocation4], %s3695
          %s3697 = sand.u32 %s255, 1
          %s3698 = smul.addr %s3697, 8
          %s3699 = scalar_lea.vmem [#allocation7], %s3698
          %3700 = dma.done %s3696, 128
        $region80: #{tpu_custom_call.1} parent=75 // pred_fallthru
          _
      $region76: #{tpu_custom_call.1} parent=5 // pred_fallthru
        _
    $region6: #{tpu_custom_call.1} parent=1 // loop_footer
      %s25 = sadd.s32 1, %s21
    $region7: #{tpu_custom_call.1} parent=1 // loop_footer_branch
      %20 = sbr.rel target = $region3
    $region8: #{tpu_custom_call.1} parent=1 // loop_exit
      _
    %3701 = vsyncpa [#allocation3], 1
    %s3702 = scalar_lea.sflag [#allocation3], 1
    %3703 = vsyncpa %s3702, 1
    %3704 = vsyncpa [#allocation6], 1
    %3705 = vsyncpa [#allocation4], 1
    %s3706 = scalar_lea.sflag [#allocation4], 1
    %3707 = vsyncpa %s3706, 1

</llo_original>
